<compile_context>
chip_gen: v7x
topology: tpu7x:2x2x1
jax: 0.10.0
libtpu: 0.0.40
codegen_flags: <defaults>
</compile_context>

<pallas_src>
import functools

import jax
import jax.numpy as jnp
from jax.experimental import pallas as pl
from jax.experimental.pallas import tpu as pltpu


def _round_up(x, m):
    return (x + m - 1) // m * m


def _slab_offsets(f_pad, l_pad):
    """Static row ranges of each weight block inside the packed bf16 slab."""
    sizes = {
        "ew0": f_pad,        # encoder layer-0 input weights   (f_pad, 4Lp)
        "ewh0": l_pad,       # encoder layer-0 recurrent       (Lp, 4Lp)
        "ew1": 2 * l_pad,    # encoder layer-1 fused [ih; hh]  (2Lp, 4Lp)
        "dw0": l_pad,        # decoder layer-0 input weights
        "dwh0": l_pad,       # decoder layer-0 recurrent
        "dw1": 2 * l_pad,    # decoder layer-1 fused [ih; hh]
        "fcw": l_pad,        # fc weights, first F lanes used
    }
    offs, r = {}, 0
    for name, s in sizes.items():
        offs[name] = (r, r + s)
        r += s
    return offs, r


# ------------------------------ fused kernel ------------------------------- #

def _ae_fused_kernel(x_ref, w_ref, b_ref, enc_ref, dec_ref,
                     *, T, B, B_pad, L_pad, offs):
    f32 = jnp.float32
    bf16 = jnp.bfloat16
    Lp = L_pad
    G = 4 * Lp                                     # lane-dense gate width

    def W(name):                                   # static slice of bf16 slab
        r0, r1 = offs[name]
        return w_ref[r0:r1, :]

    ew0, ewh0, ew1 = W("ew0"), W("ewh0"), W("ew1")
    dw0, dwh0, dw1 = W("dw0"), W("dwh0"), W("dw1")
    fcw = W("fcw")

    bias = b_ref[...]                              # (8, G) f32
    eb0 = bias[0:1, :]
    eb1 = jnp.broadcast_to(bias[1:2, :], (B_pad, G))   # broadcasts hoisted once
    db0 = bias[2:3, :]
    db1 = jnp.broadcast_to(bias[3:4, :], (T, G))
    fcb = jnp.broadcast_to(bias[4:5, :], (B * T, G))

    def dot(a, b):
        return jnp.dot(a.astype(bf16), b, preferred_element_type=f32)

    def gates_to_hc(g, c):
        # PyTorch gate order i, f, g, o; aligned Lp-lane slices of the gate tile.
        i = jax.nn.sigmoid(g[:, 0 * Lp:1 * Lp])
        f = jax.nn.sigmoid(g[:, 1 * Lp:2 * Lp])
        gg = jnp.tanh(g[:, 2 * Lp:3 * Lp])
        o = jax.nn.sigmoid(g[:, 3 * Lp:4 * Lp])
        c_new = f * c + i * gg
        h_new = o * jnp.tanh(c_new)
        return h_new, c_new

    # --------------------- encoder: 2-layer LSTM over time -------------------
    # Layer-0 input projection + bias hoisted out of the recurrence.
    xg = dot(x_ref[...], ew0) + eb0                 # (T*B_pad, G)

    z = jnp.zeros((B_pad, Lp), f32)
    h0, c0, h1, c1 = z, z, z, z
    for t in range(T):                              # tiny, static unroll
        g0 = xg[t * B_pad:(t + 1) * B_pad, :] + dot(h0, ewh0)
        h0, c0 = gates_to_hc(g0, c0)
        # Fused layer-1: one (Bp, 2Lp) @ (2Lp, G) push for ih + hh.
        g1 = dot(jnp.concatenate([h0, h1], axis=-1), ew1) + eb1
        h1, c1 = gates_to_hc(g1, c1)

    enc_ref[...] = h1                               # final hidden of layer 2

    # ------------------------------- decoder ---------------------------------
    # Recurrence over the *batch* axis (seq len = B), LSTM batch = timesteps.
    # Layer-0 projection + bias for all steps in one matmul; per-step input
    # rows broadcast once, off the serial chain.
    dxg = dot(h1, dw0) + db0                        # (B_pad, G)
    dx_steps = [jnp.broadcast_to(dxg[b:b + 1, :], (T, G)) for b in range(B)]

    zT = jnp.zeros((T, Lp), f32)
    dh0, dc0, dh1, dc1 = zT, zT, zT, zT
    h_seq = []
    for b in range(B):
        g0 = dx_steps[b] + dot(dh0, dwh0)
        dh0, dc0 = gates_to_hc(g0, dc0)
        g1 = dot(jnp.concatenate([dh0, dh1], axis=-1), dw1) + db1
        dh1, dc1 = gates_to_hc(g1, dc1)
        h_seq.append(dh1)

    # Deferred fc: one matmul + one lane-dense (128-wide) store.
    hs = jnp.concatenate(h_seq, axis=0)             # (B*T, Lp)
    dec_ref[...] = dot(hs, fcw) + fcb               # (B*T, G), cols >= F are 0


# --------------------------------- wrapper ---------------------------------- #

def _full_spec(shape):
    return pl.BlockSpec(shape, lambda i, _nd=len(shape): (0,) * _nd)


def autoencoder_forward(X, packed, *, latent):
    T, B, F = X.shape
    b_pad = _round_up(B, 8)
    f_pad = _round_up(F, 16)
    l_pad = _round_up(latent, 32)
    G = 4 * l_pad

    # Pad batch to sublane granularity, features to the slab block width, and
    # flatten (time, batch) -> rows.
    Xp = jnp.pad(X, ((0, 0), (0, b_pad - B), (0, f_pad - F))).reshape(T * b_pad, f_pad)

    offs, w_rows = _slab_offsets(f_pad, l_pad)
    w_slab, b_slab = packed["w_slab"], packed["b_slab"]
    assert w_slab.shape == (w_rows, G) and w_slab.dtype == jnp.bfloat16
    assert b_slab.shape == (8, G)

    kernel = functools.partial(_ae_fused_kernel,
                               T=T, B=B, B_pad=b_pad, L_pad=l_pad, offs=offs)

    enc_pad, dec_pad = pl.pallas_call(
        kernel,
        out_shape=(jax.ShapeDtypeStruct((b_pad, l_pad), jnp.float32),
                   jax.ShapeDtypeStruct((B * T, G), jnp.float32)),
        grid=(1,),
        in_specs=[_full_spec(Xp.shape),
                  _full_spec(w_slab.shape),
                  _full_spec(b_slab.shape)],
        out_specs=(pl.BlockSpec((b_pad, l_pad), lambda i: (0, 0)),
                   pl.BlockSpec((B * T, G), lambda i: (0, 0))),
        compiler_params=pltpu.CompilerParams(
            dimension_semantics=("arbitrary",)),
    )(Xp, w_slab, b_slab)

    enc_out = enc_pad[:B, :latent]
    dec_out = dec_pad[:, :F].reshape(B, T, F)
    return enc_out, dec_out


# --------------------------- parameter handling ----------------------------- #

def init_params(key, features, latent):
    """PyTorch-convention parameters (used directly by the pure-JAX reference)."""
    L = latent
    bound = 1.0 / float(L) ** 0.5
    ks = iter(jax.random.split(key, 18))

    def u(shape):
        return jax.random.uniform(next(ks), shape, jnp.float32, -bound, bound)

    def lstm(input_size):
        return dict(wih0=u((4 * L, input_size)), whh0=u((4 * L, L)),
                    bih0=u((4 * L,)), bhh0=u((4 * L,)),
                    wih1=u((4 * L, L)), whh1=u((4 * L, L)),
                    bih1=u((4 * L,)), bhh1=u((4 * L,)))

    enc = lstm(features)
    dec = lstm(latent)           # decoder consumes latent vectors (== features)
    fc_w = u((features, L))      # nn.Linear(latent_dim -> features)
    fc_b = u((features,))
    return dict(enc=enc, dec=dec, fc_w=fc_w, fc_b=fc_b)


def pack_params(p, features, latent):
    """One-time host-side pack: single bf16 weight slab + tiny f32 bias slab.

    Gate axis -> 4*L_pad (lane-dense multiple of 128); padded gate lanes keep
    zero weights/biases (the zero-pad invariant keeps padded h/c lanes at 0).
    """
    L = latent
    Lp = _round_up(latent, 32)
    Fp = _round_up(features, 16)

    def gate_pad_T(w, in_pad):
        # w: (4L, in_dim) PyTorch-layout -> (in_pad, 4Lp), per-gate lane pad.
        out = jnp.zeros((4 * Lp, in_pad), jnp.float32)
        for k in range(4):
            out = out.at[k * Lp:k * Lp + L, :w.shape[1]].set(w[k * L:(k + 1) * L])
        return out.T

    def gate_pad_vec(v):
        out = jnp.zeros((4 * Lp,), jnp.float32)
        for k in range(4):
            out = out.at[k * Lp:k * Lp + L].set(v[k * L:(k + 1) * L])
        return out

    e, d = p["enc"], p["dec"]
    blocks = [
        gate_pad_T(e["wih0"], Fp),                                          # ew0
        gate_pad_T(e["whh0"], Lp),                                          # ewh0
        jnp.vstack([gate_pad_T(e["wih1"], Lp), gate_pad_T(e["whh1"], Lp)]),  # ew1
        gate_pad_T(d["wih0"], Lp),                                          # dw0
        gate_pad_T(d["whh0"], Lp),                                          # dwh0
        jnp.vstack([gate_pad_T(d["wih1"], Lp), gate_pad_T(d["whh1"], Lp)]),  # dw1
        jnp.zeros((Lp, 4 * Lp), jnp.float32).at[:L, :features].set(p["fc_w"].T),
    ]
    w_slab = jnp.vstack(blocks).astype(jnp.bfloat16)   # pre-cast: no in-kernel casts

    b_slab = jnp.zeros((8, 4 * Lp), jnp.float32)
    b_slab = b_slab.at[0].set(gate_pad_vec(e["bih0"] + e["bhh0"]))   # fused biases
    b_slab = b_slab.at[1].set(gate_pad_vec(e["bih1"] + e["bhh1"]))
    b_slab = b_slab.at[2].set(gate_pad_vec(d["bih0"] + d["bhh0"]))
    b_slab = b_slab.at[3].set(gate_pad_vec(d["bih1"] + d["bhh1"]))
    b_slab = b_slab.at[4, :features].set(p["fc_b"])
    return dict(w_slab=w_slab, b_slab=b_slab)


# ------------------------------ pure-JAX ref --------------------------------- #

def lstm2_ref(x, P):
    """2-layer LSTM scanning axis 0 of x, float32, PyTorch-shaped params."""
    _, Bx, _ = x.shape
    L = P["whh0"].shape[1]

    def cell(xt, h, c, wih, whh, bih, bhh):
        g = xt @ wih.T + h @ whh.T + bih + bhh
        i, f, gg, o = jnp.split(g, 4, axis=-1)
        c_new = jax.nn.sigmoid(f) * c + jax.nn.sigmoid(i) * jnp.tanh(gg)
        h_new = jax.nn.sigmoid(o) * jnp.tanh(c_new)
        return h_new, c_new

    def step(carry, xt):
        h0, c0, h1, c1 = carry
        h0, c0 = cell(xt, h0, c0, P["wih0"], P["whh0"], P["bih0"], P["bhh0"])
        h1, c1 = cell(h0, h1, c1, P["wih1"], P["whh1"], P["bih1"], P["bhh1"])
        return (h0, c0, h1, c1), h1

    z = jnp.zeros((Bx, L), jnp.float32)
    (_, _, h1, _), out = jax.lax.scan(step, (z, z, z, z), x)
    return out, h1


# ----------------------------------- main ------------------------------------ #

if __name__ == "__main__":
    FEATURES = 16
    LATENT = 16      # == FEATURES (required for the reference module to run)
    TIMESTEPS = 8
    BATCH = 4

    key = jax.random.PRNGKey(0)
    kx, kp = jax.random.split(key)
    X = jax.random.normal(kx, (TIMESTEPS, BATCH, FEATURES), jnp.float32)

    raw = init_params(kp, FEATURES, LATENT)
    packed = pack_params(raw, FEATURES, LATENT)

    fwd = jax.jit(functools.partial(autoencoder_forward, latent=LATENT))
    enc_out, dec_out = fwd(X, packed)
    jax.block_until_ready((enc_out, dec_out))

    # Pure-JAX float32 reference (mirrors the PyTorch module exactly).
    _, enc_ref = lstm2_ref(X, raw["enc"])
    dec_in = jnp.broadcast_to(enc_ref[:, None, :], (BATCH, TIMESTEPS, LATENT))
    dec_seq, _ = lstm2_ref(dec_in, raw["dec"])
    ref_out = dec_seq @ raw["fc_w"].T + raw["fc_b"]            # (B, T, F)

    assert enc_out.shape == (BATCH, LATENT)
    assert dec_out.shape == (BATCH, TIMESTEPS, FEATURES)
    # Tolerance covers bf16 MXU operands (f32 accumulation / f32 gate math).
    assert jnp.allclose(enc_out, enc_ref, atol=3e-2, rtol=3e-2)
    assert jnp.allclose(dec_out, ref_out, atol=3e-2, rtol=3e-2)
    print("KERNEL_OK")
</pallas_src>

<mosaic_0001>
module attributes {stable_mosaic.version = 11 : i64} {
  func.func @_ae_fused_kernel(%arg0: i32, %arg1: memref<64x16xf32, #tpu.memory_space<vmem>>, %arg2: memref<272x128xbf16, #tpu.memory_space<vmem>>, %arg3: memref<8x128xf32, #tpu.memory_space<vmem>>, %arg4: memref<8x32xf32, #tpu.memory_space<vmem>>, %arg5: memref<32x128xf32, #tpu.memory_space<vmem>>) attributes {dimension_semantics = [#tpu.dimension_semantics<arbitrary>], iteration_bounds = array<i64: 1>, scalar_prefetch = 0 : i64, scratch_operands = 0 : i64, tpu.core_type = #tpu.core_type<tc>, window_params = [{pipeline_mode = #tpu.pipeline_mode<synchronous>, transform_indices = @transform_0, window_bounds = array<i64: 64, 16>}, {pipeline_mode = #tpu.pipeline_mode<synchronous>, transform_indices = @transform_1, window_bounds = array<i64: 272, 128>}, {pipeline_mode = #tpu.pipeline_mode<synchronous>, transform_indices = @transform_2, window_bounds = array<i64: 8, 128>}, {pipeline_mode = #tpu.pipeline_mode<synchronous>, transform_indices = @transform_3, window_bounds = array<i64: 8, 32>}, {pipeline_mode = #tpu.pipeline_mode<synchronous>, transform_indices = @transform_4, window_bounds = array<i64: 32, 128>}]} {
    %c0 = arith.constant 0 : index
    %c0_0 = arith.constant 0 : index
    %0 = vector.load %arg2[%c0, %c0_0] : memref<272x128xbf16, #tpu.memory_space<vmem>>, vector<16x128xbf16>
    %c16 = arith.constant 16 : index
    %c0_1 = arith.constant 0 : index
    %1 = vector.load %arg2[%c16, %c0_1] : memref<272x128xbf16, #tpu.memory_space<vmem>>, vector<32x128xbf16>
    %c48 = arith.constant 48 : index
    %c0_2 = arith.constant 0 : index
    %2 = vector.load %arg2[%c48, %c0_2] : memref<272x128xbf16, #tpu.memory_space<vmem>>, vector<64x128xbf16>
    %c112 = arith.constant 112 : index
    %c0_3 = arith.constant 0 : index
    %3 = vector.load %arg2[%c112, %c0_3] : memref<272x128xbf16, #tpu.memory_space<vmem>>, vector<32x128xbf16>
    %c144 = arith.constant 144 : index
    %c0_4 = arith.constant 0 : index
    %4 = vector.load %arg2[%c144, %c0_4] : memref<272x128xbf16, #tpu.memory_space<vmem>>, vector<32x128xbf16>
    %c176 = arith.constant 176 : index
    %c0_5 = arith.constant 0 : index
    %5 = vector.load %arg2[%c176, %c0_5] : memref<272x128xbf16, #tpu.memory_space<vmem>>, vector<64x128xbf16>
    %c240 = arith.constant 240 : index
    %c0_6 = arith.constant 0 : index
    %6 = vector.load %arg2[%c240, %c0_6] : memref<272x128xbf16, #tpu.memory_space<vmem>>, vector<32x128xbf16>
    %c0_7 = arith.constant 0 : index
    %c0_8 = arith.constant 0 : index
    %7 = vector.load %arg3[%c0_7, %c0_8] : memref<8x128xf32, #tpu.memory_space<vmem>>, vector<8x128xf32>
    %8 = vector.extract_strided_slice %7 {offsets = [0, 0], sizes = [1, 128], strides = [1, 1]} : vector<8x128xf32> to vector<1x128xf32>
    %9 = vector.extract_strided_slice %7 {offsets = [1, 0], sizes = [1, 128], strides = [1, 1]} : vector<8x128xf32> to vector<1x128xf32>
    %10 = vector.shape_cast %9 : vector<1x128xf32> to vector<1x128xf32>
    %11 = vector.broadcast %10 : vector<1x128xf32> to vector<8x128xf32>
    %12 = vector.extract_strided_slice %7 {offsets = [2, 0], sizes = [1, 128], strides = [1, 1]} : vector<8x128xf32> to vector<1x128xf32>
    %13 = vector.extract_strided_slice %7 {offsets = [3, 0], sizes = [1, 128], strides = [1, 1]} : vector<8x128xf32> to vector<1x128xf32>
    %14 = vector.shape_cast %13 : vector<1x128xf32> to vector<1x128xf32>
    %15 = vector.broadcast %14 : vector<1x128xf32> to vector<8x128xf32>
    %16 = vector.extract_strided_slice %7 {offsets = [4, 0], sizes = [1, 128], strides = [1, 1]} : vector<8x128xf32> to vector<1x128xf32>
    %17 = vector.shape_cast %16 : vector<1x128xf32> to vector<1x128xf32>
    %18 = vector.broadcast %17 : vector<1x128xf32> to vector<32x128xf32>
    %c0_9 = arith.constant 0 : index
    %c0_10 = arith.constant 0 : index
    %19 = vector.load %arg1[%c0_9, %c0_10] : memref<64x16xf32, #tpu.memory_space<vmem>>, vector<64x16xf32>
    %20 = arith.truncf %19 : vector<64x16xf32> to vector<64x16xbf16>
    %cst = arith.constant dense<0.000000e+00> : vector<64x128xf32>
    %21 = tpu.matmul %20, %0, %cst {dimension_numbers = #tpu.dot_dimension_numbers<[1], [0], [0], [1], [0, 0, 1, 1], [], []>} : vector<64x16xbf16>, vector<16x128xbf16>, vector<64x128xf32> -> vector<64x128xf32>
    %22 = vector.broadcast %8 : vector<1x128xf32> to vector<64x128xf32>
    %23 = arith.addf %21, %22 : vector<64x128xf32>
    %cst_11 = arith.constant 0.000000e+00 : f32
    %24 = vector.broadcast %cst_11 : f32 to vector<8x32xf32>
    %25 = vector.extract_strided_slice %23 {offsets = [0, 0], sizes = [8, 128], strides = [1, 1]} : vector<64x128xf32> to vector<8x128xf32>
    %26 = arith.truncf %24 : vector<8x32xf32> to vector<8x32xbf16>
    %cst_12 = arith.constant dense<0.000000e+00> : vector<8x128xf32>
    %27 = tpu.matmul %26, %1, %cst_12 {dimension_numbers = #tpu.dot_dimension_numbers<[1], [0], [0], [1], [0, 0, 1, 1], [], []>} : vector<8x32xbf16>, vector<32x128xbf16>, vector<8x128xf32> -> vector<8x128xf32>
    %28 = arith.addf %25, %27 : vector<8x128xf32>
    %29 = vector.extract_strided_slice %28 {offsets = [0, 0], sizes = [8, 32], strides = [1, 1]} : vector<8x128xf32> to vector<8x32xf32>
    %30 = arith.negf %29 : vector<8x32xf32>
    %31 = math.exp %30 : vector<8x32xf32>
    %cst_13 = arith.constant 1.000000e+00 : f32
    %32 = vector.broadcast %cst_13 : f32 to vector<8x32xf32>
    %33 = arith.addf %32, %31 : vector<8x32xf32>
    %34 = arith.divf %32, %33 : vector<8x32xf32>
    %35 = vector.extract_strided_slice %28 {offsets = [0, 32], sizes = [8, 32], strides = [1, 1]} : vector<8x128xf32> to vector<8x32xf32>
    %36 = arith.negf %35 : vector<8x32xf32>
    %37 = math.exp %36 : vector<8x32xf32>
    %cst_14 = arith.constant 1.000000e+00 : f32
    %38 = vector.broadcast %cst_14 : f32 to vector<8x32xf32>
    %39 = arith.addf %38, %37 : vector<8x32xf32>
    %40 = arith.divf %38, %39 : vector<8x32xf32>
    %41 = vector.extract_strided_slice %28 {offsets = [0, 64], sizes = [8, 32], strides = [1, 1]} : vector<8x128xf32> to vector<8x32xf32>
    %42 = math.tanh %41 : vector<8x32xf32>
    %43 = vector.extract_strided_slice %28 {offsets = [0, 96], sizes = [8, 32], strides = [1, 1]} : vector<8x128xf32> to vector<8x32xf32>
    %44 = arith.negf %43 : vector<8x32xf32>
    %45 = math.exp %44 : vector<8x32xf32>
    %cst_15 = arith.constant 1.000000e+00 : f32
    %46 = vector.broadcast %cst_15 : f32 to vector<8x32xf32>
    %47 = arith.addf %46, %45 : vector<8x32xf32>
    %48 = arith.divf %46, %47 : vector<8x32xf32>
    %49 = arith.mulf %40, %24 : vector<8x32xf32>
    %50 = arith.mulf %34, %42 : vector<8x32xf32>
    %51 = arith.addf %49, %50 : vector<8x32xf32>
    %52 = math.tanh %51 : vector<8x32xf32>
    %53 = arith.mulf %48, %52 : vector<8x32xf32>
    %54 = tpu.concatenate %53, %24 in 1 : vector<8x32xf32>, vector<8x32xf32> -> vector<8x64xf32>
    %55 = arith.truncf %54 : vector<8x64xf32> to vector<8x64xbf16>
    %cst_16 = arith.constant dense<0.000000e+00> : vector<8x128xf32>
    %56 = tpu.matmul %55, %2, %cst_16 {dimension_numbers = #tpu.dot_dimension_numbers<[1], [0], [0], [1], [0, 0, 1, 1], [], []>} : vector<8x64xbf16>, vector<64x128xbf16>, vector<8x128xf32> -> vector<8x128xf32>
    %57 = arith.addf %56, %11 : vector<8x128xf32>
    %58 = vector.extract_strided_slice %57 {offsets = [0, 0], sizes = [8, 32], strides = [1, 1]} : vector<8x128xf32> to vector<8x32xf32>
    %59 = arith.negf %58 : vector<8x32xf32>
    %60 = math.exp %59 : vector<8x32xf32>
    %cst_17 = arith.constant 1.000000e+00 : f32
    %61 = vector.broadcast %cst_17 : f32 to vector<8x32xf32>
    %62 = arith.addf %61, %60 : vector<8x32xf32>
    %63 = arith.divf %61, %62 : vector<8x32xf32>
    %64 = vector.extract_strided_slice %57 {offsets = [0, 32], sizes = [8, 32], strides = [1, 1]} : vector<8x128xf32> to vector<8x32xf32>
    %65 = arith.negf %64 : vector<8x32xf32>
    %66 = math.exp %65 : vector<8x32xf32>
    %cst_18 = arith.constant 1.000000e+00 : f32
    %67 = vector.broadcast %cst_18 : f32 to vector<8x32xf32>
    %68 = arith.addf %67, %66 : vector<8x32xf32>
    %69 = arith.divf %67, %68 : vector<8x32xf32>
    %70 = vector.extract_strided_slice %57 {offsets = [0, 64], sizes = [8, 32], strides = [1, 1]} : vector<8x128xf32> to vector<8x32xf32>
    %71 = math.tanh %70 : vector<8x32xf32>
    %72 = vector.extract_strided_slice %57 {offsets = [0, 96], sizes = [8, 32], strides = [1, 1]} : vector<8x128xf32> to vector<8x32xf32>
    %73 = arith.negf %72 : vector<8x32xf32>
    %74 = math.exp %73 : vector<8x32xf32>
    %cst_19 = arith.constant 1.000000e+00 : f32
    %75 = vector.broadcast %cst_19 : f32 to vector<8x32xf32>
    %76 = arith.addf %75, %74 : vector<8x32xf32>
    %77 = arith.divf %75, %76 : vector<8x32xf32>
    %78 = arith.mulf %69, %24 : vector<8x32xf32>
    %79 = arith.mulf %63, %71 : vector<8x32xf32>
    %80 = arith.addf %78, %79 : vector<8x32xf32>
    %81 = math.tanh %80 : vector<8x32xf32>
    %82 = arith.mulf %77, %81 : vector<8x32xf32>
    %83 = vector.extract_strided_slice %23 {offsets = [8, 0], sizes = [8, 128], strides = [1, 1]} : vector<64x128xf32> to vector<8x128xf32>
    %84 = arith.truncf %53 : vector<8x32xf32> to vector<8x32xbf16>
    %cst_20 = arith.constant dense<0.000000e+00> : vector<8x128xf32>
    %85 = tpu.matmul %84, %1, %cst_20 {dimension_numbers = #tpu.dot_dimension_numbers<[1], [0], [0], [1], [0, 0, 1, 1], [], []>} : vector<8x32xbf16>, vector<32x128xbf16>, vector<8x128xf32> -> vector<8x128xf32>
    %86 = arith.addf %83, %85 : vector<8x128xf32>
    %87 = vector.extract_strided_slice %86 {offsets = [0, 0], sizes = [8, 32], strides = [1, 1]} : vector<8x128xf32> to vector<8x32xf32>
    %88 = arith.negf %87 : vector<8x32xf32>
    %89 = math.exp %88 : vector<8x32xf32>
    %cst_21 = arith.constant 1.000000e+00 : f32
    %90 = vector.broadcast %cst_21 : f32 to vector<8x32xf32>
    %91 = arith.addf %90, %89 : vector<8x32xf32>
    %92 = arith.divf %90, %91 : vector<8x32xf32>
    %93 = vector.extract_strided_slice %86 {offsets = [0, 32], sizes = [8, 32], strides = [1, 1]} : vector<8x128xf32> to vector<8x32xf32>
    %94 = arith.negf %93 : vector<8x32xf32>
    %95 = math.exp %94 : vector<8x32xf32>
    %cst_22 = arith.constant 1.000000e+00 : f32
    %96 = vector.broadcast %cst_22 : f32 to vector<8x32xf32>
    %97 = arith.addf %96, %95 : vector<8x32xf32>
    %98 = arith.divf %96, %97 : vector<8x32xf32>
    %99 = vector.extract_strided_slice %86 {offsets = [0, 64], sizes = [8, 32], strides = [1, 1]} : vector<8x128xf32> to vector<8x32xf32>
    %100 = math.tanh %99 : vector<8x32xf32>
    %101 = vector.extract_strided_slice %86 {offsets = [0, 96], sizes = [8, 32], strides = [1, 1]} : vector<8x128xf32> to vector<8x32xf32>
    %102 = arith.negf %101 : vector<8x32xf32>
    %103 = math.exp %102 : vector<8x32xf32>
    %cst_23 = arith.constant 1.000000e+00 : f32
    %104 = vector.broadcast %cst_23 : f32 to vector<8x32xf32>
    %105 = arith.addf %104, %103 : vector<8x32xf32>
    %106 = arith.divf %104, %105 : vector<8x32xf32>
    %107 = arith.mulf %98, %51 : vector<8x32xf32>
    %108 = arith.mulf %92, %100 : vector<8x32xf32>
    %109 = arith.addf %107, %108 : vector<8x32xf32>
    %110 = math.tanh %109 : vector<8x32xf32>
    %111 = arith.mulf %106, %110 : vector<8x32xf32>
    %112 = tpu.concatenate %111, %82 in 1 : vector<8x32xf32>, vector<8x32xf32> -> vector<8x64xf32>
    %113 = arith.truncf %112 : vector<8x64xf32> to vector<8x64xbf16>
    %cst_24 = arith.constant dense<0.000000e+00> : vector<8x128xf32>
    %114 = tpu.matmul %113, %2, %cst_24 {dimension_numbers = #tpu.dot_dimension_numbers<[1], [0], [0], [1], [0, 0, 1, 1], [], []>} : vector<8x64xbf16>, vector<64x128xbf16>, vector<8x128xf32> -> vector<8x128xf32>
    %115 = arith.addf %114, %11 : vector<8x128xf32>
    %116 = vector.extract_strided_slice %115 {offsets = [0, 0], sizes = [8, 32], strides = [1, 1]} : vector<8x128xf32> to vector<8x32xf32>
    %117 = arith.negf %116 : vector<8x32xf32>
    %118 = math.exp %117 : vector<8x32xf32>
    %cst_25 = arith.constant 1.000000e+00 : f32
    %119 = vector.broadcast %cst_25 : f32 to vector<8x32xf32>
    %120 = arith.addf %119, %118 : vector<8x32xf32>
    %121 = arith.divf %119, %120 : vector<8x32xf32>
    %122 = vector.extract_strided_slice %115 {offsets = [0, 32], sizes = [8, 32], strides = [1, 1]} : vector<8x128xf32> to vector<8x32xf32>
    %123 = arith.negf %122 : vector<8x32xf32>
    %124 = math.exp %123 : vector<8x32xf32>
    %cst_26 = arith.constant 1.000000e+00 : f32
    %125 = vector.broadcast %cst_26 : f32 to vector<8x32xf32>
    %126 = arith.addf %125, %124 : vector<8x32xf32>
    %127 = arith.divf %125, %126 : vector<8x32xf32>
    %128 = vector.extract_strided_slice %115 {offsets = [0, 64], sizes = [8, 32], strides = [1, 1]} : vector<8x128xf32> to vector<8x32xf32>
    %129 = math.tanh %128 : vector<8x32xf32>
    %130 = vector.extract_strided_slice %115 {offsets = [0, 96], sizes = [8, 32], strides = [1, 1]} : vector<8x128xf32> to vector<8x32xf32>
    %131 = arith.negf %130 : vector<8x32xf32>
    %132 = math.exp %131 : vector<8x32xf32>
    %cst_27 = arith.constant 1.000000e+00 : f32
    %133 = vector.broadcast %cst_27 : f32 to vector<8x32xf32>
    %134 = arith.addf %133, %132 : vector<8x32xf32>
    %135 = arith.divf %133, %134 : vector<8x32xf32>
    %136 = arith.mulf %127, %80 : vector<8x32xf32>
    %137 = arith.mulf %121, %129 : vector<8x32xf32>
    %138 = arith.addf %136, %137 : vector<8x32xf32>
    %139 = math.tanh %138 : vector<8x32xf32>
    %140 = arith.mulf %135, %139 : vector<8x32xf32>
    %141 = vector.extract_strided_slice %23 {offsets = [16, 0], sizes = [8, 128], strides = [1, 1]} : vector<64x128xf32> to vector<8x128xf32>
    %142 = arith.truncf %111 : vector<8x32xf32> to vector<8x32xbf16>
    %cst_28 = arith.constant dense<0.000000e+00> : vector<8x128xf32>
    %143 = tpu.matmul %142, %1, %cst_28 {dimension_numbers = #tpu.dot_dimension_numbers<[1], [0], [0], [1], [0, 0, 1, 1], [], []>} : vector<8x32xbf16>, vector<32x128xbf16>, vector<8x128xf32> -> vector<8x128xf32>
    %144 = arith.addf %141, %143 : vector<8x128xf32>
    %145 = vector.extract_strided_slice %144 {offsets = [0, 0], sizes = [8, 32], strides = [1, 1]} : vector<8x128xf32> to vector<8x32xf32>
    %146 = arith.negf %145 : vector<8x32xf32>
    %147 = math.exp %146 : vector<8x32xf32>
    %cst_29 = arith.constant 1.000000e+00 : f32
    %148 = vector.broadcast %cst_29 : f32 to vector<8x32xf32>
    %149 = arith.addf %148, %147 : vector<8x32xf32>
    %150 = arith.divf %148, %149 : vector<8x32xf32>
    %151 = vector.extract_strided_slice %144 {offsets = [0, 32], sizes = [8, 32], strides = [1, 1]} : vector<8x128xf32> to vector<8x32xf32>
    %152 = arith.negf %151 : vector<8x32xf32>
    %153 = math.exp %152 : vector<8x32xf32>
    %cst_30 = arith.constant 1.000000e+00 : f32
    %154 = vector.broadcast %cst_30 : f32 to vector<8x32xf32>
    %155 = arith.addf %154, %153 : vector<8x32xf32>
    %156 = arith.divf %154, %155 : vector<8x32xf32>
    %157 = vector.extract_strided_slice %144 {offsets = [0, 64], sizes = [8, 32], strides = [1, 1]} : vector<8x128xf32> to vector<8x32xf32>
    %158 = math.tanh %157 : vector<8x32xf32>
    %159 = vector.extract_strided_slice %144 {offsets = [0, 96], sizes = [8, 32], strides = [1, 1]} : vector<8x128xf32> to vector<8x32xf32>
    %160 = arith.negf %159 : vector<8x32xf32>
    %161 = math.exp %160 : vector<8x32xf32>
    %cst_31 = arith.constant 1.000000e+00 : f32
    %162 = vector.broadcast %cst_31 : f32 to vector<8x32xf32>
    %163 = arith.addf %162, %161 : vector<8x32xf32>
    %164 = arith.divf %162, %163 : vector<8x32xf32>
    %165 = arith.mulf %156, %109 : vector<8x32xf32>
    %166 = arith.mulf %150, %158 : vector<8x32xf32>
    %167 = arith.addf %165, %166 : vector<8x32xf32>
    %168 = math.tanh %167 : vector<8x32xf32>
    %169 = arith.mulf %164, %168 : vector<8x32xf32>
    %170 = tpu.concatenate %169, %140 in 1 : vector<8x32xf32>, vector<8x32xf32> -> vector<8x64xf32>
    %171 = arith.truncf %170 : vector<8x64xf32> to vector<8x64xbf16>
    %cst_32 = arith.constant dense<0.000000e+00> : vector<8x128xf32>
    %172 = tpu.matmul %171, %2, %cst_32 {dimension_numbers = #tpu.dot_dimension_numbers<[1], [0], [0], [1], [0, 0, 1, 1], [], []>} : vector<8x64xbf16>, vector<64x128xbf16>, vector<8x128xf32> -> vector<8x128xf32>
    %173 = arith.addf %172, %11 : vector<8x128xf32>
    %174 = vector.extract_strided_slice %173 {offsets = [0, 0], sizes = [8, 32], strides = [1, 1]} : vector<8x128xf32> to vector<8x32xf32>
    %175 = arith.negf %174 : vector<8x32xf32>
    %176 = math.exp %175 : vector<8x32xf32>
    %cst_33 = arith.constant 1.000000e+00 : f32
    %177 = vector.broadcast %cst_33 : f32 to vector<8x32xf32>
    %178 = arith.addf %177, %176 : vector<8x32xf32>
    %179 = arith.divf %177, %178 : vector<8x32xf32>
    %180 = vector.extract_strided_slice %173 {offsets = [0, 32], sizes = [8, 32], strides = [1, 1]} : vector<8x128xf32> to vector<8x32xf32>
    %181 = arith.negf %180 : vector<8x32xf32>
    %182 = math.exp %181 : vector<8x32xf32>
    %cst_34 = arith.constant 1.000000e+00 : f32
    %183 = vector.broadcast %cst_34 : f32 to vector<8x32xf32>
    %184 = arith.addf %183, %182 : vector<8x32xf32>
    %185 = arith.divf %183, %184 : vector<8x32xf32>
    %186 = vector.extract_strided_slice %173 {offsets = [0, 64], sizes = [8, 32], strides = [1, 1]} : vector<8x128xf32> to vector<8x32xf32>
    %187 = math.tanh %186 : vector<8x32xf32>
    %188 = vector.extract_strided_slice %173 {offsets = [0, 96], sizes = [8, 32], strides = [1, 1]} : vector<8x128xf32> to vector<8x32xf32>
    %189 = arith.negf %188 : vector<8x32xf32>
    %190 = math.exp %189 : vector<8x32xf32>
    %cst_35 = arith.constant 1.000000e+00 : f32
    %191 = vector.broadcast %cst_35 : f32 to vector<8x32xf32>
    %192 = arith.addf %191, %190 : vector<8x32xf32>
    %193 = arith.divf %191, %192 : vector<8x32xf32>
    %194 = arith.mulf %185, %138 : vector<8x32xf32>
    %195 = arith.mulf %179, %187 : vector<8x32xf32>
    %196 = arith.addf %194, %195 : vector<8x32xf32>
    %197 = math.tanh %196 : vector<8x32xf32>
    %198 = arith.mulf %193, %197 : vector<8x32xf32>
    %199 = vector.extract_strided_slice %23 {offsets = [24, 0], sizes = [8, 128], strides = [1, 1]} : vector<64x128xf32> to vector<8x128xf32>
    %200 = arith.truncf %169 : vector<8x32xf32> to vector<8x32xbf16>
    %cst_36 = arith.constant dense<0.000000e+00> : vector<8x128xf32>
    %201 = tpu.matmul %200, %1, %cst_36 {dimension_numbers = #tpu.dot_dimension_numbers<[1], [0], [0], [1], [0, 0, 1, 1], [], []>} : vector<8x32xbf16>, vector<32x128xbf16>, vector<8x128xf32> -> vector<8x128xf32>
    %202 = arith.addf %199, %201 : vector<8x128xf32>
    %203 = vector.extract_strided_slice %202 {offsets = [0, 0], sizes = [8, 32], strides = [1, 1]} : vector<8x128xf32> to vector<8x32xf32>
    %204 = arith.negf %203 : vector<8x32xf32>
    %205 = math.exp %204 : vector<8x32xf32>
    %cst_37 = arith.constant 1.000000e+00 : f32
    %206 = vector.broadcast %cst_37 : f32 to vector<8x32xf32>
    %207 = arith.addf %206, %205 : vector<8x32xf32>
    %208 = arith.divf %206, %207 : vector<8x32xf32>
    %209 = vector.extract_strided_slice %202 {offsets = [0, 32], sizes = [8, 32], strides = [1, 1]} : vector<8x128xf32> to vector<8x32xf32>
    %210 = arith.negf %209 : vector<8x32xf32>
    %211 = math.exp %210 : vector<8x32xf32>
    %cst_38 = arith.constant 1.000000e+00 : f32
    %212 = vector.broadcast %cst_38 : f32 to vector<8x32xf32>
    %213 = arith.addf %212, %211 : vector<8x32xf32>
    %214 = arith.divf %212, %213 : vector<8x32xf32>
    %215 = vector.extract_strided_slice %202 {offsets = [0, 64], sizes = [8, 32], strides = [1, 1]} : vector<8x128xf32> to vector<8x32xf32>
    %216 = math.tanh %215 : vector<8x32xf32>
    %217 = vector.extract_strided_slice %202 {offsets = [0, 96], sizes = [8, 32], strides = [1, 1]} : vector<8x128xf32> to vector<8x32xf32>
    %218 = arith.negf %217 : vector<8x32xf32>
    %219 = math.exp %218 : vector<8x32xf32>
    %cst_39 = arith.constant 1.000000e+00 : f32
    %220 = vector.broadcast %cst_39 : f32 to vector<8x32xf32>
    %221 = arith.addf %220, %219 : vector<8x32xf32>
    %222 = arith.divf %220, %221 : vector<8x32xf32>
    %223 = arith.mulf %214, %167 : vector<8x32xf32>
    %224 = arith.mulf %208, %216 : vector<8x32xf32>
    %225 = arith.addf %223, %224 : vector<8x32xf32>
    %226 = math.tanh %225 : vector<8x32xf32>
    %227 = arith.mulf %222, %226 : vector<8x32xf32>
    %228 = tpu.concatenate %227, %198 in 1 : vector<8x32xf32>, vector<8x32xf32> -> vector<8x64xf32>
    %229 = arith.truncf %228 : vector<8x64xf32> to vector<8x64xbf16>
    %cst_40 = arith.constant dense<0.000000e+00> : vector<8x128xf32>
    %230 = tpu.matmul %229, %2, %cst_40 {dimension_numbers = #tpu.dot_dimension_numbers<[1], [0], [0], [1], [0, 0, 1, 1], [], []>} : vector<8x64xbf16>, vector<64x128xbf16>, vector<8x128xf32> -> vector<8x128xf32>
    %231 = arith.addf %230, %11 : vector<8x128xf32>
    %232 = vector.extract_strided_slice %231 {offsets = [0, 0], sizes = [8, 32], strides = [1, 1]} : vector<8x128xf32> to vector<8x32xf32>
    %233 = arith.negf %232 : vector<8x32xf32>
    %234 = math.exp %233 : vector<8x32xf32>
    %cst_41 = arith.constant 1.000000e+00 : f32
    %235 = vector.broadcast %cst_41 : f32 to vector<8x32xf32>
    %236 = arith.addf %235, %234 : vector<8x32xf32>
    %237 = arith.divf %235, %236 : vector<8x32xf32>
    %238 = vector.extract_strided_slice %231 {offsets = [0, 32], sizes = [8, 32], strides = [1, 1]} : vector<8x128xf32> to vector<8x32xf32>
    %239 = arith.negf %238 : vector<8x32xf32>
    %240 = math.exp %239 : vector<8x32xf32>
    %cst_42 = arith.constant 1.000000e+00 : f32
    %241 = vector.broadcast %cst_42 : f32 to vector<8x32xf32>
    %242 = arith.addf %241, %240 : vector<8x32xf32>
    %243 = arith.divf %241, %242 : vector<8x32xf32>
    %244 = vector.extract_strided_slice %231 {offsets = [0, 64], sizes = [8, 32], strides = [1, 1]} : vector<8x128xf32> to vector<8x32xf32>
    %245 = math.tanh %244 : vector<8x32xf32>
    %246 = vector.extract_strided_slice %231 {offsets = [0, 96], sizes = [8, 32], strides = [1, 1]} : vector<8x128xf32> to vector<8x32xf32>
    %247 = arith.negf %246 : vector<8x32xf32>
    %248 = math.exp %247 : vector<8x32xf32>
    %cst_43 = arith.constant 1.000000e+00 : f32
    %249 = vector.broadcast %cst_43 : f32 to vector<8x32xf32>
    %250 = arith.addf %249, %248 : vector<8x32xf32>
    %251 = arith.divf %249, %250 : vector<8x32xf32>
    %252 = arith.mulf %243, %196 : vector<8x32xf32>
    %253 = arith.mulf %237, %245 : vector<8x32xf32>
    %254 = arith.addf %252, %253 : vector<8x32xf32>
    %255 = math.tanh %254 : vector<8x32xf32>
    %256 = arith.mulf %251, %255 : vector<8x32xf32>
    %257 = vector.extract_strided_slice %23 {offsets = [32, 0], sizes = [8, 128], strides = [1, 1]} : vector<64x128xf32> to vector<8x128xf32>
    %258 = arith.truncf %227 : vector<8x32xf32> to vector<8x32xbf16>
    %cst_44 = arith.constant dense<0.000000e+00> : vector<8x128xf32>
    %259 = tpu.matmul %258, %1, %cst_44 {dimension_numbers = #tpu.dot_dimension_numbers<[1], [0], [0], [1], [0, 0, 1, 1], [], []>} : vector<8x32xbf16>, vector<32x128xbf16>, vector<8x128xf32> -> vector<8x128xf32>
    %260 = arith.addf %257, %259 : vector<8x128xf32>
    %261 = vector.extract_strided_slice %260 {offsets = [0, 0], sizes = [8, 32], strides = [1, 1]} : vector<8x128xf32> to vector<8x32xf32>
    %262 = arith.negf %261 : vector<8x32xf32>
    %263 = math.exp %262 : vector<8x32xf32>
    %cst_45 = arith.constant 1.000000e+00 : f32
    %264 = vector.broadcast %cst_45 : f32 to vector<8x32xf32>
    %265 = arith.addf %264, %263 : vector<8x32xf32>
    %266 = arith.divf %264, %265 : vector<8x32xf32>
    %267 = vector.extract_strided_slice %260 {offsets = [0, 32], sizes = [8, 32], strides = [1, 1]} : vector<8x128xf32> to vector<8x32xf32>
    %268 = arith.negf %267 : vector<8x32xf32>
    %269 = math.exp %268 : vector<8x32xf32>
    %cst_46 = arith.constant 1.000000e+00 : f32
    %270 = vector.broadcast %cst_46 : f32 to vector<8x32xf32>
    %271 = arith.addf %270, %269 : vector<8x32xf32>
    %272 = arith.divf %270, %271 : vector<8x32xf32>
    %273 = vector.extract_strided_slice %260 {offsets = [0, 64], sizes = [8, 32], strides = [1, 1]} : vector<8x128xf32> to vector<8x32xf32>
    %274 = math.tanh %273 : vector<8x32xf32>
    %275 = vector.extract_strided_slice %260 {offsets = [0, 96], sizes = [8, 32], strides = [1, 1]} : vector<8x128xf32> to vector<8x32xf32>
    %276 = arith.negf %275 : vector<8x32xf32>
    %277 = math.exp %276 : vector<8x32xf32>
    %cst_47 = arith.constant 1.000000e+00 : f32
    %278 = vector.broadcast %cst_47 : f32 to vector<8x32xf32>
    %279 = arith.addf %278, %277 : vector<8x32xf32>
    %280 = arith.divf %278, %279 : vector<8x32xf32>
    %281 = arith.mulf %272, %225 : vector<8x32xf32>
    %282 = arith.mulf %266, %274 : vector<8x32xf32>
    %283 = arith.addf %281, %282 : vector<8x32xf32>
    %284 = math.tanh %283 : vector<8x32xf32>
    %285 = arith.mulf %280, %284 : vector<8x32xf32>
    %286 = tpu.concatenate %285, %256 in 1 : vector<8x32xf32>, vector<8x32xf32> -> vector<8x64xf32>
    %287 = arith.truncf %286 : vector<8x64xf32> to vector<8x64xbf16>
    %cst_48 = arith.constant dense<0.000000e+00> : vector<8x128xf32>
    %288 = tpu.matmul %287, %2, %cst_48 {dimension_numbers = #tpu.dot_dimension_numbers<[1], [0], [0], [1], [0, 0, 1, 1], [], []>} : vector<8x64xbf16>, vector<64x128xbf16>, vector<8x128xf32> -> vector<8x128xf32>
    %289 = arith.addf %288, %11 : vector<8x128xf32>
    %290 = vector.extract_strided_slice %289 {offsets = [0, 0], sizes = [8, 32], strides = [1, 1]} : vector<8x128xf32> to vector<8x32xf32>
    %291 = arith.negf %290 : vector<8x32xf32>
    %292 = math.exp %291 : vector<8x32xf32>
    %cst_49 = arith.constant 1.000000e+00 : f32
    %293 = vector.broadcast %cst_49 : f32 to vector<8x32xf32>
    %294 = arith.addf %293, %292 : vector<8x32xf32>
    %295 = arith.divf %293, %294 : vector<8x32xf32>
    %296 = vector.extract_strided_slice %289 {offsets = [0, 32], sizes = [8, 32], strides = [1, 1]} : vector<8x128xf32> to vector<8x32xf32>
    %297 = arith.negf %296 : vector<8x32xf32>
    %298 = math.exp %297 : vector<8x32xf32>
    %cst_50 = arith.constant 1.000000e+00 : f32
    %299 = vector.broadcast %cst_50 : f32 to vector<8x32xf32>
    %300 = arith.addf %299, %298 : vector<8x32xf32>
    %301 = arith.divf %299, %300 : vector<8x32xf32>
    %302 = vector.extract_strided_slice %289 {offsets = [0, 64], sizes = [8, 32], strides = [1, 1]} : vector<8x128xf32> to vector<8x32xf32>
    %303 = math.tanh %302 : vector<8x32xf32>
    %304 = vector.extract_strided_slice %289 {offsets = [0, 96], sizes = [8, 32], strides = [1, 1]} : vector<8x128xf32> to vector<8x32xf32>
    %305 = arith.negf %304 : vector<8x32xf32>
    %306 = math.exp %305 : vector<8x32xf32>
    %cst_51 = arith.constant 1.000000e+00 : f32
    %307 = vector.broadcast %cst_51 : f32 to vector<8x32xf32>
    %308 = arith.addf %307, %306 : vector<8x32xf32>
    %309 = arith.divf %307, %308 : vector<8x32xf32>
    %310 = arith.mulf %301, %254 : vector<8x32xf32>
    %311 = arith.mulf %295, %303 : vector<8x32xf32>
    %312 = arith.addf %310, %311 : vector<8x32xf32>
    %313 = math.tanh %312 : vector<8x32xf32>
    %314 = arith.mulf %309, %313 : vector<8x32xf32>
    %315 = vector.extract_strided_slice %23 {offsets = [40, 0], sizes = [8, 128], strides = [1, 1]} : vector<64x128xf32> to vector<8x128xf32>
    %316 = arith.truncf %285 : vector<8x32xf32> to vector<8x32xbf16>
    %cst_52 = arith.constant dense<0.000000e+00> : vector<8x128xf32>
    %317 = tpu.matmul %316, %1, %cst_52 {dimension_numbers = #tpu.dot_dimension_numbers<[1], [0], [0], [1], [0, 0, 1, 1], [], []>} : vector<8x32xbf16>, vector<32x128xbf16>, vector<8x128xf32> -> vector<8x128xf32>
    %318 = arith.addf %315, %317 : vector<8x128xf32>
    %319 = vector.extract_strided_slice %318 {offsets = [0, 0], sizes = [8, 32], strides = [1, 1]} : vector<8x128xf32> to vector<8x32xf32>
    %320 = arith.negf %319 : vector<8x32xf32>
    %321 = math.exp %320 : vector<8x32xf32>
    %cst_53 = arith.constant 1.000000e+00 : f32
    %322 = vector.broadcast %cst_53 : f32 to vector<8x32xf32>
    %323 = arith.addf %322, %321 : vector<8x32xf32>
    %324 = arith.divf %322, %323 : vector<8x32xf32>
    %325 = vector.extract_strided_slice %318 {offsets = [0, 32], sizes = [8, 32], strides = [1, 1]} : vector<8x128xf32> to vector<8x32xf32>
    %326 = arith.negf %325 : vector<8x32xf32>
    %327 = math.exp %326 : vector<8x32xf32>
    %cst_54 = arith.constant 1.000000e+00 : f32
    %328 = vector.broadcast %cst_54 : f32 to vector<8x32xf32>
    %329 = arith.addf %328, %327 : vector<8x32xf32>
    %330 = arith.divf %328, %329 : vector<8x32xf32>
    %331 = vector.extract_strided_slice %318 {offsets = [0, 64], sizes = [8, 32], strides = [1, 1]} : vector<8x128xf32> to vector<8x32xf32>
    %332 = math.tanh %331 : vector<8x32xf32>
    %333 = vector.extract_strided_slice %318 {offsets = [0, 96], sizes = [8, 32], strides = [1, 1]} : vector<8x128xf32> to vector<8x32xf32>
    %334 = arith.negf %333 : vector<8x32xf32>
    %335 = math.exp %334 : vector<8x32xf32>
    %cst_55 = arith.constant 1.000000e+00 : f32
    %336 = vector.broadcast %cst_55 : f32 to vector<8x32xf32>
    %337 = arith.addf %336, %335 : vector<8x32xf32>
    %338 = arith.divf %336, %337 : vector<8x32xf32>
    %339 = arith.mulf %330, %283 : vector<8x32xf32>
    %340 = arith.mulf %324, %332 : vector<8x32xf32>
    %341 = arith.addf %339, %340 : vector<8x32xf32>
    %342 = math.tanh %341 : vector<8x32xf32>
    %343 = arith.mulf %338, %342 : vector<8x32xf32>
    %344 = tpu.concatenate %343, %314 in 1 : vector<8x32xf32>, vector<8x32xf32> -> vector<8x64xf32>
    %345 = arith.truncf %344 : vector<8x64xf32> to vector<8x64xbf16>
    %cst_56 = arith.constant dense<0.000000e+00> : vector<8x128xf32>
    %346 = tpu.matmul %345, %2, %cst_56 {dimension_numbers = #tpu.dot_dimension_numbers<[1], [0], [0], [1], [0, 0, 1, 1], [], []>} : vector<8x64xbf16>, vector<64x128xbf16>, vector<8x128xf32> -> vector<8x128xf32>
    %347 = arith.addf %346, %11 : vector<8x128xf32>
    %348 = vector.extract_strided_slice %347 {offsets = [0, 0], sizes = [8, 32], strides = [1, 1]} : vector<8x128xf32> to vector<8x32xf32>
    %349 = arith.negf %348 : vector<8x32xf32>
    %350 = math.exp %349 : vector<8x32xf32>
    %cst_57 = arith.constant 1.000000e+00 : f32
    %351 = vector.broadcast %cst_57 : f32 to vector<8x32xf32>
    %352 = arith.addf %351, %350 : vector<8x32xf32>
    %353 = arith.divf %351, %352 : vector<8x32xf32>
    %354 = vector.extract_strided_slice %347 {offsets = [0, 32], sizes = [8, 32], strides = [1, 1]} : vector<8x128xf32> to vector<8x32xf32>
    %355 = arith.negf %354 : vector<8x32xf32>
    %356 = math.exp %355 : vector<8x32xf32>
    %cst_58 = arith.constant 1.000000e+00 : f32
    %357 = vector.broadcast %cst_58 : f32 to vector<8x32xf32>
    %358 = arith.addf %357, %356 : vector<8x32xf32>
    %359 = arith.divf %357, %358 : vector<8x32xf32>
    %360 = vector.extract_strided_slice %347 {offsets = [0, 64], sizes = [8, 32], strides = [1, 1]} : vector<8x128xf32> to vector<8x32xf32>
    %361 = math.tanh %360 : vector<8x32xf32>
    %362 = vector.extract_strided_slice %347 {offsets = [0, 96], sizes = [8, 32], strides = [1, 1]} : vector<8x128xf32> to vector<8x32xf32>
    %363 = arith.negf %362 : vector<8x32xf32>
    %364 = math.exp %363 : vector<8x32xf32>
    %cst_59 = arith.constant 1.000000e+00 : f32
    %365 = vector.broadcast %cst_59 : f32 to vector<8x32xf32>
    %366 = arith.addf %365, %364 : vector<8x32xf32>
    %367 = arith.divf %365, %366 : vector<8x32xf32>
    %368 = arith.mulf %359, %312 : vector<8x32xf32>
    %369 = arith.mulf %353, %361 : vector<8x32xf32>
    %370 = arith.addf %368, %369 : vector<8x32xf32>
    %371 = math.tanh %370 : vector<8x32xf32>
    %372 = arith.mulf %367, %371 : vector<8x32xf32>
    %373 = vector.extract_strided_slice %23 {offsets = [48, 0], sizes = [8, 128], strides = [1, 1]} : vector<64x128xf32> to vector<8x128xf32>
    %374 = arith.truncf %343 : vector<8x32xf32> to vector<8x32xbf16>
    %cst_60 = arith.constant dense<0.000000e+00> : vector<8x128xf32>
    %375 = tpu.matmul %374, %1, %cst_60 {dimension_numbers = #tpu.dot_dimension_numbers<[1], [0], [0], [1], [0, 0, 1, 1], [], []>} : vector<8x32xbf16>, vector<32x128xbf16>, vector<8x128xf32> -> vector<8x128xf32>
    %376 = arith.addf %373, %375 : vector<8x128xf32>
    %377 = vector.extract_strided_slice %376 {offsets = [0, 0], sizes = [8, 32], strides = [1, 1]} : vector<8x128xf32> to vector<8x32xf32>
    %378 = arith.negf %377 : vector<8x32xf32>
    %379 = math.exp %378 : vector<8x32xf32>
    %cst_61 = arith.constant 1.000000e+00 : f32
    %380 = vector.broadcast %cst_61 : f32 to vector<8x32xf32>
    %381 = arith.addf %380, %379 : vector<8x32xf32>
    %382 = arith.divf %380, %381 : vector<8x32xf32>
    %383 = vector.extract_strided_slice %376 {offsets = [0, 32], sizes = [8, 32], strides = [1, 1]} : vector<8x128xf32> to vector<8x32xf32>
    %384 = arith.negf %383 : vector<8x32xf32>
    %385 = math.exp %384 : vector<8x32xf32>
    %cst_62 = arith.constant 1.000000e+00 : f32
    %386 = vector.broadcast %cst_62 : f32 to vector<8x32xf32>
    %387 = arith.addf %386, %385 : vector<8x32xf32>
    %388 = arith.divf %386, %387 : vector<8x32xf32>
    %389 = vector.extract_strided_slice %376 {offsets = [0, 64], sizes = [8, 32], strides = [1, 1]} : vector<8x128xf32> to vector<8x32xf32>
    %390 = math.tanh %389 : vector<8x32xf32>
    %391 = vector.extract_strided_slice %376 {offsets = [0, 96], sizes = [8, 32], strides = [1, 1]} : vector<8x128xf32> to vector<8x32xf32>
    %392 = arith.negf %391 : vector<8x32xf32>
    %393 = math.exp %392 : vector<8x32xf32>
    %cst_63 = arith.constant 1.000000e+00 : f32
    %394 = vector.broadcast %cst_63 : f32 to vector<8x32xf32>
    %395 = arith.addf %394, %393 : vector<8x32xf32>
    %396 = arith.divf %394, %395 : vector<8x32xf32>
    %397 = arith.mulf %388, %341 : vector<8x32xf32>
    %398 = arith.mulf %382, %390 : vector<8x32xf32>
    %399 = arith.addf %397, %398 : vector<8x32xf32>
    %400 = math.tanh %399 : vector<8x32xf32>
    %401 = arith.mulf %396, %400 : vector<8x32xf32>
    %402 = tpu.concatenate %401, %372 in 1 : vector<8x32xf32>, vector<8x32xf32> -> vector<8x64xf32>
    %403 = arith.truncf %402 : vector<8x64xf32> to vector<8x64xbf16>
    %cst_64 = arith.constant dense<0.000000e+00> : vector<8x128xf32>
    %404 = tpu.matmul %403, %2, %cst_64 {dimension_numbers = #tpu.dot_dimension_numbers<[1], [0], [0], [1], [0, 0, 1, 1], [], []>} : vector<8x64xbf16>, vector<64x128xbf16>, vector<8x128xf32> -> vector<8x128xf32>
    %405 = arith.addf %404, %11 : vector<8x128xf32>
    %406 = vector.extract_strided_slice %405 {offsets = [0, 0], sizes = [8, 32], strides = [1, 1]} : vector<8x128xf32> to vector<8x32xf32>
    %407 = arith.negf %406 : vector<8x32xf32>
    %408 = math.exp %407 : vector<8x32xf32>
    %cst_65 = arith.constant 1.000000e+00 : f32
    %409 = vector.broadcast %cst_65 : f32 to vector<8x32xf32>
    %410 = arith.addf %409, %408 : vector<8x32xf32>
    %411 = arith.divf %409, %410 : vector<8x32xf32>
    %412 = vector.extract_strided_slice %405 {offsets = [0, 32], sizes = [8, 32], strides = [1, 1]} : vector<8x128xf32> to vector<8x32xf32>
    %413 = arith.negf %412 : vector<8x32xf32>
    %414 = math.exp %413 : vector<8x32xf32>
    %cst_66 = arith.constant 1.000000e+00 : f32
    %415 = vector.broadcast %cst_66 : f32 to vector<8x32xf32>
    %416 = arith.addf %415, %414 : vector<8x32xf32>
    %417 = arith.divf %415, %416 : vector<8x32xf32>
    %418 = vector.extract_strided_slice %405 {offsets = [0, 64], sizes = [8, 32], strides = [1, 1]} : vector<8x128xf32> to vector<8x32xf32>
    %419 = math.tanh %418 : vector<8x32xf32>
    %420 = vector.extract_strided_slice %405 {offsets = [0, 96], sizes = [8, 32], strides = [1, 1]} : vector<8x128xf32> to vector<8x32xf32>
    %421 = arith.negf %420 : vector<8x32xf32>
    %422 = math.exp %421 : vector<8x32xf32>
    %cst_67 = arith.constant 1.000000e+00 : f32
    %423 = vector.broadcast %cst_67 : f32 to vector<8x32xf32>
    %424 = arith.addf %423, %422 : vector<8x32xf32>
    %425 = arith.divf %423, %424 : vector<8x32xf32>
    %426 = arith.mulf %417, %370 : vector<8x32xf32>
    %427 = arith.mulf %411, %419 : vector<8x32xf32>
    %428 = arith.addf %426, %427 : vector<8x32xf32>
    %429 = math.tanh %428 : vector<8x32xf32>
    %430 = arith.mulf %425, %429 : vector<8x32xf32>
    %431 = vector.extract_strided_slice %23 {offsets = [56, 0], sizes = [8, 128], strides = [1, 1]} : vector<64x128xf32> to vector<8x128xf32>
    %432 = arith.truncf %401 : vector<8x32xf32> to vector<8x32xbf16>
    %cst_68 = arith.constant dense<0.000000e+00> : vector<8x128xf32>
    %433 = tpu.matmul %432, %1, %cst_68 {dimension_numbers = #tpu.dot_dimension_numbers<[1], [0], [0], [1], [0, 0, 1, 1], [], []>} : vector<8x32xbf16>, vector<32x128xbf16>, vector<8x128xf32> -> vector<8x128xf32>
    %434 = arith.addf %431, %433 : vector<8x128xf32>
    %435 = vector.extract_strided_slice %434 {offsets = [0, 0], sizes = [8, 32], strides = [1, 1]} : vector<8x128xf32> to vector<8x32xf32>
    %436 = arith.negf %435 : vector<8x32xf32>
    %437 = math.exp %436 : vector<8x32xf32>
    %cst_69 = arith.constant 1.000000e+00 : f32
    %438 = vector.broadcast %cst_69 : f32 to vector<8x32xf32>
    %439 = arith.addf %438, %437 : vector<8x32xf32>
    %440 = arith.divf %438, %439 : vector<8x32xf32>
    %441 = vector.extract_strided_slice %434 {offsets = [0, 32], sizes = [8, 32], strides = [1, 1]} : vector<8x128xf32> to vector<8x32xf32>
    %442 = arith.negf %441 : vector<8x32xf32>
    %443 = math.exp %442 : vector<8x32xf32>
    %cst_70 = arith.constant 1.000000e+00 : f32
    %444 = vector.broadcast %cst_70 : f32 to vector<8x32xf32>
    %445 = arith.addf %444, %443 : vector<8x32xf32>
    %446 = arith.divf %444, %445 : vector<8x32xf32>
    %447 = vector.extract_strided_slice %434 {offsets = [0, 64], sizes = [8, 32], strides = [1, 1]} : vector<8x128xf32> to vector<8x32xf32>
    %448 = math.tanh %447 : vector<8x32xf32>
    %449 = vector.extract_strided_slice %434 {offsets = [0, 96], sizes = [8, 32], strides = [1, 1]} : vector<8x128xf32> to vector<8x32xf32>
    %450 = arith.negf %449 : vector<8x32xf32>
    %451 = math.exp %450 : vector<8x32xf32>
    %cst_71 = arith.constant 1.000000e+00 : f32
    %452 = vector.broadcast %cst_71 : f32 to vector<8x32xf32>
    %453 = arith.addf %452, %451 : vector<8x32xf32>
    %454 = arith.divf %452, %453 : vector<8x32xf32>
    %455 = arith.mulf %446, %399 : vector<8x32xf32>
    %456 = arith.mulf %440, %448 : vector<8x32xf32>
    %457 = arith.addf %455, %456 : vector<8x32xf32>
    %458 = math.tanh %457 : vector<8x32xf32>
    %459 = arith.mulf %454, %458 : vector<8x32xf32>
    %460 = tpu.concatenate %459, %430 in 1 : vector<8x32xf32>, vector<8x32xf32> -> vector<8x64xf32>
    %461 = arith.truncf %460 : vector<8x64xf32> to vector<8x64xbf16>
    %cst_72 = arith.constant dense<0.000000e+00> : vector<8x128xf32>
    %462 = tpu.matmul %461, %2, %cst_72 {dimension_numbers = #tpu.dot_dimension_numbers<[1], [0], [0], [1], [0, 0, 1, 1], [], []>} : vector<8x64xbf16>, vector<64x128xbf16>, vector<8x128xf32> -> vector<8x128xf32>
    %463 = arith.addf %462, %11 : vector<8x128xf32>
    %464 = vector.extract_strided_slice %463 {offsets = [0, 0], sizes = [8, 32], strides = [1, 1]} : vector<8x128xf32> to vector<8x32xf32>
    %465 = arith.negf %464 : vector<8x32xf32>
    %466 = math.exp %465 : vector<8x32xf32>
    %cst_73 = arith.constant 1.000000e+00 : f32
    %467 = vector.broadcast %cst_73 : f32 to vector<8x32xf32>
    %468 = arith.addf %467, %466 : vector<8x32xf32>
    %469 = arith.divf %467, %468 : vector<8x32xf32>
    %470 = vector.extract_strided_slice %463 {offsets = [0, 32], sizes = [8, 32], strides = [1, 1]} : vector<8x128xf32> to vector<8x32xf32>
    %471 = arith.negf %470 : vector<8x32xf32>
    %472 = math.exp %471 : vector<8x32xf32>
    %cst_74 = arith.constant 1.000000e+00 : f32
    %473 = vector.broadcast %cst_74 : f32 to vector<8x32xf32>
    %474 = arith.addf %473, %472 : vector<8x32xf32>
    %475 = arith.divf %473, %474 : vector<8x32xf32>
    %476 = vector.extract_strided_slice %463 {offsets = [0, 64], sizes = [8, 32], strides = [1, 1]} : vector<8x128xf32> to vector<8x32xf32>
    %477 = math.tanh %476 : vector<8x32xf32>
    %478 = vector.extract_strided_slice %463 {offsets = [0, 96], sizes = [8, 32], strides = [1, 1]} : vector<8x128xf32> to vector<8x32xf32>
    %479 = arith.negf %478 : vector<8x32xf32>
    %480 = math.exp %479 : vector<8x32xf32>
    %cst_75 = arith.constant 1.000000e+00 : f32
    %481 = vector.broadcast %cst_75 : f32 to vector<8x32xf32>
    %482 = arith.addf %481, %480 : vector<8x32xf32>
    %483 = arith.divf %481, %482 : vector<8x32xf32>
    %484 = arith.mulf %475, %428 : vector<8x32xf32>
    %485 = arith.mulf %469, %477 : vector<8x32xf32>
    %486 = arith.addf %484, %485 : vector<8x32xf32>
    %487 = math.tanh %486 : vector<8x32xf32>
    %488 = arith.mulf %483, %487 : vector<8x32xf32>
    %c0_76 = arith.constant 0 : index
    %c0_77 = arith.constant 0 : index
    %489 = vector.load %arg4[%c0_76, %c0_77] : memref<8x32xf32, #tpu.memory_space<vmem>>, vector<8x32xf32>
    tpu.vector_store %arg4[%c0_76, %c0_77], %488 {strides = array<i32>} : memref<8x32xf32, #tpu.memory_space<vmem>>, vector<8x32xf32>,
    %490 = arith.truncf %488 : vector<8x32xf32> to vector<8x32xbf16>
    %cst_78 = arith.constant dense<0.000000e+00> : vector<8x128xf32>
    %491 = tpu.matmul %490, %3, %cst_78 {dimension_numbers = #tpu.dot_dimension_numbers<[1], [0], [0], [1], [0, 0, 1, 1], [], []>} : vector<8x32xbf16>, vector<32x128xbf16>, vector<8x128xf32> -> vector<8x128xf32>
    %492 = vector.broadcast %12 : vector<1x128xf32> to vector<8x128xf32>
    %493 = arith.addf %491, %492 : vector<8x128xf32>
    %494 = vector.extract_strided_slice %493 {offsets = [0, 0], sizes = [1, 128], strides = [1, 1]} : vector<8x128xf32> to vector<1x128xf32>
    %495 = vector.shape_cast %494 : vector<1x128xf32> to vector<1x128xf32>
    %496 = vector.broadcast %495 : vector<1x128xf32> to vector<8x128xf32>
    %497 = vector.extract_strided_slice %493 {offsets = [1, 0], sizes = [1, 128], strides = [1, 1]} : vector<8x128xf32> to vector<1x128xf32>
    %498 = vector.shape_cast %497 : vector<1x128xf32> to vector<1x128xf32>
    %499 = vector.broadcast %498 : vector<1x128xf32> to vector<8x128xf32>
    %500 = vector.extract_strided_slice %493 {offsets = [2, 0], sizes = [1, 128], strides = [1, 1]} : vector<8x128xf32> to vector<1x128xf32>
    %501 = vector.shape_cast %500 : vector<1x128xf32> to vector<1x128xf32>
    %502 = vector.broadcast %501 : vector<1x128xf32> to vector<8x128xf32>
    %503 = vector.extract_strided_slice %493 {offsets = [3, 0], sizes = [1, 128], strides = [1, 1]} : vector<8x128xf32> to vector<1x128xf32>
    %504 = vector.shape_cast %503 : vector<1x128xf32> to vector<1x128xf32>
    %505 = vector.broadcast %504 : vector<1x128xf32> to vector<8x128xf32>
    %cst_79 = arith.constant 0.000000e+00 : f32
    %506 = vector.broadcast %cst_79 : f32 to vector<8x32xf32>
    %507 = arith.truncf %506 : vector<8x32xf32> to vector<8x32xbf16>
    %cst_80 = arith.constant dense<0.000000e+00> : vector<8x128xf32>
    %508 = tpu.matmul %507, %4, %cst_80 {dimension_numbers = #tpu.dot_dimension_numbers<[1], [0], [0], [1], [0, 0, 1, 1], [], []>} : vector<8x32xbf16>, vector<32x128xbf16>, vector<8x128xf32> -> vector<8x128xf32>
    %509 = arith.addf %496, %508 : vector<8x128xf32>
    %510 = vector.extract_strided_slice %509 {offsets = [0, 0], sizes = [8, 32], strides = [1, 1]} : vector<8x128xf32> to vector<8x32xf32>
    %511 = arith.negf %510 : vector<8x32xf32>
    %512 = math.exp %511 : vector<8x32xf32>
    %cst_81 = arith.constant 1.000000e+00 : f32
    %513 = vector.broadcast %cst_81 : f32 to vector<8x32xf32>
    %514 = arith.addf %513, %512 : vector<8x32xf32>
    %515 = arith.divf %513, %514 : vector<8x32xf32>
    %516 = vector.extract_strided_slice %509 {offsets = [0, 32], sizes = [8, 32], strides = [1, 1]} : vector<8x128xf32> to vector<8x32xf32>
    %517 = arith.negf %516 : vector<8x32xf32>
    %518 = math.exp %517 : vector<8x32xf32>
    %cst_82 = arith.constant 1.000000e+00 : f32
    %519 = vector.broadcast %cst_82 : f32 to vector<8x32xf32>
    %520 = arith.addf %519, %518 : vector<8x32xf32>
    %521 = arith.divf %519, %520 : vector<8x32xf32>
    %522 = vector.extract_strided_slice %509 {offsets = [0, 64], sizes = [8, 32], strides = [1, 1]} : vector<8x128xf32> to vector<8x32xf32>
    %523 = math.tanh %522 : vector<8x32xf32>
    %524 = vector.extract_strided_slice %509 {offsets = [0, 96], sizes = [8, 32], strides = [1, 1]} : vector<8x128xf32> to vector<8x32xf32>
    %525 = arith.negf %524 : vector<8x32xf32>
    %526 = math.exp %525 : vector<8x32xf32>
    %cst_83 = arith.constant 1.000000e+00 : f32
    %527 = vector.broadcast %cst_83 : f32 to vector<8x32xf32>
    %528 = arith.addf %527, %526 : vector<8x32xf32>
    %529 = arith.divf %527, %528 : vector<8x32xf32>
    %530 = arith.mulf %521, %506 : vector<8x32xf32>
    %531 = arith.mulf %515, %523 : vector<8x32xf32>
    %532 = arith.addf %530, %531 : vector<8x32xf32>
    %533 = math.tanh %532 : vector<8x32xf32>
    %534 = arith.mulf %529, %533 : vector<8x32xf32>
    %535 = tpu.concatenate %534, %506 in 1 : vector<8x32xf32>, vector<8x32xf32> -> vector<8x64xf32>
    %536 = arith.truncf %535 : vector<8x64xf32> to vector<8x64xbf16>
    %cst_84 = arith.constant dense<0.000000e+00> : vector<8x128xf32>
    %537 = tpu.matmul %536, %5, %cst_84 {dimension_numbers = #tpu.dot_dimension_numbers<[1], [0], [0], [1], [0, 0, 1, 1], [], []>} : vector<8x64xbf16>, vector<64x128xbf16>, vector<8x128xf32> -> vector<8x128xf32>
    %538 = arith.addf %537, %15 : vector<8x128xf32>
    %539 = vector.extract_strided_slice %538 {offsets = [0, 0], sizes = [8, 32], strides = [1, 1]} : vector<8x128xf32> to vector<8x32xf32>
    %540 = arith.negf %539 : vector<8x32xf32>
    %541 = math.exp %540 : vector<8x32xf32>
    %cst_85 = arith.constant 1.000000e+00 : f32
    %542 = vector.broadcast %cst_85 : f32 to vector<8x32xf32>
    %543 = arith.addf %542, %541 : vector<8x32xf32>
    %544 = arith.divf %542, %543 : vector<8x32xf32>
    %545 = vector.extract_strided_slice %538 {offsets = [0, 32], sizes = [8, 32], strides = [1, 1]} : vector<8x128xf32> to vector<8x32xf32>
    %546 = arith.negf %545 : vector<8x32xf32>
    %547 = math.exp %546 : vector<8x32xf32>
    %cst_86 = arith.constant 1.000000e+00 : f32
    %548 = vector.broadcast %cst_86 : f32 to vector<8x32xf32>
    %549 = arith.addf %548, %547 : vector<8x32xf32>
    %550 = arith.divf %548, %549 : vector<8x32xf32>
    %551 = vector.extract_strided_slice %538 {offsets = [0, 64], sizes = [8, 32], strides = [1, 1]} : vector<8x128xf32> to vector<8x32xf32>
    %552 = math.tanh %551 : vector<8x32xf32>
    %553 = vector.extract_strided_slice %538 {offsets = [0, 96], sizes = [8, 32], strides = [1, 1]} : vector<8x128xf32> to vector<8x32xf32>
    %554 = arith.negf %553 : vector<8x32xf32>
    %555 = math.exp %554 : vector<8x32xf32>
    %cst_87 = arith.constant 1.000000e+00 : f32
    %556 = vector.broadcast %cst_87 : f32 to vector<8x32xf32>
    %557 = arith.addf %556, %555 : vector<8x32xf32>
    %558 = arith.divf %556, %557 : vector<8x32xf32>
    %559 = arith.mulf %550, %506 : vector<8x32xf32>
    %560 = arith.mulf %544, %552 : vector<8x32xf32>
    %561 = arith.addf %559, %560 : vector<8x32xf32>
    %562 = math.tanh %561 : vector<8x32xf32>
    %563 = arith.mulf %558, %562 : vector<8x32xf32>
    %564 = arith.truncf %534 : vector<8x32xf32> to vector<8x32xbf16>
    %cst_88 = arith.constant dense<0.000000e+00> : vector<8x128xf32>
    %565 = tpu.matmul %564, %4, %cst_88 {dimension_numbers = #tpu.dot_dimension_numbers<[1], [0], [0], [1], [0, 0, 1, 1], [], []>} : vector<8x32xbf16>, vector<32x128xbf16>, vector<8x128xf32> -> vector<8x128xf32>
    %566 = arith.addf %499, %565 : vector<8x128xf32>
    %567 = vector.extract_strided_slice %566 {offsets = [0, 0], sizes = [8, 32], strides = [1, 1]} : vector<8x128xf32> to vector<8x32xf32>
    %568 = arith.negf %567 : vector<8x32xf32>
    %569 = math.exp %568 : vector<8x32xf32>
    %cst_89 = arith.constant 1.000000e+00 : f32
    %570 = vector.broadcast %cst_89 : f32 to vector<8x32xf32>
    %571 = arith.addf %570, %569 : vector<8x32xf32>
    %572 = arith.divf %570, %571 : vector<8x32xf32>
    %573 = vector.extract_strided_slice %566 {offsets = [0, 32], sizes = [8, 32], strides = [1, 1]} : vector<8x128xf32> to vector<8x32xf32>
    %574 = arith.negf %573 : vector<8x32xf32>
    %575 = math.exp %574 : vector<8x32xf32>
    %cst_90 = arith.constant 1.000000e+00 : f32
    %576 = vector.broadcast %cst_90 : f32 to vector<8x32xf32>
    %577 = arith.addf %576, %575 : vector<8x32xf32>
    %578 = arith.divf %576, %577 : vector<8x32xf32>
    %579 = vector.extract_strided_slice %566 {offsets = [0, 64], sizes = [8, 32], strides = [1, 1]} : vector<8x128xf32> to vector<8x32xf32>
    %580 = math.tanh %579 : vector<8x32xf32>
    %581 = vector.extract_strided_slice %566 {offsets = [0, 96], sizes = [8, 32], strides = [1, 1]} : vector<8x128xf32> to vector<8x32xf32>
    %582 = arith.negf %581 : vector<8x32xf32>
    %583 = math.exp %582 : vector<8x32xf32>
    %cst_91 = arith.constant 1.000000e+00 : f32
    %584 = vector.broadcast %cst_91 : f32 to vector<8x32xf32>
    %585 = arith.addf %584, %583 : vector<8x32xf32>
    %586 = arith.divf %584, %585 : vector<8x32xf32>
    %587 = arith.mulf %578, %532 : vector<8x32xf32>
    %588 = arith.mulf %572, %580 : vector<8x32xf32>
    %589 = arith.addf %587, %588 : vector<8x32xf32>
    %590 = math.tanh %589 : vector<8x32xf32>
    %591 = arith.mulf %586, %590 : vector<8x32xf32>
    %592 = tpu.concatenate %591, %563 in 1 : vector<8x32xf32>, vector<8x32xf32> -> vector<8x64xf32>
    %593 = arith.truncf %592 : vector<8x64xf32> to vector<8x64xbf16>
    %cst_92 = arith.constant dense<0.000000e+00> : vector<8x128xf32>
    %594 = tpu.matmul %593, %5, %cst_92 {dimension_numbers = #tpu.dot_dimension_numbers<[1], [0], [0], [1], [0, 0, 1, 1], [], []>} : vector<8x64xbf16>, vector<64x128xbf16>, vector<8x128xf32> -> vector<8x128xf32>
    %595 = arith.addf %594, %15 : vector<8x128xf32>
    %596 = vector.extract_strided_slice %595 {offsets = [0, 0], sizes = [8, 32], strides = [1, 1]} : vector<8x128xf32> to vector<8x32xf32>
    %597 = arith.negf %596 : vector<8x32xf32>
    %598 = math.exp %597 : vector<8x32xf32>
    %cst_93 = arith.constant 1.000000e+00 : f32
    %599 = vector.broadcast %cst_93 : f32 to vector<8x32xf32>
    %600 = arith.addf %599, %598 : vector<8x32xf32>
    %601 = arith.divf %599, %600 : vector<8x32xf32>
    %602 = vector.extract_strided_slice %595 {offsets = [0, 32], sizes = [8, 32], strides = [1, 1]} : vector<8x128xf32> to vector<8x32xf32>
    %603 = arith.negf %602 : vector<8x32xf32>
    %604 = math.exp %603 : vector<8x32xf32>
    %cst_94 = arith.constant 1.000000e+00 : f32
    %605 = vector.broadcast %cst_94 : f32 to vector<8x32xf32>
    %606 = arith.addf %605, %604 : vector<8x32xf32>
    %607 = arith.divf %605, %606 : vector<8x32xf32>
    %608 = vector.extract_strided_slice %595 {offsets = [0, 64], sizes = [8, 32], strides = [1, 1]} : vector<8x128xf32> to vector<8x32xf32>
    %609 = math.tanh %608 : vector<8x32xf32>
    %610 = vector.extract_strided_slice %595 {offsets = [0, 96], sizes = [8, 32], strides = [1, 1]} : vector<8x128xf32> to vector<8x32xf32>
    %611 = arith.negf %610 : vector<8x32xf32>
    %612 = math.exp %611 : vector<8x32xf32>
    %cst_95 = arith.constant 1.000000e+00 : f32
    %613 = vector.broadcast %cst_95 : f32 to vector<8x32xf32>
    %614 = arith.addf %613, %612 : vector<8x32xf32>
    %615 = arith.divf %613, %614 : vector<8x32xf32>
    %616 = arith.mulf %607, %561 : vector<8x32xf32>
    %617 = arith.mulf %601, %609 : vector<8x32xf32>
    %618 = arith.addf %616, %617 : vector<8x32xf32>
    %619 = math.tanh %618 : vector<8x32xf32>
    %620 = arith.mulf %615, %619 : vector<8x32xf32>
    %621 = arith.truncf %591 : vector<8x32xf32> to vector<8x32xbf16>
    %cst_96 = arith.constant dense<0.000000e+00> : vector<8x128xf32>
    %622 = tpu.matmul %621, %4, %cst_96 {dimension_numbers = #tpu.dot_dimension_numbers<[1], [0], [0], [1], [0, 0, 1, 1], [], []>} : vector<8x32xbf16>, vector<32x128xbf16>, vector<8x128xf32> -> vector<8x128xf32>
    %623 = arith.addf %502, %622 : vector<8x128xf32>
    %624 = vector.extract_strided_slice %623 {offsets = [0, 0], sizes = [8, 32], strides = [1, 1]} : vector<8x128xf32> to vector<8x32xf32>
    %625 = arith.negf %624 : vector<8x32xf32>
    %626 = math.exp %625 : vector<8x32xf32>
    %cst_97 = arith.constant 1.000000e+00 : f32
    %627 = vector.broadcast %cst_97 : f32 to vector<8x32xf32>
    %628 = arith.addf %627, %626 : vector<8x32xf32>
    %629 = arith.divf %627, %628 : vector<8x32xf32>
    %630 = vector.extract_strided_slice %623 {offsets = [0, 32], sizes = [8, 32], strides = [1, 1]} : vector<8x128xf32> to vector<8x32xf32>
    %631 = arith.negf %630 : vector<8x32xf32>
    %632 = math.exp %631 : vector<8x32xf32>
    %cst_98 = arith.constant 1.000000e+00 : f32
    %633 = vector.broadcast %cst_98 : f32 to vector<8x32xf32>
    %634 = arith.addf %633, %632 : vector<8x32xf32>
    %635 = arith.divf %633, %634 : vector<8x32xf32>
    %636 = vector.extract_strided_slice %623 {offsets = [0, 64], sizes = [8, 32], strides = [1, 1]} : vector<8x128xf32> to vector<8x32xf32>
    %637 = math.tanh %636 : vector<8x32xf32>
    %638 = vector.extract_strided_slice %623 {offsets = [0, 96], sizes = [8, 32], strides = [1, 1]} : vector<8x128xf32> to vector<8x32xf32>
    %639 = arith.negf %638 : vector<8x32xf32>
    %640 = math.exp %639 : vector<8x32xf32>
    %cst_99 = arith.constant 1.000000e+00 : f32
    %641 = vector.broadcast %cst_99 : f32 to vector<8x32xf32>
    %642 = arith.addf %641, %640 : vector<8x32xf32>
    %643 = arith.divf %641, %642 : vector<8x32xf32>
    %644 = arith.mulf %635, %589 : vector<8x32xf32>
    %645 = arith.mulf %629, %637 : vector<8x32xf32>
    %646 = arith.addf %644, %645 : vector<8x32xf32>
    %647 = math.tanh %646 : vector<8x32xf32>
    %648 = arith.mulf %643, %647 : vector<8x32xf32>
    %649 = tpu.concatenate %648, %620 in 1 : vector<8x32xf32>, vector<8x32xf32> -> vector<8x64xf32>
    %650 = arith.truncf %649 : vector<8x64xf32> to vector<8x64xbf16>
    %cst_100 = arith.constant dense<0.000000e+00> : vector<8x128xf32>
    %651 = tpu.matmul %650, %5, %cst_100 {dimension_numbers = #tpu.dot_dimension_numbers<[1], [0], [0], [1], [0, 0, 1, 1], [], []>} : vector<8x64xbf16>, vector<64x128xbf16>, vector<8x128xf32> -> vector<8x128xf32>
    %652 = arith.addf %651, %15 : vector<8x128xf32>
    %653 = vector.extract_strided_slice %652 {offsets = [0, 0], sizes = [8, 32], strides = [1, 1]} : vector<8x128xf32> to vector<8x32xf32>
    %654 = arith.negf %653 : vector<8x32xf32>
    %655 = math.exp %654 : vector<8x32xf32>
    %cst_101 = arith.constant 1.000000e+00 : f32
    %656 = vector.broadcast %cst_101 : f32 to vector<8x32xf32>
    %657 = arith.addf %656, %655 : vector<8x32xf32>
    %658 = arith.divf %656, %657 : vector<8x32xf32>
    %659 = vector.extract_strided_slice %652 {offsets = [0, 32], sizes = [8, 32], strides = [1, 1]} : vector<8x128xf32> to vector<8x32xf32>
    %660 = arith.negf %659 : vector<8x32xf32>
    %661 = math.exp %660 : vector<8x32xf32>
    %cst_102 = arith.constant 1.000000e+00 : f32
    %662 = vector.broadcast %cst_102 : f32 to vector<8x32xf32>
    %663 = arith.addf %662, %661 : vector<8x32xf32>
    %664 = arith.divf %662, %663 : vector<8x32xf32>
    %665 = vector.extract_strided_slice %652 {offsets = [0, 64], sizes = [8, 32], strides = [1, 1]} : vector<8x128xf32> to vector<8x32xf32>
    %666 = math.tanh %665 : vector<8x32xf32>
    %667 = vector.extract_strided_slice %652 {offsets = [0, 96], sizes = [8, 32], strides = [1, 1]} : vector<8x128xf32> to vector<8x32xf32>
    %668 = arith.negf %667 : vector<8x32xf32>
    %669 = math.exp %668 : vector<8x32xf32>
    %cst_103 = arith.constant 1.000000e+00 : f32
    %670 = vector.broadcast %cst_103 : f32 to vector<8x32xf32>
    %671 = arith.addf %670, %669 : vector<8x32xf32>
    %672 = arith.divf %670, %671 : vector<8x32xf32>
    %673 = arith.mulf %664, %618 : vector<8x32xf32>
    %674 = arith.mulf %658, %666 : vector<8x32xf32>
    %675 = arith.addf %673, %674 : vector<8x32xf32>
    %676 = math.tanh %675 : vector<8x32xf32>
    %677 = arith.mulf %672, %676 : vector<8x32xf32>
    %678 = arith.truncf %648 : vector<8x32xf32> to vector<8x32xbf16>
    %cst_104 = arith.constant dense<0.000000e+00> : vector<8x128xf32>
    %679 = tpu.matmul %678, %4, %cst_104 {dimension_numbers = #tpu.dot_dimension_numbers<[1], [0], [0], [1], [0, 0, 1, 1], [], []>} : vector<8x32xbf16>, vector<32x128xbf16>, vector<8x128xf32> -> vector<8x128xf32>
    %680 = arith.addf %505, %679 : vector<8x128xf32>
    %681 = vector.extract_strided_slice %680 {offsets = [0, 0], sizes = [8, 32], strides = [1, 1]} : vector<8x128xf32> to vector<8x32xf32>
    %682 = arith.negf %681 : vector<8x32xf32>
    %683 = math.exp %682 : vector<8x32xf32>
    %cst_105 = arith.constant 1.000000e+00 : f32
    %684 = vector.broadcast %cst_105 : f32 to vector<8x32xf32>
    %685 = arith.addf %684, %683 : vector<8x32xf32>
    %686 = arith.divf %684, %685 : vector<8x32xf32>
    %687 = vector.extract_strided_slice %680 {offsets = [0, 32], sizes = [8, 32], strides = [1, 1]} : vector<8x128xf32> to vector<8x32xf32>
    %688 = arith.negf %687 : vector<8x32xf32>
    %689 = math.exp %688 : vector<8x32xf32>
    %cst_106 = arith.constant 1.000000e+00 : f32
    %690 = vector.broadcast %cst_106 : f32 to vector<8x32xf32>
    %691 = arith.addf %690, %689 : vector<8x32xf32>
    %692 = arith.divf %690, %691 : vector<8x32xf32>
    %693 = vector.extract_strided_slice %680 {offsets = [0, 64], sizes = [8, 32], strides = [1, 1]} : vector<8x128xf32> to vector<8x32xf32>
    %694 = math.tanh %693 : vector<8x32xf32>
    %695 = vector.extract_strided_slice %680 {offsets = [0, 96], sizes = [8, 32], strides = [1, 1]} : vector<8x128xf32> to vector<8x32xf32>
    %696 = arith.negf %695 : vector<8x32xf32>
    %697 = math.exp %696 : vector<8x32xf32>
    %cst_107 = arith.constant 1.000000e+00 : f32
    %698 = vector.broadcast %cst_107 : f32 to vector<8x32xf32>
    %699 = arith.addf %698, %697 : vector<8x32xf32>
    %700 = arith.divf %698, %699 : vector<8x32xf32>
    %701 = arith.mulf %692, %646 : vector<8x32xf32>
    %702 = arith.mulf %686, %694 : vector<8x32xf32>
    %703 = arith.addf %701, %702 : vector<8x32xf32>
    %704 = math.tanh %703 : vector<8x32xf32>
    %705 = arith.mulf %700, %704 : vector<8x32xf32>
    %706 = tpu.concatenate %705, %677 in 1 : vector<8x32xf32>, vector<8x32xf32> -> vector<8x64xf32>
    %707 = arith.truncf %706 : vector<8x64xf32> to vector<8x64xbf16>
    %cst_108 = arith.constant dense<0.000000e+00> : vector<8x128xf32>
    %708 = tpu.matmul %707, %5, %cst_108 {dimension_numbers = #tpu.dot_dimension_numbers<[1], [0], [0], [1], [0, 0, 1, 1], [], []>} : vector<8x64xbf16>, vector<64x128xbf16>, vector<8x128xf32> -> vector<8x128xf32>
    %709 = arith.addf %708, %15 : vector<8x128xf32>
    %710 = vector.extract_strided_slice %709 {offsets = [0, 0], sizes = [8, 32], strides = [1, 1]} : vector<8x128xf32> to vector<8x32xf32>
    %711 = arith.negf %710 : vector<8x32xf32>
    %712 = math.exp %711 : vector<8x32xf32>
    %cst_109 = arith.constant 1.000000e+00 : f32
    %713 = vector.broadcast %cst_109 : f32 to vector<8x32xf32>
    %714 = arith.addf %713, %712 : vector<8x32xf32>
    %715 = arith.divf %713, %714 : vector<8x32xf32>
    %716 = vector.extract_strided_slice %709 {offsets = [0, 32], sizes = [8, 32], strides = [1, 1]} : vector<8x128xf32> to vector<8x32xf32>
    %717 = arith.negf %716 : vector<8x32xf32>
    %718 = math.exp %717 : vector<8x32xf32>
    %cst_110 = arith.constant 1.000000e+00 : f32
    %719 = vector.broadcast %cst_110 : f32 to vector<8x32xf32>
    %720 = arith.addf %719, %718 : vector<8x32xf32>
    %721 = arith.divf %719, %720 : vector<8x32xf32>
    %722 = vector.extract_strided_slice %709 {offsets = [0, 64], sizes = [8, 32], strides = [1, 1]} : vector<8x128xf32> to vector<8x32xf32>
    %723 = math.tanh %722 : vector<8x32xf32>
    %724 = vector.extract_strided_slice %709 {offsets = [0, 96], sizes = [8, 32], strides = [1, 1]} : vector<8x128xf32> to vector<8x32xf32>
    %725 = arith.negf %724 : vector<8x32xf32>
    %726 = math.exp %725 : vector<8x32xf32>
    %cst_111 = arith.constant 1.000000e+00 : f32
    %727 = vector.broadcast %cst_111 : f32 to vector<8x32xf32>
    %728 = arith.addf %727, %726 : vector<8x32xf32>
    %729 = arith.divf %727, %728 : vector<8x32xf32>
    %730 = arith.mulf %721, %675 : vector<8x32xf32>
    %731 = arith.mulf %715, %723 : vector<8x32xf32>
    %732 = arith.addf %730, %731 : vector<8x32xf32>
    %733 = math.tanh %732 : vector<8x32xf32>
    %734 = arith.mulf %729, %733 : vector<8x32xf32>
    %735 = tpu.concatenate %563, %620, %677, %734 in 0 : vector<8x32xf32>, vector<8x32xf32>, vector<8x32xf32>, vector<8x32xf32> -> vector<32x32xf32>
    %736 = arith.truncf %735 : vector<32x32xf32> to vector<32x32xbf16>
    %cst_112 = arith.constant dense<0.000000e+00> : vector<32x128xf32>
    %737 = tpu.matmul %736, %6, %cst_112 {dimension_numbers = #tpu.dot_dimension_numbers<[1], [0], [0], [1], [0, 0, 1, 1], [], []>} : vector<32x32xbf16>, vector<32x128xbf16>, vector<32x128xf32> -> vector<32x128xf32>
    %738 = arith.addf %737, %18 : vector<32x128xf32>
    %c0_113 = arith.constant 0 : index
    %c0_114 = arith.constant 0 : index
    %739 = vector.load %arg5[%c0_113, %c0_114] : memref<32x128xf32, #tpu.memory_space<vmem>>, vector<32x128xf32>
    tpu.vector_store %arg5[%c0_113, %c0_114], %738 {strides = array<i32>} : memref<32x128xf32, #tpu.memory_space<vmem>>, vector<32x128xf32>,
    return
  }
  func.func @transform_0(%arg0: i32) -> (i32, i32) {
    %c0_i32 = arith.constant 0 : i32
    %c0_i32_0 = arith.constant 0 : i32
    %c0_i32_1 = arith.constant 0 : i32
    return %c0_i32, %c0_i32_0 : i32, i32
  }
  func.func @transform_1(%arg0: i32) -> (i32, i32) {
    %c0_i32 = arith.constant 0 : i32
    %c0_i32_0 = arith.constant 0 : i32
    %c0_i32_1 = arith.constant 0 : i32
    return %c0_i32, %c0_i32_0 : i32, i32
  }
  func.func @transform_2(%arg0: i32) -> (i32, i32) {
    %c0_i32 = arith.constant 0 : i32
    %c0_i32_0 = arith.constant 0 : i32
    %c0_i32_1 = arith.constant 0 : i32
    return %c0_i32, %c0_i32_0 : i32, i32
  }
  func.func @transform_3(%arg0: i32) -> (i32, i32) {
    %c0_i32 = arith.constant 0 : i32
    %c0_i32_0 = arith.constant 0 : i32
    %c0_i32_1 = arith.constant 0 : i32
    return %c0_i32, %c0_i32_0 : i32, i32
  }
  func.func @transform_4(%arg0: i32) -> (i32, i32) {
    %c0_i32 = arith.constant 0 : i32
    %c0_i32_0 = arith.constant 0 : i32
    %c0_i32_1 = arith.constant 0 : i32
    return %c0_i32, %c0_i32_0 : i32, i32
  }
}

</mosaic_0001>

<llo_original>
// kernel: autoencoder_forward.1
$region0: #{autoencoder_forward.1}
  #allocation0 [shape = 'u32[]', space=smem, size = 0x4, offset = 0x4, fixed_abs, tag = 'smem constant byte address 0x4 - core index']
  #allocation1 [shape = 'u32[144,128]{1,0:T(1,128)}', space=vmem, size = 0x12000, scoped, tag = 'internal scratch']
  %s0 = inlined_call_operand.vmem [shape: f32[64,16], index: 0, kind: input, shape index: {}]
  %s1 = inlined_call_operand.hbm [shape: bf16[272,128], index: 1, kind: input, shape index: {}]
  %s2 = inlined_call_operand.vmem [shape: f32[8,128], index: 2, kind: input, shape index: {}]
  %s3 = inlined_call_operand.vmem [shape: f32[8,32], index: 3, kind: output, shape index: {0}]
  %s4 = inlined_call_operand.vmem [shape: f32[32,128], index: 4, kind: output, shape index: {1}]
  %5 = xla_tuple %s3, %s4
  %s6 = sld [smem:[#allocation0]]
  $region34: #{autoencoder_forward.1} parent=0
    _
  %s8 = ssub.s32 1, %s6
  %s9 = scalar_select 0, %s8, %s6
  $region1: #{autoencoder_forward.1} parent=0
    #allocation2 [shape = 'u8[69632]{0}', space=vmem, size = 0x11000, scoped, tag = 'input window, operand 1, single buffered']
    #allocation3 [shape = 's32[1]{0}', space=sflag, size = 0x4, scoped, tag = 'scoped memory for autoencoder_forward.1']
    %10 = vsyncpa [#allocation3], 0
    // Predicated region
    $region2: #{autoencoder_forward.1} parent=1 // pred_check
      _
    $region3: #{autoencoder_forward.1} parent=1 // pred_check_branch
      %12 = sbr.rel (0) target = $region5
    $region4: #{autoencoder_forward.1} parent=1 // pred_region
      _
    $region5: #{autoencoder_forward.1} parent=1 // pred_fallthru
      _
    // Predicated region
    $region6: #{autoencoder_forward.1} parent=1 // pred_check
      _
    $region7: #{autoencoder_forward.1} parent=1 // pred_check_branch
      %14 = sbr.rel (0) target = $region9
    $region8: #{autoencoder_forward.1} parent=1 // pred_region
      %s16 = ssub.s32 2176, 2176
      %17 = vsyncadd [#allocation3], %s16
      %s18 = sshll.u32 [#allocation2], 4
      %s19 = int_to_ptr.vmem [resolvable:$true] %s18
      %24 = dma.hbm_to_vmem [thread:$0]  %s1, 2176, %s19, [#allocation3], 64, 64, 4
    $region9: #{autoencoder_forward.1} parent=1 // pred_fallthru
      _
    // Predicated region
    $region10: #{autoencoder_forward.1} parent=1 // pred_check
      _
    $region11: #{autoencoder_forward.1} parent=1 // pred_check_branch
      %26 = sbr.rel (0) target = $region13
    $region12: #{autoencoder_forward.1} parent=1 // pred_region
      _
    $region13: #{autoencoder_forward.1} parent=1 // pred_fallthru
      _
    // Predicated region
    $region14: #{autoencoder_forward.1} parent=1 // pred_check
      _
    $region15: #{autoencoder_forward.1} parent=1 // pred_check_branch
      %28 = sbr.rel (0) target = $region17
    $region16: #{autoencoder_forward.1} parent=1 // pred_region
      %29 = dma.done [#allocation3], 2176
    $region17: #{autoencoder_forward.1} parent=1 // pred_fallthru
      _
    %v31 = vld [vmem:[#allocation2] sm:$0xf]
    %v32 = vld [vmem:[#allocation2 + $0x4] sm:$0xf]
    %v33 = vld [vmem:[#allocation2 + $0x8] sm:$0xf]
    %v34 = vld [vmem:[#allocation2 + $0xc] sm:$0xf]
    %v35 = vld [vmem:[#allocation2 + $0x10] sm:$0xf]
    %v36 = vld [vmem:[#allocation2 + $0x14] sm:$0xf]
    %v37 = vld [vmem:[#allocation2 + $0x18] sm:$0xf]
    %v38 = vld [vmem:[#allocation2 + $0x1c] sm:$0xf]
    %v39 = vld [vmem:[#allocation2 + $0x20] sm:$0xf]
    %v40 = vld [vmem:[#allocation2 + $0x24] sm:$0xf]
    %v41 = vld [vmem:[#allocation2 + $0x28] sm:$0xf]
    %v42 = vld [vmem:[#allocation2 + $0x2c] sm:$0xf]
    %v43 = vld [vmem:[#allocation2 + $0x30] sm:$0xf]
    %v44 = vld [vmem:[#allocation2 + $0x34] sm:$0xf]
    %v45 = vld [vmem:[#allocation2 + $0x38] sm:$0xf]
    %v46 = vld [vmem:[#allocation2 + $0x3c] sm:$0xf]
    %v47 = vld [vmem:[#allocation2 + $0x40] sm:$0xf]
    %v48 = vld [vmem:[#allocation2 + $0x44] sm:$0xf]
    %v49 = vld [vmem:[#allocation2 + $0x48] sm:$0xf]
    %v50 = vld [vmem:[#allocation2 + $0x4c] sm:$0xf]
    %v51 = vld [vmem:[#allocation2 + $0x50] sm:$0xf]
    %v52 = vld [vmem:[#allocation2 + $0x54] sm:$0xf]
    %v53 = vld [vmem:[#allocation2 + $0x58] sm:$0xf]
    %v54 = vld [vmem:[#allocation2 + $0x5c] sm:$0xf]
    %v55 = vld [vmem:[#allocation2 + $0x60] sm:$0xf]
    %v56 = vld [vmem:[#allocation2 + $0x64] sm:$0xf]
    %v57 = vld [vmem:[#allocation2 + $0x68] sm:$0xf]
    %v58 = vld [vmem:[#allocation2 + $0x6c] sm:$0xf]
    %v59 = vld [vmem:[#allocation2 + $0x70] sm:$0xf]
    %v60 = vld [vmem:[#allocation2 + $0x74] sm:$0xf]
    %v61 = vld [vmem:[#allocation2 + $0x78] sm:$0xf]
    %v62 = vld [vmem:[#allocation2 + $0x7c] sm:$0xf]
    %v63 = vld [vmem:[#allocation2 + $0x80] sm:$0xf]
    %v64 = vld [vmem:[#allocation2 + $0x84] sm:$0xf]
    %v65 = vld [vmem:[%s2] sm:$0xff]
    %v66 = vlaneseq
    %v67 = vshrl.u32 %v66, 7
    %v68 = vsub.s32 1, %v67
    %v69 = vrot.slane %v65, %v68
    %v70 = vlaneseq
    %v71 = vshrl.u32 %v70, 7
    %v72 = vsub.s32 3, %v71
    %v73 = vrot.slane %v65, %v72
    %v74 = vlaneseq
    %v75 = vshrl.u32 %v74, 7
    %v76 = vsub.s32 4, %v75
    %v77 = vrot.slane %v65, %v76
    %v78 = vld [vmem:[%s0] sm:$0xff]
    %v79 = vld [vmem:[%s0 + $0x8] sm:$0xff]
    %v80 = vld [vmem:[%s0 + $0x10] sm:$0xff]
    %v81 = vld [vmem:[%s0 + $0x18] sm:$0xff]
    %v82 = vld [vmem:[%s0 + $0x20] sm:$0xff]
    %v83 = vld [vmem:[%s0 + $0x28] sm:$0xff]
    %v84 = vld [vmem:[%s0 + $0x30] sm:$0xff]
    %v85 = vld [vmem:[%s0 + $0x38] sm:$0xff]
    %v86 = vpack.c.bf16 %v79, %v78
    %v87 = vpack.c.bf16 %v81, %v80
    %v88 = vpack.c.bf16 %v83, %v82
    %v89 = vpack.c.bf16 %v85, %v84
    %v90 = vlaneseq
    %v91 = vshrl.u32 %v90, 7
    %v92 = vsub.s32 0, %v91
    %v93 = vrot.slane %v65, %v92
    %v96 = vunpack.c.l.b16 %v31
    %v97 = vunpack.c.l.b16 %v32
    %v98 = vpack.c.b16 %v97, %v96
    %vm100 = vcmask 130048
    %v102 = vsel %vm100, %v86, 0
    %v105 = vsel %vm100, %v87, 0
    %v108 = vsel %vm100, %v88, 0
    %v111 = vsel %vm100, %v89, 0
    %113 = vmatprep.subr.bf16.mxu0 0
    %114 = vmatpush1.bf16.msra.mxu0 %v98
    %115 = vmatprep.subr.bf16.mxu0 0
    %116 = vmatpush1.bf16.msra.mxu0 0
    %117 = vmatprep.subr.bf16.mxu0 0
    %118 = vmatpush1.bf16.msra.mxu0 0
    %119 = vmatprep.subr.bf16.mxu0 0
    %120 = vmatpush1.bf16.msra.mxu0 0
    %121 = vmatprep.subr.bf16.mxu0 0
    %122 = vmatpush1.bf16.msra.mxu0 0
    %123 = vmatprep.subr.bf16.mxu0 0
    %124 = vmatpush1.bf16.msra.mxu0 0
    %125 = vmatprep.subr.bf16.mxu0 0
    %126 = vmatpush1.bf16.msra.mxu0 0
    %127 = vmatprep.subr.bf16.mxu0 0
    %128 = vmatpush1.bf16.msra.mxu0 0
    %129 = vmatprep.subr.bf16.mxu0 0
    %130 = vmatpush1.bf16.msra.mxu0 0
    %131 = vmatprep.subr.bf16.mxu0 0
    %132 = vmatpush1.bf16.msra.mxu0 0
    %133 = vmatprep.subr.bf16.mxu0 0
    %134 = vmatpush1.bf16.msra.mxu0 0
    %135 = vmatprep.subr.bf16.mxu0 0
    %136 = vmatpush1.bf16.msra.mxu0 0
    %137 = vmatprep.subr.bf16.mxu0 0
    %138 = vmatpush1.bf16.msra.mxu0 0
    %139 = vmatprep.subr.bf16.mxu0 0
    %140 = vmatpush1.bf16.msra.mxu0 0
    %141 = vmatprep.subr.bf16.mxu0 0
    %142 = vmatpush1.bf16.msra.mxu0 0
    %143 = vmatprep.subr.bf16.mxu0 0
    %144 = vmatpush1.bf16.msra.mxu0 0
    %145 = vmatprep.mubr.bf16.mxu0 0
    %146 = vmatmul.mubr.bf16.gmra.mrb[0].mxu0 %v102
    %v147 = vpop.f32.mrb[0].mxu0
    %v148 = vadd.f32 %v93, %v147
    %v149 = vpop.f32.mrb[0].mxu0
    %v150 = vpop.f32.mrb[0].mxu0
    %v151 = vadd.f32 %v93, %v150
    %v152 = vpop.f32.mrb[0].mxu0
    %153 = vmatprep.mubr.bf16.mxu0 0
    %154 = vmatmul.mubr.bf16.gmra.mrb[0].mxu0 %v105
    %v155 = vpop.f32.mrb[0].mxu0
    %v156 = vadd.f32 %v93, %v155
    %v157 = vpop.f32.mrb[0].mxu0
    %v158 = vpop.f32.mrb[0].mxu0
    %v159 = vadd.f32 %v93, %v158
    %v160 = vpop.f32.mrb[0].mxu0
    %161 = vmatprep.mubr.bf16.mxu0 0
    %162 = vmatmul.mubr.bf16.gmra.mrb[0].mxu0 %v108
    %v163 = vpop.f32.mrb[0].mxu0
    %v164 = vadd.f32 %v93, %v163
    %v165 = vpop.f32.mrb[0].mxu0
    %v166 = vpop.f32.mrb[0].mxu0
    %v167 = vadd.f32 %v93, %v166
    %v168 = vpop.f32.mrb[0].mxu0
    %169 = vmatprep.mubr.bf16.mxu0 0
    %170 = vmatmul.mubr.bf16.gmra.mrb[0].mxu0 %v111
    %v171 = vpop.f32.mrb[0].mxu0
    %v172 = vadd.f32 %v93, %v171
    %v173 = vpop.f32.mrb[0].mxu0
    %v174 = vpop.f32.mrb[0].mxu0
    %v175 = vadd.f32 %v93, %v174
    %v176 = vpop.f32.mrb[0].mxu0
    %177 = vdwg.mxu0
    %v182 = vunpack.c.l.b16 %v33
    %v183 = vunpack.c.l.b16 %v34
    %v184 = vunpack.c.l.b16 %v35
    %v185 = vunpack.c.l.b16 %v36
    %v186 = vpack.c.b16 %v183, %v182
    %v187 = vpack.c.b16 %v185, %v184
    %vm190 = vcmask 261120
    %v192 = vsel %vm190, 0, 0
    %194 = vmatprep.subr.bf16.mxu0 0
    %195 = vmatpush1.bf16.msra.mxu0 %v186
    %196 = vmatprep.subr.bf16.mxu0 0
    %197 = vmatpush1.bf16.msra.mxu0 %v187
    %198 = vmatprep.subr.bf16.mxu0 0
    %199 = vmatpush1.bf16.msra.mxu0 0
    %200 = vmatprep.subr.bf16.mxu0 0
    %201 = vmatpush1.bf16.msra.mxu0 0
    %202 = vmatprep.subr.bf16.mxu0 0
    %203 = vmatpush1.bf16.msra.mxu0 0
    %204 = vmatprep.subr.bf16.mxu0 0
    %205 = vmatpush1.bf16.msra.mxu0 0
    %206 = vmatprep.subr.bf16.mxu0 0
    %207 = vmatpush1.bf16.msra.mxu0 0
    %208 = vmatprep.subr.bf16.mxu0 0
    %209 = vmatpush1.bf16.msra.mxu0 0
    %210 = vmatprep.subr.bf16.mxu0 0
    %211 = vmatpush1.bf16.msra.mxu0 0
    %212 = vmatprep.subr.bf16.mxu0 0
    %213 = vmatpush1.bf16.msra.mxu0 0
    %214 = vmatprep.subr.bf16.mxu0 0
    %215 = vmatpush1.bf16.msra.mxu0 0
    %216 = vmatprep.subr.bf16.mxu0 0
    %217 = vmatpush1.bf16.msra.mxu0 0
    %218 = vmatprep.subr.bf16.mxu0 0
    %219 = vmatpush1.bf16.msra.mxu0 0
    %220 = vmatprep.subr.bf16.mxu0 0
    %221 = vmatpush1.bf16.msra.mxu0 0
    %222 = vmatprep.subr.bf16.mxu0 0
    %223 = vmatpush1.bf16.msra.mxu0 0
    %224 = vmatprep.subr.bf16.mxu0 0
    %225 = vmatpush1.bf16.msra.mxu0 0
    %226 = vmatprep.mubr.bf16.mxu0 0
    %227 = vmatmul.mubr.bf16.gmra.mrb[0].mxu0 %v192
    %v228 = vpop.f32.mrb[0].mxu0
    %v229 = vadd.f32 0.0, %v228
    %v230 = vpop.f32.mrb[0].mxu0
    %v231 = vpop.f32.mrb[0].mxu0
    %v232 = vpop.f32.mrb[0].mxu0
    %233 = vdwg.mxu0
    %v234 = vadd.f32 %v148, %v229
    %v235 = vxor.u32 %v234, 2147483648
    %v236 = vmul.f32 %v235, 1.442695
    %v237 = vpow.pop %v236
    %v238 = vadd.f32 %v237, 1.0
    %v239 = vrcp.pop %v238
    %v240 = vmul.f32 1.0, %v239
    %v241 = vtanh.pop %v234
    %v242 = vmul.f32 %v240, 0.0
    %244 = vrot.lane.b32.xlu0 %v241, 64
    %v245 = vpop.permute.xlu0 %244
    %v247 = vmul.f32 %v240, %v245
    %249 = vrot.lane.b32.xlu0 %v247, 32
    %v250 = vpop.permute.xlu0 %249
    %v252 = vadd.f32 %v242, %v250
    %v253 = vtanh.pop %v252
    %255 = vrot.lane.b32.xlu0 %v253, 64
    %v256 = vpop.permute.xlu0 %255
    %v258 = vmul.f32 %v240, %v256
    %260 = vrot.lane.b32.xlu0 %v258, 32
    %v261 = vpop.permute.xlu0 %260
    %v263 = vsel %vm190, %v261, 0.0
    %v264 = vpack.c.bf16 %v263, %v263
    %v273 = vunpack.c.l.b16 %v37
    %v274 = vunpack.c.l.b16 %v38
    %v275 = vunpack.c.l.b16 %v39
    %v276 = vunpack.c.l.b16 %v40
    %v277 = vunpack.c.l.b16 %v41
    %v278 = vunpack.c.l.b16 %v42
    %v279 = vunpack.c.l.b16 %v43
    %v280 = vunpack.c.l.b16 %v44
    %v281 = vpack.c.b16 %v274, %v273
    %v282 = vpack.c.b16 %v276, %v275
    %v283 = vpack.c.b16 %v278, %v277
    %v284 = vpack.c.b16 %v280, %v279
    %vm289 = vcmask 523264
    %v291 = vsel %vm289, %v264, 0
    %293 = vmatprep.subr.bf16.mxu0 0
    %294 = vmatpush1.bf16.msra.mxu0 %v281
    %295 = vmatprep.subr.bf16.mxu0 0
    %296 = vmatpush1.bf16.msra.mxu0 %v282
    %297 = vmatprep.subr.bf16.mxu0 0
    %298 = vmatpush1.bf16.msra.mxu0 %v283
    %299 = vmatprep.subr.bf16.mxu0 0
    %300 = vmatpush1.bf16.msra.mxu0 %v284
    %301 = vmatprep.subr.bf16.mxu0 0
    %302 = vmatpush1.bf16.msra.mxu0 0
    %303 = vmatprep.subr.bf16.mxu0 0
    %304 = vmatpush1.bf16.msra.mxu0 0
    %305 = vmatprep.subr.bf16.mxu0 0
    %306 = vmatpush1.bf16.msra.mxu0 0
    %307 = vmatprep.subr.bf16.mxu0 0
    %308 = vmatpush1.bf16.msra.mxu0 0
    %309 = vmatprep.subr.bf16.mxu0 0
    %310 = vmatpush1.bf16.msra.mxu0 0
    %311 = vmatprep.subr.bf16.mxu0 0
    %312 = vmatpush1.bf16.msra.mxu0 0
    %313 = vmatprep.subr.bf16.mxu0 0
    %314 = vmatpush1.bf16.msra.mxu0 0
    %315 = vmatprep.subr.bf16.mxu0 0
    %316 = vmatpush1.bf16.msra.mxu0 0
    %317 = vmatprep.subr.bf16.mxu0 0
    %318 = vmatpush1.bf16.msra.mxu0 0
    %319 = vmatprep.subr.bf16.mxu0 0
    %320 = vmatpush1.bf16.msra.mxu0 0
    %321 = vmatprep.subr.bf16.mxu0 0
    %322 = vmatpush1.bf16.msra.mxu0 0
    %323 = vmatprep.subr.bf16.mxu0 0
    %324 = vmatpush1.bf16.msra.mxu0 0
    %325 = vmatprep.mubr.bf16.mxu0 0
    %326 = vmatmul.mubr.bf16.gmra.mrb[0].mxu0 %v291
    %v327 = vpop.f32.mrb[0].mxu0
    %v328 = vadd.f32 %v69, %v327
    %v329 = vpop.f32.mrb[0].mxu0
    %v330 = vpop.f32.mrb[0].mxu0
    %v331 = vpop.f32.mrb[0].mxu0
    %332 = vdwg.mxu0
    %v333 = vxor.u32 %v328, 2147483648
    %v334 = vmul.f32 %v333, 1.442695
    %v335 = vpow.pop %v334
    %v336 = vadd.f32 %v335, 1.0
    %v337 = vrcp.pop %v336
    %v338 = vmul.f32 1.0, %v337
    %v339 = vtanh.pop %v328
    %v340 = vmul.f32 %v338, 0.0
    %342 = vrot.lane.b32.xlu0 %v339, 64
    %v343 = vpop.permute.xlu0 %342
    %v345 = vmul.f32 %v338, %v343
    %347 = vrot.lane.b32.xlu0 %v345, 32
    %v348 = vpop.permute.xlu0 %347
    %v350 = vadd.f32 %v340, %v348
    %v351 = vtanh.pop %v350
    %353 = vrot.lane.b32.xlu0 %v351, 64
    %v354 = vpop.permute.xlu0 %353
    %v356 = vmul.f32 %v338, %v354
    %v357 = vpack.c.bf16 %v258, %v258
    %359 = vrot.lane.b32.xlu0 %v357, 32
    %v360 = vpop.permute.xlu0 %359
    %v362 = vsel %vm190, %v360, 0
    %364 = vmatprep.subr.bf16.mxu0 0
    %365 = vmatpush1.bf16.msra.mxu0 %v186
    %366 = vmatprep.subr.bf16.mxu0 0
    %367 = vmatpush1.bf16.msra.mxu0 %v187
    %368 = vmatprep.subr.bf16.mxu0 0
    %369 = vmatpush1.bf16.msra.mxu0 0
    %370 = vmatprep.subr.bf16.mxu0 0
    %371 = vmatpush1.bf16.msra.mxu0 0
    %372 = vmatprep.subr.bf16.mxu0 0
    %373 = vmatpush1.bf16.msra.mxu0 0
    %374 = vmatprep.subr.bf16.mxu0 0
    %375 = vmatpush1.bf16.msra.mxu0 0
    %376 = vmatprep.subr.bf16.mxu0 0
    %377 = vmatpush1.bf16.msra.mxu0 0
    %378 = vmatprep.subr.bf16.mxu0 0
    %379 = vmatpush1.bf16.msra.mxu0 0
    %380 = vmatprep.subr.bf16.mxu0 0
    %381 = vmatpush1.bf16.msra.mxu0 0
    %382 = vmatprep.subr.bf16.mxu0 0
    %383 = vmatpush1.bf16.msra.mxu0 0
    %384 = vmatprep.subr.bf16.mxu0 0
    %385 = vmatpush1.bf16.msra.mxu0 0
    %386 = vmatprep.subr.bf16.mxu0 0
    %387 = vmatpush1.bf16.msra.mxu0 0
    %388 = vmatprep.subr.bf16.mxu0 0
    %389 = vmatpush1.bf16.msra.mxu0 0
    %390 = vmatprep.subr.bf16.mxu0 0
    %391 = vmatpush1.bf16.msra.mxu0 0
    %392 = vmatprep.subr.bf16.mxu0 0
    %393 = vmatpush1.bf16.msra.mxu0 0
    %394 = vmatprep.subr.bf16.mxu0 0
    %395 = vmatpush1.bf16.msra.mxu0 0
    %396 = vmatprep.mubr.bf16.mxu0 0
    %397 = vmatmul.mubr.bf16.gmra.mrb[0].mxu0 %v362
    %v398 = vpop.f32.mrb[0].mxu0
    %v399 = vadd.f32 0.0, %v398
    %v400 = vpop.f32.mrb[0].mxu0
    %v401 = vpop.f32.mrb[0].mxu0
    %v402 = vpop.f32.mrb[0].mxu0
    %403 = vdwg.mxu0
    %v404 = vadd.f32 %v151, %v399
    %v405 = vxor.u32 %v404, 2147483648
    %v406 = vmul.f32 %v405, 1.442695
    %v407 = vpow.pop %v406
    %v408 = vadd.f32 %v407, 1.0
    %v409 = vrcp.pop %v408
    %v410 = vmul.f32 1.0, %v409
    %v411 = vtanh.pop %v404
    %v412 = vmul.f32 %v410, %v252
    %414 = vrot.lane.b32.xlu0 %v411, 64
    %v415 = vpop.permute.xlu0 %414
    %v417 = vmul.f32 %v410, %v415
    %419 = vrot.lane.b32.xlu0 %v417, 32
    %v420 = vpop.permute.xlu0 %419
    %v422 = vadd.f32 %v412, %v420
    %v423 = vtanh.pop %v422
    %425 = vrot.lane.b32.xlu0 %v423, 64
    %v426 = vpop.permute.xlu0 %425
    %v428 = vmul.f32 %v410, %v426
    %430 = vrot.lane.b32.xlu0 %v428, 32
    %v431 = vpop.permute.xlu0 %430
    %434 = vrot.lane.b32.xlu0 %v356, 64
    %v435 = vpop.permute.xlu0 %434
    %v437 = vsel %vm190, %v431, %v435
    %v438 = vpack.c.bf16 %v437, %v437
    %v440 = vsel %vm289, %v438, 0
    %442 = vmatprep.subr.bf16.mxu0 0
    %443 = vmatpush1.bf16.msra.mxu0 %v281
    %444 = vmatprep.subr.bf16.mxu0 0
    %445 = vmatpush1.bf16.msra.mxu0 %v282
    %446 = vmatprep.subr.bf16.mxu0 0
    %447 = vmatpush1.bf16.msra.mxu0 %v283
    %448 = vmatprep.subr.bf16.mxu0 0
    %449 = vmatpush1.bf16.msra.mxu0 %v284
    %450 = vmatprep.subr.bf16.mxu0 0
    %451 = vmatpush1.bf16.msra.mxu0 0
    %452 = vmatprep.subr.bf16.mxu0 0
    %453 = vmatpush1.bf16.msra.mxu0 0
    %454 = vmatprep.subr.bf16.mxu0 0
    %455 = vmatpush1.bf16.msra.mxu0 0
    %456 = vmatprep.subr.bf16.mxu0 0
    %457 = vmatpush1.bf16.msra.mxu0 0
    %458 = vmatprep.subr.bf16.mxu0 0
    %459 = vmatpush1.bf16.msra.mxu0 0
    %460 = vmatprep.subr.bf16.mxu0 0
    %461 = vmatpush1.bf16.msra.mxu0 0
    %462 = vmatprep.subr.bf16.mxu0 0
    %463 = vmatpush1.bf16.msra.mxu0 0
    %464 = vmatprep.subr.bf16.mxu0 0
    %465 = vmatpush1.bf16.msra.mxu0 0
    %466 = vmatprep.subr.bf16.mxu0 0
    %467 = vmatpush1.bf16.msra.mxu0 0
    %468 = vmatprep.subr.bf16.mxu0 0
    %469 = vmatpush1.bf16.msra.mxu0 0
    %470 = vmatprep.subr.bf16.mxu0 0
    %471 = vmatpush1.bf16.msra.mxu0 0
    %472 = vmatprep.subr.bf16.mxu0 0
    %473 = vmatpush1.bf16.msra.mxu0 0
    %474 = vmatprep.mubr.bf16.mxu0 0
    %475 = vmatmul.mubr.bf16.gmra.mrb[0].mxu0 %v440
    %v476 = vpop.f32.mrb[0].mxu0
    %v477 = vadd.f32 %v69, %v476
    %v478 = vpop.f32.mrb[0].mxu0
    %v479 = vpop.f32.mrb[0].mxu0
    %v480 = vpop.f32.mrb[0].mxu0
    %481 = vdwg.mxu0
    %v482 = vxor.u32 %v477, 2147483648
    %v483 = vmul.f32 %v482, 1.442695
    %v484 = vpow.pop %v483
    %v485 = vadd.f32 %v484, 1.0
    %v486 = vrcp.pop %v485
    %v487 = vmul.f32 1.0, %v486
    %v488 = vtanh.pop %v477
    %v489 = vmul.f32 %v487, %v350
    %491 = vrot.lane.b32.xlu0 %v488, 64
    %v492 = vpop.permute.xlu0 %491
    %v494 = vmul.f32 %v487, %v492
    %496 = vrot.lane.b32.xlu0 %v494, 32
    %v497 = vpop.permute.xlu0 %496
    %v499 = vadd.f32 %v489, %v497
    %v500 = vtanh.pop %v499
    %502 = vrot.lane.b32.xlu0 %v500, 64
    %v503 = vpop.permute.xlu0 %502
    %v505 = vmul.f32 %v487, %v503
    %v506 = vpack.c.bf16 %v428, %v428
    %508 = vrot.lane.b32.xlu0 %v506, 32
    %v509 = vpop.permute.xlu0 %508
    %v511 = vsel %vm190, %v509, 0
    %513 = vmatprep.subr.bf16.mxu0 0
    %514 = vmatpush1.bf16.msra.mxu0 %v186
    %515 = vmatprep.subr.bf16.mxu0 0
    %516 = vmatpush1.bf16.msra.mxu0 %v187
    %517 = vmatprep.subr.bf16.mxu0 0
    %518 = vmatpush1.bf16.msra.mxu0 0
    %519 = vmatprep.subr.bf16.mxu0 0
    %520 = vmatpush1.bf16.msra.mxu0 0
    %521 = vmatprep.subr.bf16.mxu0 0
    %522 = vmatpush1.bf16.msra.mxu0 0
    %523 = vmatprep.subr.bf16.mxu0 0
    %524 = vmatpush1.bf16.msra.mxu0 0
    %525 = vmatprep.subr.bf16.mxu0 0
    %526 = vmatpush1.bf16.msra.mxu0 0
    %527 = vmatprep.subr.bf16.mxu0 0
    %528 = vmatpush1.bf16.msra.mxu0 0
    %529 = vmatprep.subr.bf16.mxu0 0
    %530 = vmatpush1.bf16.msra.mxu0 0
    %531 = vmatprep.subr.bf16.mxu0 0
    %532 = vmatpush1.bf16.msra.mxu0 0
    %533 = vmatprep.subr.bf16.mxu0 0
    %534 = vmatpush1.bf16.msra.mxu0 0
    %535 = vmatprep.subr.bf16.mxu0 0
    %536 = vmatpush1.bf16.msra.mxu0 0
    %537 = vmatprep.subr.bf16.mxu0 0
    %538 = vmatpush1.bf16.msra.mxu0 0
    %539 = vmatprep.subr.bf16.mxu0 0
    %540 = vmatpush1.bf16.msra.mxu0 0
    %541 = vmatprep.subr.bf16.mxu0 0
    %542 = vmatpush1.bf16.msra.mxu0 0
    %543 = vmatprep.subr.bf16.mxu0 0
    %544 = vmatpush1.bf16.msra.mxu0 0
    %545 = vmatprep.mubr.bf16.mxu0 0
    %546 = vmatmul.mubr.bf16.gmra.mrb[0].mxu0 %v511
    %v547 = vpop.f32.mrb[0].mxu0
    %v548 = vadd.f32 0.0, %v547
    %v549 = vpop.f32.mrb[0].mxu0
    %v550 = vpop.f32.mrb[0].mxu0
    %v551 = vpop.f32.mrb[0].mxu0
    %552 = vdwg.mxu0
    %v553 = vadd.f32 %v156, %v548
    %v554 = vxor.u32 %v553, 2147483648
    %v555 = vmul.f32 %v554, 1.442695
    %v556 = vpow.pop %v555
    %v557 = vadd.f32 %v556, 1.0
    %v558 = vrcp.pop %v557
    %v559 = vmul.f32 1.0, %v558
    %v560 = vtanh.pop %v553
    %v561 = vmul.f32 %v559, %v422
    %563 = vrot.lane.b32.xlu0 %v560, 64
    %v564 = vpop.permute.xlu0 %563
    %v566 = vmul.f32 %v559, %v564
    %568 = vrot.lane.b32.xlu0 %v566, 32
    %v569 = vpop.permute.xlu0 %568
    %v571 = vadd.f32 %v561, %v569
    %v572 = vtanh.pop %v571
    %574 = vrot.lane.b32.xlu0 %v572, 64
    %v575 = vpop.permute.xlu0 %574
    %v577 = vmul.f32 %v559, %v575
    %579 = vrot.lane.b32.xlu0 %v577, 32
    %v580 = vpop.permute.xlu0 %579
    %583 = vrot.lane.b32.xlu0 %v505, 64
    %v584 = vpop.permute.xlu0 %583
    %v586 = vsel %vm190, %v580, %v584
    %v587 = vpack.c.bf16 %v586, %v586
    %v589 = vsel %vm289, %v587, 0
    %591 = vmatprep.subr.bf16.mxu0 0
    %592 = vmatpush1.bf16.msra.mxu0 %v281
    %593 = vmatprep.subr.bf16.mxu0 0
    %594 = vmatpush1.bf16.msra.mxu0 %v282
    %595 = vmatprep.subr.bf16.mxu0 0
    %596 = vmatpush1.bf16.msra.mxu0 %v283
    %597 = vmatprep.subr.bf16.mxu0 0
    %598 = vmatpush1.bf16.msra.mxu0 %v284
    %599 = vmatprep.subr.bf16.mxu0 0
    %600 = vmatpush1.bf16.msra.mxu0 0
    %601 = vmatprep.subr.bf16.mxu0 0
    %602 = vmatpush1.bf16.msra.mxu0 0
    %603 = vmatprep.subr.bf16.mxu0 0
    %604 = vmatpush1.bf16.msra.mxu0 0
    %605 = vmatprep.subr.bf16.mxu0 0
    %606 = vmatpush1.bf16.msra.mxu0 0
    %607 = vmatprep.subr.bf16.mxu0 0
    %608 = vmatpush1.bf16.msra.mxu0 0
    %609 = vmatprep.subr.bf16.mxu0 0
    %610 = vmatpush1.bf16.msra.mxu0 0
    %611 = vmatprep.subr.bf16.mxu0 0
    %612 = vmatpush1.bf16.msra.mxu0 0
    %613 = vmatprep.subr.bf16.mxu0 0
    %614 = vmatpush1.bf16.msra.mxu0 0
    %615 = vmatprep.subr.bf16.mxu0 0
    %616 = vmatpush1.bf16.msra.mxu0 0
    %617 = vmatprep.subr.bf16.mxu0 0
    %618 = vmatpush1.bf16.msra.mxu0 0
    %619 = vmatprep.subr.bf16.mxu0 0
    %620 = vmatpush1.bf16.msra.mxu0 0
    %621 = vmatprep.subr.bf16.mxu0 0
    %622 = vmatpush1.bf16.msra.mxu0 0
    %623 = vmatprep.mubr.bf16.mxu0 0
    %624 = vmatmul.mubr.bf16.gmra.mrb[0].mxu0 %v589
    %v625 = vpop.f32.mrb[0].mxu0
    %v626 = vadd.f32 %v69, %v625
    %v627 = vpop.f32.mrb[0].mxu0
    %v628 = vpop.f32.mrb[0].mxu0
    %v629 = vpop.f32.mrb[0].mxu0
    %630 = vdwg.mxu0
    %v631 = vxor.u32 %v626, 2147483648
    %v632 = vmul.f32 %v631, 1.442695
    %v633 = vpow.pop %v632
    %v634 = vadd.f32 %v633, 1.0
    %v635 = vrcp.pop %v634
    %v636 = vmul.f32 1.0, %v635
    %v637 = vtanh.pop %v626
    %v638 = vmul.f32 %v636, %v499
    %640 = vrot.lane.b32.xlu0 %v637, 64
    %v641 = vpop.permute.xlu0 %640
    %v643 = vmul.f32 %v636, %v641
    %645 = vrot.lane.b32.xlu0 %v643, 32
    %v646 = vpop.permute.xlu0 %645
    %v648 = vadd.f32 %v638, %v646
    %v649 = vtanh.pop %v648
    %651 = vrot.lane.b32.xlu0 %v649, 64
    %v652 = vpop.permute.xlu0 %651
    %v654 = vmul.f32 %v636, %v652
    %v655 = vpack.c.bf16 %v577, %v577
    %657 = vrot.lane.b32.xlu0 %v655, 32
    %v658 = vpop.permute.xlu0 %657
    %v660 = vsel %vm190, %v658, 0
    %662 = vmatprep.subr.bf16.mxu0 0
    %663 = vmatpush1.bf16.msra.mxu0 %v186
    %664 = vmatprep.subr.bf16.mxu0 0
    %665 = vmatpush1.bf16.msra.mxu0 %v187
    %666 = vmatprep.subr.bf16.mxu0 0
    %667 = vmatpush1.bf16.msra.mxu0 0
    %668 = vmatprep.subr.bf16.mxu0 0
    %669 = vmatpush1.bf16.msra.mxu0 0
    %670 = vmatprep.subr.bf16.mxu0 0
    %671 = vmatpush1.bf16.msra.mxu0 0
    %672 = vmatprep.subr.bf16.mxu0 0
    %673 = vmatpush1.bf16.msra.mxu0 0
    %674 = vmatprep.subr.bf16.mxu0 0
    %675 = vmatpush1.bf16.msra.mxu0 0
    %676 = vmatprep.subr.bf16.mxu0 0
    %677 = vmatpush1.bf16.msra.mxu0 0
    %678 = vmatprep.subr.bf16.mxu0 0
    %679 = vmatpush1.bf16.msra.mxu0 0
    %680 = vmatprep.subr.bf16.mxu0 0
    %681 = vmatpush1.bf16.msra.mxu0 0
    %682 = vmatprep.subr.bf16.mxu0 0
    %683 = vmatpush1.bf16.msra.mxu0 0
    %684 = vmatprep.subr.bf16.mxu0 0
    %685 = vmatpush1.bf16.msra.mxu0 0
    %686 = vmatprep.subr.bf16.mxu0 0
    %687 = vmatpush1.bf16.msra.mxu0 0
    %688 = vmatprep.subr.bf16.mxu0 0
    %689 = vmatpush1.bf16.msra.mxu0 0
    %690 = vmatprep.subr.bf16.mxu0 0
    %691 = vmatpush1.bf16.msra.mxu0 0
    %692 = vmatprep.subr.bf16.mxu0 0
    %693 = vmatpush1.bf16.msra.mxu0 0
    %694 = vmatprep.mubr.bf16.mxu0 0
    %695 = vmatmul.mubr.bf16.gmra.mrb[0].mxu0 %v660
    %v696 = vpop.f32.mrb[0].mxu0
    %v697 = vadd.f32 0.0, %v696
    %v698 = vpop.f32.mrb[0].mxu0
    %v699 = vpop.f32.mrb[0].mxu0
    %v700 = vpop.f32.mrb[0].mxu0
    %701 = vdwg.mxu0
    %v702 = vadd.f32 %v159, %v697
    %v703 = vxor.u32 %v702, 2147483648
    %v704 = vmul.f32 %v703, 1.442695
    %v705 = vpow.pop %v704
    %v706 = vadd.f32 %v705, 1.0
    %v707 = vrcp.pop %v706
    %v708 = vmul.f32 1.0, %v707
    %v709 = vtanh.pop %v702
    %v710 = vmul.f32 %v708, %v571
    %712 = vrot.lane.b32.xlu0 %v709, 64
    %v713 = vpop.permute.xlu0 %712
    %v715 = vmul.f32 %v708, %v713
    %717 = vrot.lane.b32.xlu0 %v715, 32
    %v718 = vpop.permute.xlu0 %717
    %v720 = vadd.f32 %v710, %v718
    %v721 = vtanh.pop %v720
    %723 = vrot.lane.b32.xlu0 %v721, 64
    %v724 = vpop.permute.xlu0 %723
    %v726 = vmul.f32 %v708, %v724
    %728 = vrot.lane.b32.xlu0 %v726, 32
    %v729 = vpop.permute.xlu0 %728
    %732 = vrot.lane.b32.xlu0 %v654, 64
    %v733 = vpop.permute.xlu0 %732
    %v735 = vsel %vm190, %v729, %v733
    %v736 = vpack.c.bf16 %v735, %v735
    %v738 = vsel %vm289, %v736, 0
    %740 = vmatprep.subr.bf16.mxu0 0
    %741 = vmatpush1.bf16.msra.mxu0 %v281
    %742 = vmatprep.subr.bf16.mxu0 0
    %743 = vmatpush1.bf16.msra.mxu0 %v282
    %744 = vmatprep.subr.bf16.mxu0 0
    %745 = vmatpush1.bf16.msra.mxu0 %v283
    %746 = vmatprep.subr.bf16.mxu0 0
    %747 = vmatpush1.bf16.msra.mxu0 %v284
    %748 = vmatprep.subr.bf16.mxu0 0
    %749 = vmatpush1.bf16.msra.mxu0 0
    %750 = vmatprep.subr.bf16.mxu0 0
    %751 = vmatpush1.bf16.msra.mxu0 0
    %752 = vmatprep.subr.bf16.mxu0 0
    %753 = vmatpush1.bf16.msra.mxu0 0
    %754 = vmatprep.subr.bf16.mxu0 0
    %755 = vmatpush1.bf16.msra.mxu0 0
    %756 = vmatprep.subr.bf16.mxu0 0
    %757 = vmatpush1.bf16.msra.mxu0 0
    %758 = vmatprep.subr.bf16.mxu0 0
    %759 = vmatpush1.bf16.msra.mxu0 0
    %760 = vmatprep.subr.bf16.mxu0 0
    %761 = vmatpush1.bf16.msra.mxu0 0
    %762 = vmatprep.subr.bf16.mxu0 0
    %763 = vmatpush1.bf16.msra.mxu0 0
    %764 = vmatprep.subr.bf16.mxu0 0
    %765 = vmatpush1.bf16.msra.mxu0 0
    %766 = vmatprep.subr.bf16.mxu0 0
    %767 = vmatpush1.bf16.msra.mxu0 0
    %768 = vmatprep.subr.bf16.mxu0 0
    %769 = vmatpush1.bf16.msra.mxu0 0
    %770 = vmatprep.subr.bf16.mxu0 0
    %771 = vmatpush1.bf16.msra.mxu0 0
    %772 = vmatprep.mubr.bf16.mxu0 0
    %773 = vmatmul.mubr.bf16.gmra.mrb[0].mxu0 %v738
    %v774 = vpop.f32.mrb[0].mxu0
    %v775 = vadd.f32 %v69, %v774
    %v776 = vpop.f32.mrb[0].mxu0
    %v777 = vpop.f32.mrb[0].mxu0
    %v778 = vpop.f32.mrb[0].mxu0
    %779 = vdwg.mxu0
    %v780 = vxor.u32 %v775, 2147483648
    %v781 = vmul.f32 %v780, 1.442695
    %v782 = vpow.pop %v781
    %v783 = vadd.f32 %v782, 1.0
    %v784 = vrcp.pop %v783
    %v785 = vmul.f32 1.0, %v784
    %v786 = vtanh.pop %v775
    %v787 = vmul.f32 %v785, %v648
    %789 = vrot.lane.b32.xlu0 %v786, 64
    %v790 = vpop.permute.xlu0 %789
    %v792 = vmul.f32 %v785, %v790
    %794 = vrot.lane.b32.xlu0 %v792, 32
    %v795 = vpop.permute.xlu0 %794
    %v797 = vadd.f32 %v787, %v795
    %v798 = vtanh.pop %v797
    %800 = vrot.lane.b32.xlu0 %v798, 64
    %v801 = vpop.permute.xlu0 %800
    %v803 = vmul.f32 %v785, %v801
    %v804 = vpack.c.bf16 %v726, %v726
    %806 = vrot.lane.b32.xlu0 %v804, 32
    %v807 = vpop.permute.xlu0 %806
    %v809 = vsel %vm190, %v807, 0
    %811 = vmatprep.subr.bf16.mxu0 0
    %812 = vmatpush1.bf16.msra.mxu0 %v186
    %813 = vmatprep.subr.bf16.mxu0 0
    %814 = vmatpush1.bf16.msra.mxu0 %v187
    %815 = vmatprep.subr.bf16.mxu0 0
    %816 = vmatpush1.bf16.msra.mxu0 0
    %817 = vmatprep.subr.bf16.mxu0 0
    %818 = vmatpush1.bf16.msra.mxu0 0
    %819 = vmatprep.subr.bf16.mxu0 0
    %820 = vmatpush1.bf16.msra.mxu0 0
    %821 = vmatprep.subr.bf16.mxu0 0
    %822 = vmatpush1.bf16.msra.mxu0 0
    %823 = vmatprep.subr.bf16.mxu0 0
    %824 = vmatpush1.bf16.msra.mxu0 0
    %825 = vmatprep.subr.bf16.mxu0 0
    %826 = vmatpush1.bf16.msra.mxu0 0
    %827 = vmatprep.subr.bf16.mxu0 0
    %828 = vmatpush1.bf16.msra.mxu0 0
    %829 = vmatprep.subr.bf16.mxu0 0
    %830 = vmatpush1.bf16.msra.mxu0 0
    %831 = vmatprep.subr.bf16.mxu0 0
    %832 = vmatpush1.bf16.msra.mxu0 0
    %833 = vmatprep.subr.bf16.mxu0 0
    %834 = vmatpush1.bf16.msra.mxu0 0
    %835 = vmatprep.subr.bf16.mxu0 0
    %836 = vmatpush1.bf16.msra.mxu0 0
    %837 = vmatprep.subr.bf16.mxu0 0
    %838 = vmatpush1.bf16.msra.mxu0 0
    %839 = vmatprep.subr.bf16.mxu0 0
    %840 = vmatpush1.bf16.msra.mxu0 0
    %841 = vmatprep.subr.bf16.mxu0 0
    %842 = vmatpush1.bf16.msra.mxu0 0
    %843 = vmatprep.mubr.bf16.mxu0 0
    %844 = vmatmul.mubr.bf16.gmra.mrb[0].mxu0 %v809
    %v845 = vpop.f32.mrb[0].mxu0
    %v846 = vadd.f32 0.0, %v845
    %v847 = vpop.f32.mrb[0].mxu0
    %v848 = vpop.f32.mrb[0].mxu0
    %v849 = vpop.f32.mrb[0].mxu0
    %850 = vdwg.mxu0
    %v851 = vadd.f32 %v164, %v846
    %v852 = vxor.u32 %v851, 2147483648
    %v853 = vmul.f32 %v852, 1.442695
    %v854 = vpow.pop %v853
    %v855 = vadd.f32 %v854, 1.0
    %v856 = vrcp.pop %v855
    %v857 = vmul.f32 1.0, %v856
    %v858 = vtanh.pop %v851
    %v859 = vmul.f32 %v857, %v720
    %861 = vrot.lane.b32.xlu0 %v858, 64
    %v862 = vpop.permute.xlu0 %861
    %v864 = vmul.f32 %v857, %v862
    %866 = vrot.lane.b32.xlu0 %v864, 32
    %v867 = vpop.permute.xlu0 %866
    %v869 = vadd.f32 %v859, %v867
    %v870 = vtanh.pop %v869
    %872 = vrot.lane.b32.xlu0 %v870, 64
    %v873 = vpop.permute.xlu0 %872
    %v875 = vmul.f32 %v857, %v873
    %877 = vrot.lane.b32.xlu0 %v875, 32
    %v878 = vpop.permute.xlu0 %877
    %881 = vrot.lane.b32.xlu0 %v803, 64
    %v882 = vpop.permute.xlu0 %881
    %v884 = vsel %vm190, %v878, %v882
    %v885 = vpack.c.bf16 %v884, %v884
    %v887 = vsel %vm289, %v885, 0
    %889 = vmatprep.subr.bf16.mxu0 0
    %890 = vmatpush1.bf16.msra.mxu0 %v281
    %891 = vmatprep.subr.bf16.mxu0 0
    %892 = vmatpush1.bf16.msra.mxu0 %v282
    %893 = vmatprep.subr.bf16.mxu0 0
    %894 = vmatpush1.bf16.msra.mxu0 %v283
    %895 = vmatprep.subr.bf16.mxu0 0
    %896 = vmatpush1.bf16.msra.mxu0 %v284
    %897 = vmatprep.subr.bf16.mxu0 0
    %898 = vmatpush1.bf16.msra.mxu0 0
    %899 = vmatprep.subr.bf16.mxu0 0
    %900 = vmatpush1.bf16.msra.mxu0 0
    %901 = vmatprep.subr.bf16.mxu0 0
    %902 = vmatpush1.bf16.msra.mxu0 0
    %903 = vmatprep.subr.bf16.mxu0 0
    %904 = vmatpush1.bf16.msra.mxu0 0
    %905 = vmatprep.subr.bf16.mxu0 0
    %906 = vmatpush1.bf16.msra.mxu0 0
    %907 = vmatprep.subr.bf16.mxu0 0
    %908 = vmatpush1.bf16.msra.mxu0 0
    %909 = vmatprep.subr.bf16.mxu0 0
    %910 = vmatpush1.bf16.msra.mxu0 0
    %911 = vmatprep.subr.bf16.mxu0 0
    %912 = vmatpush1.bf16.msra.mxu0 0
    %913 = vmatprep.subr.bf16.mxu0 0
    %914 = vmatpush1.bf16.msra.mxu0 0
    %915 = vmatprep.subr.bf16.mxu0 0
    %916 = vmatpush1.bf16.msra.mxu0 0
    %917 = vmatprep.subr.bf16.mxu0 0
    %918 = vmatpush1.bf16.msra.mxu0 0
    %919 = vmatprep.subr.bf16.mxu0 0
    %920 = vmatpush1.bf16.msra.mxu0 0
    %921 = vmatprep.mubr.bf16.mxu0 0
    %922 = vmatmul.mubr.bf16.gmra.mrb[0].mxu0 %v887
    %v923 = vpop.f32.mrb[0].mxu0
    %v924 = vadd.f32 %v69, %v923
    %v925 = vpop.f32.mrb[0].mxu0
    %v926 = vpop.f32.mrb[0].mxu0
    %v927 = vpop.f32.mrb[0].mxu0
    %928 = vdwg.mxu0
    %v929 = vxor.u32 %v924, 2147483648
    %v930 = vmul.f32 %v929, 1.442695
    %v931 = vpow.pop %v930
    %v932 = vadd.f32 %v931, 1.0
    %v933 = vrcp.pop %v932
    %v934 = vmul.f32 1.0, %v933
    %v935 = vtanh.pop %v924
    %v936 = vmul.f32 %v934, %v797
    %938 = vrot.lane.b32.xlu0 %v935, 64
    %v939 = vpop.permute.xlu0 %938
    %v941 = vmul.f32 %v934, %v939
    %943 = vrot.lane.b32.xlu0 %v941, 32
    %v944 = vpop.permute.xlu0 %943
    %v946 = vadd.f32 %v936, %v944
    %v947 = vtanh.pop %v946
    %949 = vrot.lane.b32.xlu0 %v947, 64
    %v950 = vpop.permute.xlu0 %949
    %v952 = vmul.f32 %v934, %v950
    %v953 = vpack.c.bf16 %v875, %v875
    %955 = vrot.lane.b32.xlu0 %v953, 32
    %v956 = vpop.permute.xlu0 %955
    %v958 = vsel %vm190, %v956, 0
    %960 = vmatprep.subr.bf16.mxu0 0
    %961 = vmatpush1.bf16.msra.mxu0 %v186
    %962 = vmatprep.subr.bf16.mxu0 0
    %963 = vmatpush1.bf16.msra.mxu0 %v187
    %964 = vmatprep.subr.bf16.mxu0 0
    %965 = vmatpush1.bf16.msra.mxu0 0
    %966 = vmatprep.subr.bf16.mxu0 0
    %967 = vmatpush1.bf16.msra.mxu0 0
    %968 = vmatprep.subr.bf16.mxu0 0
    %969 = vmatpush1.bf16.msra.mxu0 0
    %970 = vmatprep.subr.bf16.mxu0 0
    %971 = vmatpush1.bf16.msra.mxu0 0
    %972 = vmatprep.subr.bf16.mxu0 0
    %973 = vmatpush1.bf16.msra.mxu0 0
    %974 = vmatprep.subr.bf16.mxu0 0
    %975 = vmatpush1.bf16.msra.mxu0 0
    %976 = vmatprep.subr.bf16.mxu0 0
    %977 = vmatpush1.bf16.msra.mxu0 0
    %978 = vmatprep.subr.bf16.mxu0 0
    %979 = vmatpush1.bf16.msra.mxu0 0
    %980 = vmatprep.subr.bf16.mxu0 0
    %981 = vmatpush1.bf16.msra.mxu0 0
    %982 = vmatprep.subr.bf16.mxu0 0
    %983 = vmatpush1.bf16.msra.mxu0 0
    %984 = vmatprep.subr.bf16.mxu0 0
    %985 = vmatpush1.bf16.msra.mxu0 0
    %986 = vmatprep.subr.bf16.mxu0 0
    %987 = vmatpush1.bf16.msra.mxu0 0
    %988 = vmatprep.subr.bf16.mxu0 0
    %989 = vmatpush1.bf16.msra.mxu0 0
    %990 = vmatprep.subr.bf16.mxu0 0
    %991 = vmatpush1.bf16.msra.mxu0 0
    %992 = vmatprep.mubr.bf16.mxu0 0
    %993 = vmatmul.mubr.bf16.gmra.mrb[0].mxu0 %v958
    %v994 = vpop.f32.mrb[0].mxu0
    %v995 = vadd.f32 0.0, %v994
    %v996 = vpop.f32.mrb[0].mxu0
    %v997 = vpop.f32.mrb[0].mxu0
    %v998 = vpop.f32.mrb[0].mxu0
    %999 = vdwg.mxu0
    %v1000 = vadd.f32 %v167, %v995
    %v1001 = vxor.u32 %v1000, 2147483648
    %v1002 = vmul.f32 %v1001, 1.442695
    %v1003 = vpow.pop %v1002
    %v1004 = vadd.f32 %v1003, 1.0
    %v1005 = vrcp.pop %v1004
    %v1006 = vmul.f32 1.0, %v1005
    %v1007 = vtanh.pop %v1000
    %v1008 = vmul.f32 %v1006, %v869
    %1010 = vrot.lane.b32.xlu0 %v1007, 64
    %v1011 = vpop.permute.xlu0 %1010
    %v1013 = vmul.f32 %v1006, %v1011
    %1015 = vrot.lane.b32.xlu0 %v1013, 32
    %v1016 = vpop.permute.xlu0 %1015
    %v1018 = vadd.f32 %v1008, %v1016
    %v1019 = vtanh.pop %v1018
    %1021 = vrot.lane.b32.xlu0 %v1019, 64
    %v1022 = vpop.permute.xlu0 %1021
    %v1024 = vmul.f32 %v1006, %v1022
    %1026 = vrot.lane.b32.xlu0 %v1024, 32
    %v1027 = vpop.permute.xlu0 %1026
    %1030 = vrot.lane.b32.xlu0 %v952, 64
    %v1031 = vpop.permute.xlu0 %1030
    %v1033 = vsel %vm190, %v1027, %v1031
    %v1034 = vpack.c.bf16 %v1033, %v1033
    %v1036 = vsel %vm289, %v1034, 0
    %1038 = vmatprep.subr.bf16.mxu0 0
    %1039 = vmatpush1.bf16.msra.mxu0 %v281
    %1040 = vmatprep.subr.bf16.mxu0 0
    %1041 = vmatpush1.bf16.msra.mxu0 %v282
    %1042 = vmatprep.subr.bf16.mxu0 0
    %1043 = vmatpush1.bf16.msra.mxu0 %v283
    %1044 = vmatprep.subr.bf16.mxu0 0
    %1045 = vmatpush1.bf16.msra.mxu0 %v284
    %1046 = vmatprep.subr.bf16.mxu0 0
    %1047 = vmatpush1.bf16.msra.mxu0 0
    %1048 = vmatprep.subr.bf16.mxu0 0
    %1049 = vmatpush1.bf16.msra.mxu0 0
    %1050 = vmatprep.subr.bf16.mxu0 0
    %1051 = vmatpush1.bf16.msra.mxu0 0
    %1052 = vmatprep.subr.bf16.mxu0 0
    %1053 = vmatpush1.bf16.msra.mxu0 0
    %1054 = vmatprep.subr.bf16.mxu0 0
    %1055 = vmatpush1.bf16.msra.mxu0 0
    %1056 = vmatprep.subr.bf16.mxu0 0
    %1057 = vmatpush1.bf16.msra.mxu0 0
    %1058 = vmatprep.subr.bf16.mxu0 0
    %1059 = vmatpush1.bf16.msra.mxu0 0
    %1060 = vmatprep.subr.bf16.mxu0 0
    %1061 = vmatpush1.bf16.msra.mxu0 0
    %1062 = vmatprep.subr.bf16.mxu0 0
    %1063 = vmatpush1.bf16.msra.mxu0 0
    %1064 = vmatprep.subr.bf16.mxu0 0
    %1065 = vmatpush1.bf16.msra.mxu0 0
    %1066 = vmatprep.subr.bf16.mxu0 0
    %1067 = vmatpush1.bf16.msra.mxu0 0
    %1068 = vmatprep.subr.bf16.mxu0 0
    %1069 = vmatpush1.bf16.msra.mxu0 0
    %1070 = vmatprep.mubr.bf16.mxu0 0
    %1071 = vmatmul.mubr.bf16.gmra.mrb[0].mxu0 %v1036
    %v1072 = vpop.f32.mrb[0].mxu0
    %v1073 = vadd.f32 %v69, %v1072
    %v1074 = vpop.f32.mrb[0].mxu0
    %v1075 = vpop.f32.mrb[0].mxu0
    %v1076 = vpop.f32.mrb[0].mxu0
    %1077 = vdwg.mxu0
    %v1078 = vxor.u32 %v1073, 2147483648
    %v1079 = vmul.f32 %v1078, 1.442695
    %v1080 = vpow.pop %v1079
    %v1081 = vadd.f32 %v1080, 1.0
    %v1082 = vrcp.pop %v1081
    %v1083 = vmul.f32 1.0, %v1082
    %v1084 = vtanh.pop %v1073
    %v1085 = vmul.f32 %v1083, %v946
    %1087 = vrot.lane.b32.xlu0 %v1084, 64
    %v1088 = vpop.permute.xlu0 %1087
    %v1090 = vmul.f32 %v1083, %v1088
    %1092 = vrot.lane.b32.xlu0 %v1090, 32
    %v1093 = vpop.permute.xlu0 %1092
    %v1095 = vadd.f32 %v1085, %v1093
    %v1096 = vtanh.pop %v1095
    %1098 = vrot.lane.b32.xlu0 %v1096, 64
    %v1099 = vpop.permute.xlu0 %1098
    %v1101 = vmul.f32 %v1083, %v1099
    %v1102 = vpack.c.bf16 %v1024, %v1024
    %1104 = vrot.lane.b32.xlu0 %v1102, 32
    %v1105 = vpop.permute.xlu0 %1104
    %v1107 = vsel %vm190, %v1105, 0
    %1109 = vmatprep.subr.bf16.mxu0 0
    %1110 = vmatpush1.bf16.msra.mxu0 %v186
    %1111 = vmatprep.subr.bf16.mxu0 0
    %1112 = vmatpush1.bf16.msra.mxu0 %v187
    %1113 = vmatprep.subr.bf16.mxu0 0
    %1114 = vmatpush1.bf16.msra.mxu0 0
    %1115 = vmatprep.subr.bf16.mxu0 0
    %1116 = vmatpush1.bf16.msra.mxu0 0
    %1117 = vmatprep.subr.bf16.mxu0 0
    %1118 = vmatpush1.bf16.msra.mxu0 0
    %1119 = vmatprep.subr.bf16.mxu0 0
    %1120 = vmatpush1.bf16.msra.mxu0 0
    %1121 = vmatprep.subr.bf16.mxu0 0
    %1122 = vmatpush1.bf16.msra.mxu0 0
    %1123 = vmatprep.subr.bf16.mxu0 0
    %1124 = vmatpush1.bf16.msra.mxu0 0
    %1125 = vmatprep.subr.bf16.mxu0 0
    %1126 = vmatpush1.bf16.msra.mxu0 0
    %1127 = vmatprep.subr.bf16.mxu0 0
    %1128 = vmatpush1.bf16.msra.mxu0 0
    %1129 = vmatprep.subr.bf16.mxu0 0
    %1130 = vmatpush1.bf16.msra.mxu0 0
    %1131 = vmatprep.subr.bf16.mxu0 0
    %1132 = vmatpush1.bf16.msra.mxu0 0
    %1133 = vmatprep.subr.bf16.mxu0 0
    %1134 = vmatpush1.bf16.msra.mxu0 0
    %1135 = vmatprep.subr.bf16.mxu0 0
    %1136 = vmatpush1.bf16.msra.mxu0 0
    %1137 = vmatprep.subr.bf16.mxu0 0
    %1138 = vmatpush1.bf16.msra.mxu0 0
    %1139 = vmatprep.subr.bf16.mxu0 0
    %1140 = vmatpush1.bf16.msra.mxu0 0
    %1141 = vmatprep.mubr.bf16.mxu0 0
    %1142 = vmatmul.mubr.bf16.gmra.mrb[0].mxu0 %v1107
    %v1143 = vpop.f32.mrb[0].mxu0
    %v1144 = vadd.f32 0.0, %v1143
    %v1145 = vpop.f32.mrb[0].mxu0
    %v1146 = vpop.f32.mrb[0].mxu0
    %v1147 = vpop.f32.mrb[0].mxu0
    %1148 = vdwg.mxu0
    %v1149 = vadd.f32 %v172, %v1144
    %v1150 = vxor.u32 %v1149, 2147483648
    %v1151 = vmul.f32 %v1150, 1.442695
    %v1152 = vpow.pop %v1151
    %v1153 = vadd.f32 %v1152, 1.0
    %v1154 = vrcp.pop %v1153
    %v1155 = vmul.f32 1.0, %v1154
    %v1156 = vtanh.pop %v1149
    %v1157 = vmul.f32 %v1155, %v1018
    %1159 = vrot.lane.b32.xlu0 %v1156, 64
    %v1160 = vpop.permute.xlu0 %1159
    %v1162 = vmul.f32 %v1155, %v1160
    %1164 = vrot.lane.b32.xlu0 %v1162, 32
    %v1165 = vpop.permute.xlu0 %1164
    %v1167 = vadd.f32 %v1157, %v1165
    %v1168 = vtanh.pop %v1167
    %1170 = vrot.lane.b32.xlu0 %v1168, 64
    %v1171 = vpop.permute.xlu0 %1170
    %v1173 = vmul.f32 %v1155, %v1171
    %1175 = vrot.lane.b32.xlu0 %v1173, 32
    %v1176 = vpop.permute.xlu0 %1175
    %1179 = vrot.lane.b32.xlu0 %v1101, 64
    %v1180 = vpop.permute.xlu0 %1179
    %v1182 = vsel %vm190, %v1176, %v1180
    %v1183 = vpack.c.bf16 %v1182, %v1182
    %v1185 = vsel %vm289, %v1183, 0
    %1187 = vmatprep.subr.bf16.mxu0 0
    %1188 = vmatpush1.bf16.msra.mxu0 %v281
    %1189 = vmatprep.subr.bf16.mxu0 0
    %1190 = vmatpush1.bf16.msra.mxu0 %v282
    %1191 = vmatprep.subr.bf16.mxu0 0
    %1192 = vmatpush1.bf16.msra.mxu0 %v283
    %1193 = vmatprep.subr.bf16.mxu0 0
    %1194 = vmatpush1.bf16.msra.mxu0 %v284
    %1195 = vmatprep.subr.bf16.mxu0 0
    %1196 = vmatpush1.bf16.msra.mxu0 0
    %1197 = vmatprep.subr.bf16.mxu0 0
    %1198 = vmatpush1.bf16.msra.mxu0 0
    %1199 = vmatprep.subr.bf16.mxu0 0
    %1200 = vmatpush1.bf16.msra.mxu0 0
    %1201 = vmatprep.subr.bf16.mxu0 0
    %1202 = vmatpush1.bf16.msra.mxu0 0
    %1203 = vmatprep.subr.bf16.mxu0 0
    %1204 = vmatpush1.bf16.msra.mxu0 0
    %1205 = vmatprep.subr.bf16.mxu0 0
    %1206 = vmatpush1.bf16.msra.mxu0 0
    %1207 = vmatprep.subr.bf16.mxu0 0
    %1208 = vmatpush1.bf16.msra.mxu0 0
    %1209 = vmatprep.subr.bf16.mxu0 0
    %1210 = vmatpush1.bf16.msra.mxu0 0
    %1211 = vmatprep.subr.bf16.mxu0 0
    %1212 = vmatpush1.bf16.msra.mxu0 0
    %1213 = vmatprep.subr.bf16.mxu0 0
    %1214 = vmatpush1.bf16.msra.mxu0 0
    %1215 = vmatprep.subr.bf16.mxu0 0
    %1216 = vmatpush1.bf16.msra.mxu0 0
    %1217 = vmatprep.subr.bf16.mxu0 0
    %1218 = vmatpush1.bf16.msra.mxu0 0
    %1219 = vmatprep.mubr.bf16.mxu0 0
    %1220 = vmatmul.mubr.bf16.gmra.mrb[0].mxu0 %v1185
    %v1221 = vpop.f32.mrb[0].mxu0
    %v1222 = vadd.f32 %v69, %v1221
    %v1223 = vpop.f32.mrb[0].mxu0
    %v1224 = vpop.f32.mrb[0].mxu0
    %v1225 = vpop.f32.mrb[0].mxu0
    %1226 = vdwg.mxu0
    %v1227 = vxor.u32 %v1222, 2147483648
    %v1228 = vmul.f32 %v1227, 1.442695
    %v1229 = vpow.pop %v1228
    %v1230 = vadd.f32 %v1229, 1.0
    %v1231 = vrcp.pop %v1230
    %v1232 = vmul.f32 1.0, %v1231
    %v1233 = vtanh.pop %v1222
    %v1234 = vmul.f32 %v1232, %v1095
    %1236 = vrot.lane.b32.xlu0 %v1233, 64
    %v1237 = vpop.permute.xlu0 %1236
    %v1239 = vmul.f32 %v1232, %v1237
    %1241 = vrot.lane.b32.xlu0 %v1239, 32
    %v1242 = vpop.permute.xlu0 %1241
    %v1244 = vadd.f32 %v1234, %v1242
    %v1245 = vtanh.pop %v1244
    %1247 = vrot.lane.b32.xlu0 %v1245, 64
    %v1248 = vpop.permute.xlu0 %1247
    %v1250 = vmul.f32 %v1232, %v1248
    %v1251 = vpack.c.bf16 %v1173, %v1173
    %1253 = vrot.lane.b32.xlu0 %v1251, 32
    %v1254 = vpop.permute.xlu0 %1253
    %v1256 = vsel %vm190, %v1254, 0
    %1258 = vmatprep.subr.bf16.mxu0 0
    %1259 = vmatpush1.bf16.msra.mxu0 %v186
    %1260 = vmatprep.subr.bf16.mxu0 0
    %1261 = vmatpush1.bf16.msra.mxu0 %v187
    %1262 = vmatprep.subr.bf16.mxu0 0
    %1263 = vmatpush1.bf16.msra.mxu0 0
    %1264 = vmatprep.subr.bf16.mxu0 0
    %1265 = vmatpush1.bf16.msra.mxu0 0
    %1266 = vmatprep.subr.bf16.mxu0 0
    %1267 = vmatpush1.bf16.msra.mxu0 0
    %1268 = vmatprep.subr.bf16.mxu0 0
    %1269 = vmatpush1.bf16.msra.mxu0 0
    %1270 = vmatprep.subr.bf16.mxu0 0
    %1271 = vmatpush1.bf16.msra.mxu0 0
    %1272 = vmatprep.subr.bf16.mxu0 0
    %1273 = vmatpush1.bf16.msra.mxu0 0
    %1274 = vmatprep.subr.bf16.mxu0 0
    %1275 = vmatpush1.bf16.msra.mxu0 0
    %1276 = vmatprep.subr.bf16.mxu0 0
    %1277 = vmatpush1.bf16.msra.mxu0 0
    %1278 = vmatprep.subr.bf16.mxu0 0
    %1279 = vmatpush1.bf16.msra.mxu0 0
    %1280 = vmatprep.subr.bf16.mxu0 0
    %1281 = vmatpush1.bf16.msra.mxu0 0
    %1282 = vmatprep.subr.bf16.mxu0 0
    %1283 = vmatpush1.bf16.msra.mxu0 0
    %1284 = vmatprep.subr.bf16.mxu0 0
    %1285 = vmatpush1.bf16.msra.mxu0 0
    %1286 = vmatprep.subr.bf16.mxu0 0
    %1287 = vmatpush1.bf16.msra.mxu0 0
    %1288 = vmatprep.subr.bf16.mxu0 0
    %1289 = vmatpush1.bf16.msra.mxu0 0
    %1290 = vmatprep.mubr.bf16.mxu0 0
    %1291 = vmatmul.mubr.bf16.gmra.mrb[0].mxu0 %v1256
    %v1292 = vpop.f32.mrb[0].mxu0
    %v1293 = vadd.f32 0.0, %v1292
    %v1294 = vpop.f32.mrb[0].mxu0
    %v1295 = vpop.f32.mrb[0].mxu0
    %v1296 = vpop.f32.mrb[0].mxu0
    %1297 = vdwg.mxu0
    %v1298 = vadd.f32 %v175, %v1293
    %v1299 = vxor.u32 %v1298, 2147483648
    %v1300 = vmul.f32 %v1299, 1.442695
    %v1301 = vpow.pop %v1300
    %v1302 = vadd.f32 %v1301, 1.0
    %v1303 = vrcp.pop %v1302
    %v1304 = vmul.f32 1.0, %v1303
    %v1305 = vtanh.pop %v1298
    %v1306 = vmul.f32 %v1304, %v1167
    %1308 = vrot.lane.b32.xlu0 %v1305, 64
    %v1309 = vpop.permute.xlu0 %1308
    %v1311 = vmul.f32 %v1304, %v1309
    %1313 = vrot.lane.b32.xlu0 %v1311, 32
    %v1314 = vpop.permute.xlu0 %1313
    %v1316 = vadd.f32 %v1306, %v1314
    %v1317 = vtanh.pop %v1316
    %1319 = vrot.lane.b32.xlu0 %v1317, 64
    %v1320 = vpop.permute.xlu0 %1319
    %v1322 = vmul.f32 %v1304, %v1320
    %1324 = vrot.lane.b32.xlu0 %v1322, 32
    %v1325 = vpop.permute.xlu0 %1324
    %1328 = vrot.lane.b32.xlu0 %v1250, 64
    %v1329 = vpop.permute.xlu0 %1328
    %v1331 = vsel %vm190, %v1325, %v1329
    %v1332 = vpack.c.bf16 %v1331, %v1331
    %v1334 = vsel %vm289, %v1332, 0
    %1336 = vmatprep.subr.bf16.mxu0 0
    %1337 = vmatpush1.bf16.msra.mxu0 %v281
    %1338 = vmatprep.subr.bf16.mxu0 0
    %1339 = vmatpush1.bf16.msra.mxu0 %v282
    %1340 = vmatprep.subr.bf16.mxu0 0
    %1341 = vmatpush1.bf16.msra.mxu0 %v283
    %1342 = vmatprep.subr.bf16.mxu0 0
    %1343 = vmatpush1.bf16.msra.mxu0 %v284
    %1344 = vmatprep.subr.bf16.mxu0 0
    %1345 = vmatpush1.bf16.msra.mxu0 0
    %1346 = vmatprep.subr.bf16.mxu0 0
    %1347 = vmatpush1.bf16.msra.mxu0 0
    %1348 = vmatprep.subr.bf16.mxu0 0
    %1349 = vmatpush1.bf16.msra.mxu0 0
    %1350 = vmatprep.subr.bf16.mxu0 0
    %1351 = vmatpush1.bf16.msra.mxu0 0
    %1352 = vmatprep.subr.bf16.mxu0 0
    %1353 = vmatpush1.bf16.msra.mxu0 0
    %1354 = vmatprep.subr.bf16.mxu0 0
    %1355 = vmatpush1.bf16.msra.mxu0 0
    %1356 = vmatprep.subr.bf16.mxu0 0
    %1357 = vmatpush1.bf16.msra.mxu0 0
    %1358 = vmatprep.subr.bf16.mxu0 0
    %1359 = vmatpush1.bf16.msra.mxu0 0
    %1360 = vmatprep.subr.bf16.mxu0 0
    %1361 = vmatpush1.bf16.msra.mxu0 0
    %1362 = vmatprep.subr.bf16.mxu0 0
    %1363 = vmatpush1.bf16.msra.mxu0 0
    %1364 = vmatprep.subr.bf16.mxu0 0
    %1365 = vmatpush1.bf16.msra.mxu0 0
    %1366 = vmatprep.subr.bf16.mxu0 0
    %1367 = vmatpush1.bf16.msra.mxu0 0
    %1368 = vmatprep.mubr.bf16.mxu0 0
    %1369 = vmatmul.mubr.bf16.gmra.mrb[0].mxu0 %v1334
    %v1370 = vpop.f32.mrb[0].mxu0
    %v1371 = vadd.f32 %v69, %v1370
    %v1372 = vpop.f32.mrb[0].mxu0
    %v1373 = vpop.f32.mrb[0].mxu0
    %v1374 = vpop.f32.mrb[0].mxu0
    %1375 = vdwg.mxu0
    %v1376 = vxor.u32 %v1371, 2147483648
    %v1377 = vmul.f32 %v1376, 1.442695
    %v1378 = vpow.pop %v1377
    %v1379 = vadd.f32 %v1378, 1.0
    %v1380 = vrcp.pop %v1379
    %v1381 = vmul.f32 1.0, %v1380
    %v1382 = vtanh.pop %v1371
    %v1383 = vmul.f32 %v1381, %v1244
    %1385 = vrot.lane.b32.xlu0 %v1382, 64
    %v1386 = vpop.permute.xlu0 %1385
    %v1388 = vmul.f32 %v1381, %v1386
    %1390 = vrot.lane.b32.xlu0 %v1388, 32
    %v1391 = vpop.permute.xlu0 %1390
    %v1393 = vadd.f32 %v1383, %v1391
    %v1394 = vtanh.pop %v1393
    %1396 = vrot.lane.b32.xlu0 %v1394, 64
    %v1397 = vpop.permute.xlu0 %1396
    %v1399 = vmul.f32 %v1381, %v1397
    %1401 = vrot.lane.b32.xlu0 %v1399, 32
    %v1402 = vpop.permute.xlu0 %1401
    %1404 = vst.msk [vmem:[%s3] sm:$0xff] %vm190, %v1402
    %v1405 = vpack.c.bf16 %v1399, %v1399
    %v1406 = vlaneseq
    %v1407 = vshrl.u32 %v1406, 7
    %v1408 = vsub.s32 2, %v1407
    %v1409 = vrot.slane %v65, %v1408
    %1411 = vrot.lane.b32.xlu0 %v1405, 32
    %v1412 = vpop.permute.xlu0 %1411
    %v1417 = vunpack.c.l.b16 %v45
    %v1418 = vunpack.c.l.b16 %v46
    %v1419 = vunpack.c.l.b16 %v47
    %v1420 = vunpack.c.l.b16 %v48
    %v1421 = vpack.c.b16 %v1418, %v1417
    %v1422 = vpack.c.b16 %v1420, %v1419
    %v1426 = vsel %vm190, %v1412, 0
    %1428 = vmatprep.subr.bf16.mxu0 0
    %1429 = vmatpush1.bf16.msra.mxu0 %v1421
    %1430 = vmatprep.subr.bf16.mxu0 0
    %1431 = vmatpush1.bf16.msra.mxu0 %v1422
    %1432 = vmatprep.subr.bf16.mxu0 0
    %1433 = vmatpush1.bf16.msra.mxu0 0
    %1434 = vmatprep.subr.bf16.mxu0 0
    %1435 = vmatpush1.bf16.msra.mxu0 0
    %1436 = vmatprep.subr.bf16.mxu0 0
    %1437 = vmatpush1.bf16.msra.mxu0 0
    %1438 = vmatprep.subr.bf16.mxu0 0
    %1439 = vmatpush1.bf16.msra.mxu0 0
    %1440 = vmatprep.subr.bf16.mxu0 0
    %1441 = vmatpush1.bf16.msra.mxu0 0
    %1442 = vmatprep.subr.bf16.mxu0 0
    %1443 = vmatpush1.bf16.msra.mxu0 0
    %1444 = vmatprep.subr.bf16.mxu0 0
    %1445 = vmatpush1.bf16.msra.mxu0 0
    %1446 = vmatprep.subr.bf16.mxu0 0
    %1447 = vmatpush1.bf16.msra.mxu0 0
    %1448 = vmatprep.subr.bf16.mxu0 0
    %1449 = vmatpush1.bf16.msra.mxu0 0
    %1450 = vmatprep.subr.bf16.mxu0 0
    %1451 = vmatpush1.bf16.msra.mxu0 0
    %1452 = vmatprep.subr.bf16.mxu0 0
    %1453 = vmatpush1.bf16.msra.mxu0 0
    %1454 = vmatprep.subr.bf16.mxu0 0
    %1455 = vmatpush1.bf16.msra.mxu0 0
    %1456 = vmatprep.subr.bf16.mxu0 0
    %1457 = vmatpush1.bf16.msra.mxu0 0
    %1458 = vmatprep.subr.bf16.mxu0 0
    %1459 = vmatpush1.bf16.msra.mxu0 0
    %1460 = vmatprep.mubr.bf16.mxu0 0
    %1461 = vmatmul.mubr.bf16.gmra.mrb[0].mxu0 %v1426
    %v1462 = vpop.f32.mrb[0].mxu0
    %v1463 = vadd.f32 %v1409, %v1462
    %v1464 = vpop.f32.mrb[0].mxu0
    %v1465 = vpop.f32.mrb[0].mxu0
    %v1466 = vpop.f32.mrb[0].mxu0
    %1467 = vdwg.mxu0
    %v1468 = vlaneseq
    %v1469 = vshrl.u32 %v1468, 7
    %v1470 = vsub.s32 0, %v1469
    %v1471 = vrot.slane %v1463, %v1470
    %v1472 = vlaneseq
    %v1473 = vshrl.u32 %v1472, 7
    %v1474 = vsub.s32 1, %v1473
    %v1475 = vrot.slane %v1463, %v1474
    %v1476 = vlaneseq
    %v1477 = vshrl.u32 %v1476, 7
    %v1478 = vsub.s32 2, %v1477
    %v1479 = vrot.slane %v1463, %v1478
    %v1480 = vlaneseq
    %v1481 = vshrl.u32 %v1480, 7
    %v1482 = vsub.s32 3, %v1481
    %v1483 = vrot.slane %v1463, %v1482
    %v1488 = vunpack.c.l.b16 %v49
    %v1489 = vunpack.c.l.b16 %v50
    %v1490 = vunpack.c.l.b16 %v51
    %v1491 = vunpack.c.l.b16 %v52
    %v1492 = vpack.c.b16 %v1489, %v1488
    %v1493 = vpack.c.b16 %v1491, %v1490
    %1496 = vmatprep.subr.bf16.mxu0 0
    %1497 = vmatpush1.bf16.msra.mxu0 %v1492
    %1498 = vmatprep.subr.bf16.mxu0 0
    %1499 = vmatpush1.bf16.msra.mxu0 %v1493
    %1500 = vmatprep.subr.bf16.mxu0 0
    %1501 = vmatpush1.bf16.msra.mxu0 0
    %1502 = vmatprep.subr.bf16.mxu0 0
    %1503 = vmatpush1.bf16.msra.mxu0 0
    %1504 = vmatprep.subr.bf16.mxu0 0
    %1505 = vmatpush1.bf16.msra.mxu0 0
    %1506 = vmatprep.subr.bf16.mxu0 0
    %1507 = vmatpush1.bf16.msra.mxu0 0
    %1508 = vmatprep.subr.bf16.mxu0 0
    %1509 = vmatpush1.bf16.msra.mxu0 0
    %1510 = vmatprep.subr.bf16.mxu0 0
    %1511 = vmatpush1.bf16.msra.mxu0 0
    %1512 = vmatprep.subr.bf16.mxu0 0
    %1513 = vmatpush1.bf16.msra.mxu0 0
    %1514 = vmatprep.subr.bf16.mxu0 0
    %1515 = vmatpush1.bf16.msra.mxu0 0
    %1516 = vmatprep.subr.bf16.mxu0 0
    %1517 = vmatpush1.bf16.msra.mxu0 0
    %1518 = vmatprep.subr.bf16.mxu0 0
    %1519 = vmatpush1.bf16.msra.mxu0 0
    %1520 = vmatprep.subr.bf16.mxu0 0
    %1521 = vmatpush1.bf16.msra.mxu0 0
    %1522 = vmatprep.subr.bf16.mxu0 0
    %1523 = vmatpush1.bf16.msra.mxu0 0
    %1524 = vmatprep.subr.bf16.mxu0 0
    %1525 = vmatpush1.bf16.msra.mxu0 0
    %1526 = vmatprep.subr.bf16.mxu0 0
    %1527 = vmatpush1.bf16.msra.mxu0 0
    %1528 = vmatprep.mubr.bf16.mxu0 0
    %1529 = vmatmul.mubr.bf16.gmra.mrb[0].mxu0 %v192
    %v1530 = vpop.f32.mrb[0].mxu0
    %v1531 = vadd.f32 0.0, %v1530
    %v1532 = vpop.f32.mrb[0].mxu0
    %v1533 = vpop.f32.mrb[0].mxu0
    %v1534 = vpop.f32.mrb[0].mxu0
    %1535 = vdwg.mxu0
    %v1536 = vadd.f32 %v1471, %v1531
    %v1537 = vxor.u32 %v1536, 2147483648
    %v1538 = vmul.f32 %v1537, 1.442695
    %v1539 = vpow.pop %v1538
    %v1540 = vadd.f32 %v1539, 1.0
    %v1541 = vrcp.pop %v1540
    %v1542 = vmul.f32 1.0, %v1541
    %v1543 = vtanh.pop %v1536
    %v1544 = vmul.f32 %v1542, 0.0
    %1546 = vrot.lane.b32.xlu0 %v1543, 64
    %v1547 = vpop.permute.xlu0 %1546
    %v1549 = vmul.f32 %v1542, %v1547
    %1551 = vrot.lane.b32.xlu0 %v1549, 32
    %v1552 = vpop.permute.xlu0 %1551
    %v1554 = vadd.f32 %v1544, %v1552
    %v1555 = vtanh.pop %v1554
    %1557 = vrot.lane.b32.xlu0 %v1555, 64
    %v1558 = vpop.permute.xlu0 %1557
    %v1560 = vmul.f32 %v1542, %v1558
    %1562 = vrot.lane.b32.xlu0 %v1560, 32
    %v1563 = vpop.permute.xlu0 %1562
    %v1565 = vsel %vm190, %v1563, 0.0
    %v1566 = vpack.c.bf16 %v1565, %v1565
    %v1575 = vunpack.c.l.b16 %v53
    %v1576 = vunpack.c.l.b16 %v54
    %v1577 = vunpack.c.l.b16 %v55
    %v1578 = vunpack.c.l.b16 %v56
    %v1579 = vunpack.c.l.b16 %v57
    %v1580 = vunpack.c.l.b16 %v58
    %v1581 = vunpack.c.l.b16 %v59
    %v1582 = vunpack.c.l.b16 %v60
    %v1583 = vpack.c.b16 %v1576, %v1575
    %v1584 = vpack.c.b16 %v1578, %v1577
    %v1585 = vpack.c.b16 %v1580, %v1579
    %v1586 = vpack.c.b16 %v1582, %v1581
    %v1592 = vsel %vm289, %v1566, 0
    %1594 = vmatprep.subr.bf16.mxu0 0
    %1595 = vmatpush1.bf16.msra.mxu0 %v1583
    %1596 = vmatprep.subr.bf16.mxu0 0
    %1597 = vmatpush1.bf16.msra.mxu0 %v1584
    %1598 = vmatprep.subr.bf16.mxu0 0
    %1599 = vmatpush1.bf16.msra.mxu0 %v1585
    %1600 = vmatprep.subr.bf16.mxu0 0
    %1601 = vmatpush1.bf16.msra.mxu0 %v1586
    %1602 = vmatprep.subr.bf16.mxu0 0
    %1603 = vmatpush1.bf16.msra.mxu0 0
    %1604 = vmatprep.subr.bf16.mxu0 0
    %1605 = vmatpush1.bf16.msra.mxu0 0
    %1606 = vmatprep.subr.bf16.mxu0 0
    %1607 = vmatpush1.bf16.msra.mxu0 0
    %1608 = vmatprep.subr.bf16.mxu0 0
    %1609 = vmatpush1.bf16.msra.mxu0 0
    %1610 = vmatprep.subr.bf16.mxu0 0
    %1611 = vmatpush1.bf16.msra.mxu0 0
    %1612 = vmatprep.subr.bf16.mxu0 0
    %1613 = vmatpush1.bf16.msra.mxu0 0
    %1614 = vmatprep.subr.bf16.mxu0 0
    %1615 = vmatpush1.bf16.msra.mxu0 0
    %1616 = vmatprep.subr.bf16.mxu0 0
    %1617 = vmatpush1.bf16.msra.mxu0 0
    %1618 = vmatprep.subr.bf16.mxu0 0
    %1619 = vmatpush1.bf16.msra.mxu0 0
    %1620 = vmatprep.subr.bf16.mxu0 0
    %1621 = vmatpush1.bf16.msra.mxu0 0
    %1622 = vmatprep.subr.bf16.mxu0 0
    %1623 = vmatpush1.bf16.msra.mxu0 0
    %1624 = vmatprep.subr.bf16.mxu0 0
    %1625 = vmatpush1.bf16.msra.mxu0 0
    %1626 = vmatprep.mubr.bf16.mxu0 0
    %1627 = vmatmul.mubr.bf16.gmra.mrb[0].mxu0 %v1592
    %v1628 = vpop.f32.mrb[0].mxu0
    %v1629 = vadd.f32 %v73, %v1628
    %v1630 = vpop.f32.mrb[0].mxu0
    %v1631 = vpop.f32.mrb[0].mxu0
    %v1632 = vpop.f32.mrb[0].mxu0
    %1633 = vdwg.mxu0
    %v1634 = vxor.u32 %v1629, 2147483648
    %v1635 = vmul.f32 %v1634, 1.442695
    %v1636 = vpow.pop %v1635
    %v1637 = vadd.f32 %v1636, 1.0
    %v1638 = vrcp.pop %v1637
    %v1639 = vmul.f32 1.0, %v1638
    %v1640 = vtanh.pop %v1629
    %v1641 = vmul.f32 %v1639, 0.0
    %1643 = vrot.lane.b32.xlu0 %v1640, 64
    %v1644 = vpop.permute.xlu0 %1643
    %v1646 = vmul.f32 %v1639, %v1644
    %1648 = vrot.lane.b32.xlu0 %v1646, 32
    %v1649 = vpop.permute.xlu0 %1648
    %v1651 = vadd.f32 %v1641, %v1649
    %v1652 = vtanh.pop %v1651
    %1654 = vrot.lane.b32.xlu0 %v1652, 64
    %v1655 = vpop.permute.xlu0 %1654
    %v1657 = vmul.f32 %v1639, %v1655
    %v1658 = vpack.c.bf16 %v1560, %v1560
    %1660 = vrot.lane.b32.xlu0 %v1658, 32
    %v1661 = vpop.permute.xlu0 %1660
    %v1663 = vsel %vm190, %v1661, 0
    %1665 = vmatprep.subr.bf16.mxu0 0
    %1666 = vmatpush1.bf16.msra.mxu0 %v1492
    %1667 = vmatprep.subr.bf16.mxu0 0
    %1668 = vmatpush1.bf16.msra.mxu0 %v1493
    %1669 = vmatprep.subr.bf16.mxu0 0
    %1670 = vmatpush1.bf16.msra.mxu0 0
    %1671 = vmatprep.subr.bf16.mxu0 0
    %1672 = vmatpush1.bf16.msra.mxu0 0
    %1673 = vmatprep.subr.bf16.mxu0 0
    %1674 = vmatpush1.bf16.msra.mxu0 0
    %1675 = vmatprep.subr.bf16.mxu0 0
    %1676 = vmatpush1.bf16.msra.mxu0 0
    %1677 = vmatprep.subr.bf16.mxu0 0
    %1678 = vmatpush1.bf16.msra.mxu0 0
    %1679 = vmatprep.subr.bf16.mxu0 0
    %1680 = vmatpush1.bf16.msra.mxu0 0
    %1681 = vmatprep.subr.bf16.mxu0 0
    %1682 = vmatpush1.bf16.msra.mxu0 0
    %1683 = vmatprep.subr.bf16.mxu0 0
    %1684 = vmatpush1.bf16.msra.mxu0 0
    %1685 = vmatprep.subr.bf16.mxu0 0
    %1686 = vmatpush1.bf16.msra.mxu0 0
    %1687 = vmatprep.subr.bf16.mxu0 0
    %1688 = vmatpush1.bf16.msra.mxu0 0
    %1689 = vmatprep.subr.bf16.mxu0 0
    %1690 = vmatpush1.bf16.msra.mxu0 0
    %1691 = vmatprep.subr.bf16.mxu0 0
    %1692 = vmatpush1.bf16.msra.mxu0 0
    %1693 = vmatprep.subr.bf16.mxu0 0
    %1694 = vmatpush1.bf16.msra.mxu0 0
    %1695 = vmatprep.subr.bf16.mxu0 0
    %1696 = vmatpush1.bf16.msra.mxu0 0
    %1697 = vmatprep.mubr.bf16.mxu0 0
    %1698 = vmatmul.mubr.bf16.gmra.mrb[0].mxu0 %v1663
    %v1699 = vpop.f32.mrb[0].mxu0
    %v1700 = vadd.f32 0.0, %v1699
    %v1701 = vpop.f32.mrb[0].mxu0
    %v1702 = vpop.f32.mrb[0].mxu0
    %v1703 = vpop.f32.mrb[0].mxu0
    %1704 = vdwg.mxu0
    %v1705 = vadd.f32 %v1475, %v1700
    %v1706 = vxor.u32 %v1705, 2147483648
    %v1707 = vmul.f32 %v1706, 1.442695
    %v1708 = vpow.pop %v1707
    %v1709 = vadd.f32 %v1708, 1.0
    %v1710 = vrcp.pop %v1709
    %v1711 = vmul.f32 1.0, %v1710
    %v1712 = vtanh.pop %v1705
    %v1713 = vmul.f32 %v1711, %v1554
    %1715 = vrot.lane.b32.xlu0 %v1712, 64
    %v1716 = vpop.permute.xlu0 %1715
    %v1718 = vmul.f32 %v1711, %v1716
    %1720 = vrot.lane.b32.xlu0 %v1718, 32
    %v1721 = vpop.permute.xlu0 %1720
    %v1723 = vadd.f32 %v1713, %v1721
    %v1724 = vtanh.pop %v1723
    %1726 = vrot.lane.b32.xlu0 %v1724, 64
    %v1727 = vpop.permute.xlu0 %1726
    %v1729 = vmul.f32 %v1711, %v1727
    %1731 = vrot.lane.b32.xlu0 %v1729, 32
    %v1732 = vpop.permute.xlu0 %1731
    %1735 = vrot.lane.b32.xlu0 %v1657, 64
    %v1736 = vpop.permute.xlu0 %1735
    %v1738 = vsel %vm190, %v1732, %v1736
    %v1739 = vpack.c.bf16 %v1738, %v1738
    %v1741 = vsel %vm289, %v1739, 0
    %1743 = vmatprep.subr.bf16.mxu0 0
    %1744 = vmatpush1.bf16.msra.mxu0 %v1583
    %1745 = vmatprep.subr.bf16.mxu0 0
    %1746 = vmatpush1.bf16.msra.mxu0 %v1584
    %1747 = vmatprep.subr.bf16.mxu0 0
    %1748 = vmatpush1.bf16.msra.mxu0 %v1585
    %1749 = vmatprep.subr.bf16.mxu0 0
    %1750 = vmatpush1.bf16.msra.mxu0 %v1586
    %1751 = vmatprep.subr.bf16.mxu0 0
    %1752 = vmatpush1.bf16.msra.mxu0 0
    %1753 = vmatprep.subr.bf16.mxu0 0
    %1754 = vmatpush1.bf16.msra.mxu0 0
    %1755 = vmatprep.subr.bf16.mxu0 0
    %1756 = vmatpush1.bf16.msra.mxu0 0
    %1757 = vmatprep.subr.bf16.mxu0 0
    %1758 = vmatpush1.bf16.msra.mxu0 0
    %1759 = vmatprep.subr.bf16.mxu0 0
    %1760 = vmatpush1.bf16.msra.mxu0 0
    %1761 = vmatprep.subr.bf16.mxu0 0
    %1762 = vmatpush1.bf16.msra.mxu0 0
    %1763 = vmatprep.subr.bf16.mxu0 0
    %1764 = vmatpush1.bf16.msra.mxu0 0
    %1765 = vmatprep.subr.bf16.mxu0 0
    %1766 = vmatpush1.bf16.msra.mxu0 0
    %1767 = vmatprep.subr.bf16.mxu0 0
    %1768 = vmatpush1.bf16.msra.mxu0 0
    %1769 = vmatprep.subr.bf16.mxu0 0
    %1770 = vmatpush1.bf16.msra.mxu0 0
    %1771 = vmatprep.subr.bf16.mxu0 0
    %1772 = vmatpush1.bf16.msra.mxu0 0
    %1773 = vmatprep.subr.bf16.mxu0 0
    %1774 = vmatpush1.bf16.msra.mxu0 0
    %1775 = vmatprep.mubr.bf16.mxu0 0
    %1776 = vmatmul.mubr.bf16.gmra.mrb[0].mxu0 %v1741
    %v1777 = vpop.f32.mrb[0].mxu0
    %v1778 = vadd.f32 %v73, %v1777
    %v1779 = vpop.f32.mrb[0].mxu0
    %v1780 = vpop.f32.mrb[0].mxu0
    %v1781 = vpop.f32.mrb[0].mxu0
    %1782 = vdwg.mxu0
    %v1783 = vxor.u32 %v1778, 2147483648
    %v1784 = vmul.f32 %v1783, 1.442695
    %v1785 = vpow.pop %v1784
    %v1786 = vadd.f32 %v1785, 1.0
    %v1787 = vrcp.pop %v1786
    %v1788 = vmul.f32 1.0, %v1787
    %v1789 = vtanh.pop %v1778
    %v1790 = vmul.f32 %v1788, %v1651
    %1792 = vrot.lane.b32.xlu0 %v1789, 64
    %v1793 = vpop.permute.xlu0 %1792
    %v1795 = vmul.f32 %v1788, %v1793
    %1797 = vrot.lane.b32.xlu0 %v1795, 32
    %v1798 = vpop.permute.xlu0 %1797
    %v1800 = vadd.f32 %v1790, %v1798
    %v1801 = vtanh.pop %v1800
    %1803 = vrot.lane.b32.xlu0 %v1801, 64
    %v1804 = vpop.permute.xlu0 %1803
    %v1806 = vmul.f32 %v1788, %v1804
    %v1807 = vpack.c.bf16 %v1729, %v1729
    %1809 = vrot.lane.b32.xlu0 %v1807, 32
    %v1810 = vpop.permute.xlu0 %1809
    %v1812 = vsel %vm190, %v1810, 0
    %1814 = vmatprep.subr.bf16.mxu0 0
    %1815 = vmatpush1.bf16.msra.mxu0 %v1492
    %1816 = vmatprep.subr.bf16.mxu0 0
    %1817 = vmatpush1.bf16.msra.mxu0 %v1493
    %1818 = vmatprep.subr.bf16.mxu0 0
    %1819 = vmatpush1.bf16.msra.mxu0 0
    %1820 = vmatprep.subr.bf16.mxu0 0
    %1821 = vmatpush1.bf16.msra.mxu0 0
    %1822 = vmatprep.subr.bf16.mxu0 0
    %1823 = vmatpush1.bf16.msra.mxu0 0
    %1824 = vmatprep.subr.bf16.mxu0 0
    %1825 = vmatpush1.bf16.msra.mxu0 0
    %1826 = vmatprep.subr.bf16.mxu0 0
    %1827 = vmatpush1.bf16.msra.mxu0 0
    %1828 = vmatprep.subr.bf16.mxu0 0
    %1829 = vmatpush1.bf16.msra.mxu0 0
    %1830 = vmatprep.subr.bf16.mxu0 0
    %1831 = vmatpush1.bf16.msra.mxu0 0
    %1832 = vmatprep.subr.bf16.mxu0 0
    %1833 = vmatpush1.bf16.msra.mxu0 0
    %1834 = vmatprep.subr.bf16.mxu0 0
    %1835 = vmatpush1.bf16.msra.mxu0 0
    %1836 = vmatprep.subr.bf16.mxu0 0
    %1837 = vmatpush1.bf16.msra.mxu0 0
    %1838 = vmatprep.subr.bf16.mxu0 0
    %1839 = vmatpush1.bf16.msra.mxu0 0
    %1840 = vmatprep.subr.bf16.mxu0 0
    %1841 = vmatpush1.bf16.msra.mxu0 0
    %1842 = vmatprep.subr.bf16.mxu0 0
    %1843 = vmatpush1.bf16.msra.mxu0 0
    %1844 = vmatprep.subr.bf16.mxu0 0
    %1845 = vmatpush1.bf16.msra.mxu0 0
    %1846 = vmatprep.mubr.bf16.mxu0 0
    %1847 = vmatmul.mubr.bf16.gmra.mrb[0].mxu0 %v1812
    %v1848 = vpop.f32.mrb[0].mxu0
    %v1849 = vadd.f32 0.0, %v1848
    %v1850 = vpop.f32.mrb[0].mxu0
    %v1851 = vpop.f32.mrb[0].mxu0
    %v1852 = vpop.f32.mrb[0].mxu0
    %1853 = vdwg.mxu0
    %v1854 = vadd.f32 %v1479, %v1849
    %v1855 = vxor.u32 %v1854, 2147483648
    %v1856 = vmul.f32 %v1855, 1.442695
    %v1857 = vpow.pop %v1856
    %v1858 = vadd.f32 %v1857, 1.0
    %v1859 = vrcp.pop %v1858
    %v1860 = vmul.f32 1.0, %v1859
    %v1861 = vtanh.pop %v1854
    %v1862 = vmul.f32 %v1860, %v1723
    %1864 = vrot.lane.b32.xlu0 %v1861, 64
    %v1865 = vpop.permute.xlu0 %1864
    %v1867 = vmul.f32 %v1860, %v1865
    %1869 = vrot.lane.b32.xlu0 %v1867, 32
    %v1870 = vpop.permute.xlu0 %1869
    %v1872 = vadd.f32 %v1862, %v1870
    %v1873 = vtanh.pop %v1872
    %1875 = vrot.lane.b32.xlu0 %v1873, 64
    %v1876 = vpop.permute.xlu0 %1875
    %v1878 = vmul.f32 %v1860, %v1876
    %1880 = vrot.lane.b32.xlu0 %v1878, 32
    %v1881 = vpop.permute.xlu0 %1880
    %1884 = vrot.lane.b32.xlu0 %v1806, 64
    %v1885 = vpop.permute.xlu0 %1884
    %v1887 = vsel %vm190, %v1881, %v1885
    %v1888 = vpack.c.bf16 %v1887, %v1887
    %v1890 = vsel %vm289, %v1888, 0
    %1892 = vmatprep.subr.bf16.mxu0 0
    %1893 = vmatpush1.bf16.msra.mxu0 %v1583
    %1894 = vmatprep.subr.bf16.mxu0 0
    %1895 = vmatpush1.bf16.msra.mxu0 %v1584
    %1896 = vmatprep.subr.bf16.mxu0 0
    %1897 = vmatpush1.bf16.msra.mxu0 %v1585
    %1898 = vmatprep.subr.bf16.mxu0 0
    %1899 = vmatpush1.bf16.msra.mxu0 %v1586
    %1900 = vmatprep.subr.bf16.mxu0 0
    %1901 = vmatpush1.bf16.msra.mxu0 0
    %1902 = vmatprep.subr.bf16.mxu0 0
    %1903 = vmatpush1.bf16.msra.mxu0 0
    %1904 = vmatprep.subr.bf16.mxu0 0
    %1905 = vmatpush1.bf16.msra.mxu0 0
    %1906 = vmatprep.subr.bf16.mxu0 0
    %1907 = vmatpush1.bf16.msra.mxu0 0
    %1908 = vmatprep.subr.bf16.mxu0 0
    %1909 = vmatpush1.bf16.msra.mxu0 0
    %1910 = vmatprep.subr.bf16.mxu0 0
    %1911 = vmatpush1.bf16.msra.mxu0 0
    %1912 = vmatprep.subr.bf16.mxu0 0
    %1913 = vmatpush1.bf16.msra.mxu0 0
    %1914 = vmatprep.subr.bf16.mxu0 0
    %1915 = vmatpush1.bf16.msra.mxu0 0
    %1916 = vmatprep.subr.bf16.mxu0 0
    %1917 = vmatpush1.bf16.msra.mxu0 0
    %1918 = vmatprep.subr.bf16.mxu0 0
    %1919 = vmatpush1.bf16.msra.mxu0 0
    %1920 = vmatprep.subr.bf16.mxu0 0
    %1921 = vmatpush1.bf16.msra.mxu0 0
    %1922 = vmatprep.subr.bf16.mxu0 0
    %1923 = vmatpush1.bf16.msra.mxu0 0
    %1924 = vmatprep.mubr.bf16.mxu0 0
    %1925 = vmatmul.mubr.bf16.gmra.mrb[0].mxu0 %v1890
    %v1926 = vpop.f32.mrb[0].mxu0
    %v1927 = vadd.f32 %v73, %v1926
    %v1928 = vpop.f32.mrb[0].mxu0
    %v1929 = vpop.f32.mrb[0].mxu0
    %v1930 = vpop.f32.mrb[0].mxu0
    %1931 = vdwg.mxu0
    %v1932 = vxor.u32 %v1927, 2147483648
    %v1933 = vmul.f32 %v1932, 1.442695
    %v1934 = vpow.pop %v1933
    %v1935 = vadd.f32 %v1934, 1.0
    %v1936 = vrcp.pop %v1935
    %v1937 = vmul.f32 1.0, %v1936
    %v1938 = vtanh.pop %v1927
    %v1939 = vmul.f32 %v1937, %v1800
    %1941 = vrot.lane.b32.xlu0 %v1938, 64
    %v1942 = vpop.permute.xlu0 %1941
    %v1944 = vmul.f32 %v1937, %v1942
    %1946 = vrot.lane.b32.xlu0 %v1944, 32
    %v1947 = vpop.permute.xlu0 %1946
    %v1949 = vadd.f32 %v1939, %v1947
    %v1950 = vtanh.pop %v1949
    %1952 = vrot.lane.b32.xlu0 %v1950, 64
    %v1953 = vpop.permute.xlu0 %1952
    %v1955 = vmul.f32 %v1937, %v1953
    %v1956 = vpack.c.bf16 %v1878, %v1878
    %1958 = vrot.lane.b32.xlu0 %v1956, 32
    %v1959 = vpop.permute.xlu0 %1958
    %v1961 = vsel %vm190, %v1959, 0
    %1963 = vmatprep.subr.bf16.mxu0 0
    %1964 = vmatpush1.bf16.msra.mxu0 %v1492
    %1965 = vmatprep.subr.bf16.mxu0 0
    %1966 = vmatpush1.bf16.msra.mxu0 %v1493
    %1967 = vmatprep.subr.bf16.mxu0 0
    %1968 = vmatpush1.bf16.msra.mxu0 0
    %1969 = vmatprep.subr.bf16.mxu0 0
    %1970 = vmatpush1.bf16.msra.mxu0 0
    %1971 = vmatprep.subr.bf16.mxu0 0
    %1972 = vmatpush1.bf16.msra.mxu0 0
    %1973 = vmatprep.subr.bf16.mxu0 0
    %1974 = vmatpush1.bf16.msra.mxu0 0
    %1975 = vmatprep.subr.bf16.mxu0 0
    %1976 = vmatpush1.bf16.msra.mxu0 0
    %1977 = vmatprep.subr.bf16.mxu0 0
    %1978 = vmatpush1.bf16.msra.mxu0 0
    %1979 = vmatprep.subr.bf16.mxu0 0
    %1980 = vmatpush1.bf16.msra.mxu0 0
    %1981 = vmatprep.subr.bf16.mxu0 0
    %1982 = vmatpush1.bf16.msra.mxu0 0
    %1983 = vmatprep.subr.bf16.mxu0 0
    %1984 = vmatpush1.bf16.msra.mxu0 0
    %1985 = vmatprep.subr.bf16.mxu0 0
    %1986 = vmatpush1.bf16.msra.mxu0 0
    %1987 = vmatprep.subr.bf16.mxu0 0
    %1988 = vmatpush1.bf16.msra.mxu0 0
    %1989 = vmatprep.subr.bf16.mxu0 0
    %1990 = vmatpush1.bf16.msra.mxu0 0
    %1991 = vmatprep.subr.bf16.mxu0 0
    %1992 = vmatpush1.bf16.msra.mxu0 0
    %1993 = vmatprep.subr.bf16.mxu0 0
    %1994 = vmatpush1.bf16.msra.mxu0 0
    %1995 = vmatprep.mubr.bf16.mxu0 0
    %1996 = vmatmul.mubr.bf16.gmra.mrb[0].mxu0 %v1961
    %v1997 = vpop.f32.mrb[0].mxu0
    %v1998 = vadd.f32 0.0, %v1997
    %v1999 = vpop.f32.mrb[0].mxu0
    %v2000 = vpop.f32.mrb[0].mxu0
    %v2001 = vpop.f32.mrb[0].mxu0
    %2002 = vdwg.mxu0
    %v2003 = vadd.f32 %v1483, %v1998
    %v2004 = vxor.u32 %v2003, 2147483648
    %v2005 = vmul.f32 %v2004, 1.442695
    %v2006 = vpow.pop %v2005
    %v2007 = vadd.f32 %v2006, 1.0
    %v2008 = vrcp.pop %v2007
    %v2009 = vmul.f32 1.0, %v2008
    %v2010 = vtanh.pop %v2003
    %v2011 = vmul.f32 %v2009, %v1872
    %2013 = vrot.lane.b32.xlu0 %v2010, 64
    %v2014 = vpop.permute.xlu0 %2013
    %v2016 = vmul.f32 %v2009, %v2014
    %2018 = vrot.lane.b32.xlu0 %v2016, 32
    %v2019 = vpop.permute.xlu0 %2018
    %v2021 = vadd.f32 %v2011, %v2019
    %v2022 = vtanh.pop %v2021
    %2024 = vrot.lane.b32.xlu0 %v2022, 64
    %v2025 = vpop.permute.xlu0 %2024
    %v2027 = vmul.f32 %v2009, %v2025
    %2029 = vrot.lane.b32.xlu0 %v2027, 32
    %v2030 = vpop.permute.xlu0 %2029
    %2033 = vrot.lane.b32.xlu0 %v1955, 64
    %v2034 = vpop.permute.xlu0 %2033
    %v2036 = vsel %vm190, %v2030, %v2034
    %v2037 = vpack.c.bf16 %v2036, %v2036
    %v2039 = vsel %vm289, %v2037, 0
    %2041 = vmatprep.subr.bf16.mxu0 0
    %2042 = vmatpush1.bf16.msra.mxu0 %v1583
    %2043 = vmatprep.subr.bf16.mxu0 0
    %2044 = vmatpush1.bf16.msra.mxu0 %v1584
    %2045 = vmatprep.subr.bf16.mxu0 0
    %2046 = vmatpush1.bf16.msra.mxu0 %v1585
    %2047 = vmatprep.subr.bf16.mxu0 0
    %2048 = vmatpush1.bf16.msra.mxu0 %v1586
    %2049 = vmatprep.subr.bf16.mxu0 0
    %2050 = vmatpush1.bf16.msra.mxu0 0
    %2051 = vmatprep.subr.bf16.mxu0 0
    %2052 = vmatpush1.bf16.msra.mxu0 0
    %2053 = vmatprep.subr.bf16.mxu0 0
    %2054 = vmatpush1.bf16.msra.mxu0 0
    %2055 = vmatprep.subr.bf16.mxu0 0
    %2056 = vmatpush1.bf16.msra.mxu0 0
    %2057 = vmatprep.subr.bf16.mxu0 0
    %2058 = vmatpush1.bf16.msra.mxu0 0
    %2059 = vmatprep.subr.bf16.mxu0 0
    %2060 = vmatpush1.bf16.msra.mxu0 0
    %2061 = vmatprep.subr.bf16.mxu0 0
    %2062 = vmatpush1.bf16.msra.mxu0 0
    %2063 = vmatprep.subr.bf16.mxu0 0
    %2064 = vmatpush1.bf16.msra.mxu0 0
    %2065 = vmatprep.subr.bf16.mxu0 0
    %2066 = vmatpush1.bf16.msra.mxu0 0
    %2067 = vmatprep.subr.bf16.mxu0 0
    %2068 = vmatpush1.bf16.msra.mxu0 0
    %2069 = vmatprep.subr.bf16.mxu0 0
    %2070 = vmatpush1.bf16.msra.mxu0 0
    %2071 = vmatprep.subr.bf16.mxu0 0
    %2072 = vmatpush1.bf16.msra.mxu0 0
    %2073 = vmatprep.mubr.bf16.mxu0 0
    %2074 = vmatmul.mubr.bf16.gmra.mrb[0].mxu0 %v2039
    %v2075 = vpop.f32.mrb[0].mxu0
    %v2076 = vadd.f32 %v73, %v2075
    %v2077 = vpop.f32.mrb[0].mxu0
    %v2078 = vpop.f32.mrb[0].mxu0
    %v2079 = vpop.f32.mrb[0].mxu0
    %2080 = vdwg.mxu0
    %v2081 = vxor.u32 %v2076, 2147483648
    %v2082 = vmul.f32 %v2081, 1.442695
    %v2083 = vpow.pop %v2082
    %v2084 = vadd.f32 %v2083, 1.0
    %v2085 = vrcp.pop %v2084
    %v2086 = vmul.f32 1.0, %v2085
    %v2087 = vtanh.pop %v2076
    %v2088 = vmul.f32 %v2086, %v1949
    %2090 = vrot.lane.b32.xlu0 %v2087, 64
    %v2091 = vpop.permute.xlu0 %2090
    %v2093 = vmul.f32 %v2086, %v2091
    %2095 = vrot.lane.b32.xlu0 %v2093, 32
    %v2096 = vpop.permute.xlu0 %2095
    %v2098 = vadd.f32 %v2088, %v2096
    %v2099 = vtanh.pop %v2098
    %2101 = vrot.lane.b32.xlu0 %v2099, 64
    %v2102 = vpop.permute.xlu0 %2101
    %v2104 = vmul.f32 %v2086, %v2102
    %v2105 = vpack.c.bf16 %v1806, %v1657
    %v2106 = vpack.c.bf16 %v2104, %v1955
    %2109 = vrot.lane.b32.xlu0 %v2105, 32
    %v2110 = vpop.permute.xlu0 %2109
    %2111 = vrot.lane.b32.xlu0 %v2106, 32
    %v2112 = vpop.permute.xlu0 %2111
    %v2117 = vunpack.c.l.b16 %v61
    %v2118 = vunpack.c.l.b16 %v62
    %v2119 = vunpack.c.l.b16 %v63
    %v2120 = vunpack.c.l.b16 %v64
    %v2121 = vpack.c.b16 %v2118, %v2117
    %v2122 = vpack.c.b16 %v2120, %v2119
    %v2126 = vsel %vm190, %v2110, 0
    %v2129 = vsel %vm190, %v2112, 0
    %2131 = vmatprep.subr.bf16.mxu0 0
    %2132 = vmatpush1.bf16.msra.mxu0 %v2121
    %2133 = vmatprep.subr.bf16.mxu0 0
    %2134 = vmatpush1.bf16.msra.mxu0 %v2122
    %2135 = vmatprep.subr.bf16.mxu0 0
    %2136 = vmatpush1.bf16.msra.mxu0 0
    %2137 = vmatprep.subr.bf16.mxu0 0
    %2138 = vmatpush1.bf16.msra.mxu0 0
    %2139 = vmatprep.subr.bf16.mxu0 0
    %2140 = vmatpush1.bf16.msra.mxu0 0
    %2141 = vmatprep.subr.bf16.mxu0 0
    %2142 = vmatpush1.bf16.msra.mxu0 0
    %2143 = vmatprep.subr.bf16.mxu0 0
    %2144 = vmatpush1.bf16.msra.mxu0 0
    %2145 = vmatprep.subr.bf16.mxu0 0
    %2146 = vmatpush1.bf16.msra.mxu0 0
    %2147 = vmatprep.subr.bf16.mxu0 0
    %2148 = vmatpush1.bf16.msra.mxu0 0
    %2149 = vmatprep.subr.bf16.mxu0 0
    %2150 = vmatpush1.bf16.msra.mxu0 0
    %2151 = vmatprep.subr.bf16.mxu0 0
    %2152 = vmatpush1.bf16.msra.mxu0 0
    %2153 = vmatprep.subr.bf16.mxu0 0
    %2154 = vmatpush1.bf16.msra.mxu0 0
    %2155 = vmatprep.subr.bf16.mxu0 0
    %2156 = vmatpush1.bf16.msra.mxu0 0
    %2157 = vmatprep.subr.bf16.mxu0 0
    %2158 = vmatpush1.bf16.msra.mxu0 0
    %2159 = vmatprep.subr.bf16.mxu0 0
    %2160 = vmatpush1.bf16.msra.mxu0 0
    %2161 = vmatprep.subr.bf16.mxu0 0
    %2162 = vmatpush1.bf16.msra.mxu0 0
    %2163 = vmatprep.mubr.bf16.mxu0 0
    %2164 = vmatmul.mubr.bf16.gmra.mrb[0].mxu0 %v2126
    %v2165 = vpop.f32.mrb[0].mxu0
    %v2166 = vadd.f32 %v77, %v2165
    %v2167 = vpop.f32.mrb[0].mxu0
    %v2168 = vpop.f32.mrb[0].mxu0
    %v2169 = vadd.f32 %v77, %v2168
    %v2170 = vpop.f32.mrb[0].mxu0
    %2171 = vmatprep.mubr.bf16.mxu0 0
    %2172 = vmatmul.mubr.bf16.gmra.mrb[0].mxu0 %v2129
    %v2173 = vpop.f32.mrb[0].mxu0
    %v2174 = vadd.f32 %v77, %v2173
    %v2175 = vpop.f32.mrb[0].mxu0
    %v2176 = vpop.f32.mrb[0].mxu0
    %v2177 = vadd.f32 %v77, %v2176
    %v2178 = vpop.f32.mrb[0].mxu0
    %2179 = vdwg.mxu0
    %2180 = vst [vmem:[%s4] sm:$0xff] %v2166
    %2181 = vst [vmem:[%s4 + $0x8] sm:$0xff] %v2169
    %2182 = vst [vmem:[%s4 + $0x10] sm:$0xff] %v2174
    %2183 = vst [vmem:[%s4 + $0x18] sm:$0xff] %v2177
    // Predicated region
    $region18: #{autoencoder_forward.1} parent=1 // pred_check
      _
    $region19: #{autoencoder_forward.1} parent=1 // pred_check_branch
      %2185 = sbr.rel (0) target = $region21
    $region20: #{autoencoder_forward.1} parent=1 // pred_region
      _
    $region21: #{autoencoder_forward.1} parent=1 // pred_fallthru
      _
    // Predicated region
    $region22: #{autoencoder_forward.1} parent=1 // pred_check
      _
    $region23: #{autoencoder_forward.1} parent=1 // pred_check_branch
      %2187 = sbr.rel (0) target = $region25
    $region24: #{autoencoder_forward.1} parent=1 // pred_region
      _
    $region25: #{autoencoder_forward.1} parent=1 // pred_fallthru
      _
    // Predicated region
    $region26: #{autoencoder_forward.1} parent=1 // pred_check
      _
    $region27: #{autoencoder_forward.1} parent=1 // pred_check_branch
      %2189 = sbr.rel (0) target = $region29
    $region28: #{autoencoder_forward.1} parent=1 // pred_region
      _
    $region29: #{autoencoder_forward.1} parent=1 // pred_fallthru
      _
    // Predicated region
    $region30: #{autoencoder_forward.1} parent=1 // pred_check
      _
    $region31: #{autoencoder_forward.1} parent=1 // pred_check_branch
      %2191 = sbr.rel (0) target = $region33
    $region32: #{autoencoder_forward.1} parent=1 // pred_region
      _
    $region33: #{autoencoder_forward.1} parent=1 // pred_fallthru
      _
    %2192 = vsyncpa [#allocation3], 1

</llo_original>
